<compile_context>
chip_gen: v5e
topology: v5e:2x2
jax: 0.10.0
libtpu: 0.0.40
codegen_flags: <defaults>
</compile_context>

<pallas_src>
import functools

import numpy as np
import jax
import jax.numpy as jnp
from jax.experimental import pallas as pl
from jax.experimental.pallas import tpu as pltpu

_EPS = 1e-5          # nn.InstanceNorm2d default eps
_NK, _KK = 8, 3      # KPN defaults: N=8 predicted kernels of size K=3

# Set by _probe_lane_roll() in main: use pltpu.roll (XLU) if it lowers and matches
# jnp.roll semantics, otherwise fall back to jnp.roll inside the kernels.
_ROLL_WITH_PLTPU = True


# ---------------------------------------------------------------------------
# Host-side precomputed constants
# ---------------------------------------------------------------------------
def _bilinear_matrix(n_out, n_in):
    """1-D bilinear resize matrix, align_corners=True (PyTorch nn.Upsample)."""
    A = np.zeros((n_out, n_in), dtype=np.float32)
    if n_out == 1 or n_in == 1:
        A[:, 0] = 1.0
        return A
    scale = (n_in - 1) / (n_out - 1)
    for i in range(n_out):
        src = i * scale
        i0 = min(int(np.floor(src)), n_in - 1)
        i1 = min(i0 + 1, n_in - 1)
        f = src - i0
        A[i, i0] += 1.0 - f
        A[i, i1] += f
    return A


@functools.lru_cache(maxsize=None)
def _upsample_pad_matrix_np(h1, w1, h2, w2):
    """(H1*W1, H2*W2) matrix: 2x bilinear upsample (align_corners=True) followed by
    F.pad (or crop, for negative diffs) to (h2, w2), as one lane-dense matmul."""
    ah = _bilinear_matrix(2 * h1, h1)
    aw = _bilinear_matrix(2 * w1, w1)
    dy, dx = h2 - 2 * h1, w2 - 2 * w1
    Ah = np.zeros((h2, h1), np.float32)
    for r in range(h2):
        s = r - dy // 2
        if 0 <= s < 2 * h1:
            Ah[r] = ah[s]
    Aw = np.zeros((w2, w1), np.float32)
    for r in range(w2):
        s = r - dx // 2
        if 0 <= s < 2 * w1:
            Aw[r] = aw[s]
    return np.ascontiguousarray(np.kron(Ah, Aw).T)      # (h1*w1, h2*w2)


def _use_roll(h, w):
    return (h * w) % 128 == 0


@functools.lru_cache(maxsize=None)
def _tap_operand_np(h, w):
    """Boundary operand for a 3x3 SAME conv on a lane-flattened (C, H*W) image.
    Lane-aligned HW -> (9, HW) 0/1 masks (shift done in-kernel with a lane roll).
    Small HW        -> (9, HW, HW) combined shift+mask matrices (one tiny matmul/tap)."""
    hw = h * w
    hh, ww = np.meshgrid(np.arange(h), np.arange(w), indexing='ij')
    valid = {}
    for kh in range(3):
        for kw in range(3):
            v = ((hh + kh - 1 >= 0) & (hh + kh - 1 < h) &
                 (ww + kw - 1 >= 0) & (ww + kw - 1 < w))
            valid[(kh, kw)] = v.reshape(-1)
    if _use_roll(h, w):
        m = np.zeros((9, hw), np.float32)
        for kh in range(3):
            for kw in range(3):
                m[kh * 3 + kw] = valid[(kh, kw)].astype(np.float32)
        return m
    s = np.zeros((9, hw, hw), np.float32)
    for kh in range(3):
        for kw in range(3):
            t = kh * 3 + kw
            off = (kh - 1) * w + (kw - 1)
            v = valid[(kh, kw)]
            for q in range(hw):
                if v[q]:
                    s[t, q + off, q] = 1.0
    return s


# ---------------------------------------------------------------------------
# In-kernel helpers (traced inside pallas kernels)
# ---------------------------------------------------------------------------
def _lane_roll(z, shift):
    if _ROLL_WITH_PLTPU:
        return pltpu.roll(z, shift=shift, axis=1)
    return jnp.roll(z, shift, axis=1)


def _conv3x3_acc(z, tap_ref, w_ref, h, w, use_roll):
    """3x3 SAME conv without bias: sum_t W_t(Cout,Cin) @ shift_t(z)(Cin,HW)."""
    hw = h * w
    cout, cin = w_ref.shape[1], w_ref.shape[2]
    acc = jnp.zeros((cout, hw), jnp.float32)
    for kh in range(3):
        for kw in range(3):
            t = kh * 3 + kw
            off = (kh - 1) * w + (kw - 1)
            if use_roll:
                if off == 0:
                    tap = z
                else:
                    tap = _lane_roll(z, (-off) % hw)
                    tap = tap * tap_ref[t][None, :].astype(jnp.float32)   # boundary mask
            else:
                # tiny shift+mask matmul for small spatial sizes
                tap = jnp.dot(z, tap_ref[t].astype(jnp.float32),
                              preferred_element_type=jnp.float32)
            w_t = w_ref[t].astype(jnp.float32)                            # (Cout, Cin)
            if cin == 1:   # degenerate contraction (first layer): broadcast multiply
                acc = acc + w_t * tap
            else:
                acc = acc + jnp.dot(w_t, tap, preferred_element_type=jnp.float32)
    return acc


def _instnorm_relu(y):
    mean = jnp.mean(y, axis=1, keepdims=True)
    var = jnp.mean((y - mean) ** 2, axis=1, keepdims=True)   # biased var, eps=1e-5
    return jnp.maximum((y - mean) * jax.lax.rsqrt(var + _EPS), 0.0)


# ---------------------------------------------------------------------------
# Kernels
# ---------------------------------------------------------------------------
def _make_double_conv_kernel(h, w):
    use_roll = _use_roll(h, w)

    def kernel(x_ref, tap_ref, w1_ref, b1_ref, w2_ref, b2_ref, o_ref):
        x = x_ref[0].astype(jnp.float32)                           # (Cin, HW)
        y1 = _instnorm_relu(_conv3x3_acc(x, tap_ref, w1_ref, h, w, use_roll)
                            + b1_ref[...].astype(jnp.float32))
        y2 = _instnorm_relu(_conv3x3_acc(y1, tap_ref, w2_ref, h, w, use_roll)
                            + b2_ref[...].astype(jnp.float32))
        o_ref[0] = y2.astype(o_ref.dtype)

    return kernel


def _make_up_kernel(h2, w2):
    use_roll = _use_roll(h2, w2)

    def kernel(x1_ref, x2_ref, kT_ref, tap_ref, w1a_ref, w1b_ref, b1_ref,
               w2_ref, b2_ref, o_ref):
        x1 = x1_ref[0].astype(jnp.float32)                         # (C1, HW1)
        x2 = x2_ref[0].astype(jnp.float32)                         # (C2, HW2)
        # bilinear 2x upsample + F.pad, fused into one lane-dense matmul
        x1u = jnp.dot(x1, kT_ref[...].astype(jnp.float32),
                      preferred_element_type=jnp.float32)          # (C1, HW2)
        # torch.cat([x2, x1u], dim=1) folded into conv1 via split weights
        acc1 = (_conv3x3_acc(x2, tap_ref, w1a_ref, h2, w2, use_roll)
                + _conv3x3_acc(x1u, tap_ref, w1b_ref, h2, w2, use_roll)
                + b1_ref[...].astype(jnp.float32))
        y1 = _instnorm_relu(acc1)
        y2 = _instnorm_relu(_conv3x3_acc(y1, tap_ref, w2_ref, h2, w2, use_roll)
                            + b2_ref[...].astype(jnp.float32))
        o_ref[0] = y2.astype(o_ref.dtype)

    return kernel


def _outconv_mean_kernel(x_ref, w_ref, b_ref, o_ref):
    x = x_ref[0].astype(jnp.float32)                               # (Cin, HW)
    y = jnp.dot(w_ref[...].astype(jnp.float32), x,
                preferred_element_type=jnp.float32) + b_ref[...].astype(jnp.float32)
    o_ref[0] = jnp.mean(y, axis=1, keepdims=True).astype(o_ref.dtype)   # (Cout, 1)


# ---------------------------------------------------------------------------
# pallas_call wrappers
# ---------------------------------------------------------------------------
def _const_spec(arr):
    nd = arr.ndim
    return pl.BlockSpec(tuple(arr.shape), lambda i, nd=nd: (0,) * nd)


_PARALLEL_BATCH = pltpu.CompilerParams(dimension_semantics=("parallel",))


def double_conv_block(x, p):
    n, cin, h, w = x.shape
    cout = p['w1t'].shape[1]
    hw = h * w
    tap = jnp.asarray(_tap_operand_np(h, w))
    y = pl.pallas_call(
        _make_double_conv_kernel(h, w),
        out_shape=jax.ShapeDtypeStruct((n, cout, hw), x.dtype),
        grid_spec=pltpu.PrefetchScalarGridSpec(
            num_scalar_prefetch=0,
            grid=(n,),
            in_specs=[pl.BlockSpec((1, cin, hw), lambda i: (i, 0, 0)),
                      _const_spec(tap),
                      _const_spec(p['w1t']),
                      _const_spec(p['b1c']),
                      _const_spec(p['w2t']),
                      _const_spec(p['b2c'])],
            out_specs=pl.BlockSpec((1, cout, hw), lambda i: (i, 0, 0))),
        compiler_params=_PARALLEL_BATCH,
    )(x.reshape(n, cin, hw), tap, p['w1t'], p['b1c'], p['w2t'], p['b2c'])
    return y.reshape(n, cout, h, w)


def up_block(x1, x2, p):
    n, c1, h1, w1 = x1.shape
    _, c2, h2, w2 = x2.shape
    cout = p['w1t'].shape[1]
    hw1, hw2 = h1 * w1, h2 * w2
    kT = jnp.asarray(_upsample_pad_matrix_np(h1, w1, h2, w2))      # (hw1, hw2)
    tap = jnp.asarray(_tap_operand_np(h2, w2))
    w1a = p['w1t'][:, :, :c2]      # conv1 input channels that come from x2 (skip)
    w1b = p['w1t'][:, :, c2:]      # conv1 input channels that come from upsampled x1
    y = pl.pallas_call(
        _make_up_kernel(h2, w2),
        out_shape=jax.ShapeDtypeStruct((n, cout, hw2), x1.dtype),
        grid_spec=pltpu.PrefetchScalarGridSpec(
            num_scalar_prefetch=0,
            grid=(n,),
            in_specs=[pl.BlockSpec((1, c1, hw1), lambda i: (i, 0, 0)),
                      pl.BlockSpec((1, c2, hw2), lambda i: (i, 0, 0)),
                      _const_spec(kT),
                      _const_spec(tap),
                      _const_spec(w1a),
                      _const_spec(w1b),
                      _const_spec(p['b1c']),
                      _const_spec(p['w2t']),
                      _const_spec(p['b2c'])],
            out_specs=pl.BlockSpec((1, cout, hw2), lambda i: (i, 0, 0))),
        compiler_params=_PARALLEL_BATCH,
    )(x1.reshape(n, c1, hw1), x2.reshape(n, c2, hw2), kT, tap,
      w1a, w1b, p['b1c'], p['w2t'], p['b2c'])
    return y.reshape(n, cout, h2, w2)


def outconv_mean(x, p):
    n, cin, h, w = x.shape
    cout = p['wo'].shape[0]
    hw = h * w
    y = pl.pallas_call(
        _outconv_mean_kernel,
        out_shape=jax.ShapeDtypeStruct((n, cout, 1), x.dtype),
        grid_spec=pltpu.PrefetchScalarGridSpec(
            num_scalar_prefetch=0,
            grid=(n,),
            in_specs=[pl.BlockSpec((1, cin, hw), lambda i: (i, 0, 0)),
                      _const_spec(p['wo']),
                      _const_spec(p['boc'])],
            out_specs=pl.BlockSpec((1, cout, 1), lambda i: (i, 0, 0))),
        compiler_params=_PARALLEL_BATCH,
    )(x.reshape(n, cin, hw), p['wo'], p['boc'])
    return y.reshape(n, cout)


def maxpool2(x):
    # TODO(synk): left as XLA glue (tiny reshape+max); not worth a dedicated kernel.
    n, c, h, w = x.shape
    return x.reshape(n, c, h // 2, 2, w // 2, 2).max(axis=(3, 5))


def kpn_forward(x, params):
    """Full KPN forward in NCHW: returns (B, N, 1, K, K)."""
    x1 = double_conv_block(x, params['inc'])
    x2 = double_conv_block(maxpool2(x1), params['down1'])
    x3 = double_conv_block(maxpool2(x2), params['down2'])
    x4 = double_conv_block(maxpool2(x3), params['down3'])
    x5 = double_conv_block(maxpool2(x4), params['down4'])
    x6 = up_block(x5, x4, params['up1'])
    x7 = up_block(x6, x3, params['up2'])
    x8 = up_block(x7, x2, params['up3'])
    x9 = up_block(x8, x1, params['up4'])
    k = outconv_mean(x9, params['outc'])                  # (B, N*K*K)
    return k.reshape(x.shape[0], _NK, 1, _KK, _KK)        # == reshape(B,N,K,K).unsqueeze(2)


# ---------------------------------------------------------------------------
# Parameters
# ---------------------------------------------------------------------------
def _hwio_to_taps(w):
    """(3,3,Cin,Cout) HWIO -> (9, Cout, Cin) per-tap matrices."""
    cin, cout = w.shape[2], w.shape[3]
    return jnp.transpose(w.reshape(9, cin, cout), (0, 2, 1))


def _make_dc_params(key, cin, cout):
    k = jax.random.split(key, 4)
    w1 = 0.1 * jax.random.normal(k[0], (3, 3, cin, cout), jnp.float32)
    b1 = 0.1 * jax.random.normal(k[1], (cout,), jnp.float32)
    w2 = 0.1 * jax.random.normal(k[2], (3, 3, cout, cout), jnp.float32)
    b2 = 0.1 * jax.random.normal(k[3], (cout,), jnp.float32)
    return dict(w1=w1, b1=b1, w2=w2, b2=b2,
                w1t=_hwio_to_taps(w1), b1c=b1.reshape(cout, 1),
                w2t=_hwio_to_taps(w2), b2c=b2.reshape(cout, 1))


def make_kpn_params(key):
    ks = jax.random.split(key, 11)
    p = {
        'inc':   _make_dc_params(ks[0], 1, 12),
        'down1': _make_dc_params(ks[1], 12, 24),
        'down2': _make_dc_params(ks[2], 24, 48),
        'down3': _make_dc_params(ks[3], 48, 96),
        'down4': _make_dc_params(ks[4], 96, 96),
        'up1':   _make_dc_params(ks[5], 192, 48),
        'up2':   _make_dc_params(ks[6], 96, 24),
        'up3':   _make_dc_params(ks[7], 48, 12),
        'up4':   _make_dc_params(ks[8], 24, 12),
    }
    nkk = _NK * _KK * _KK
    wo = 0.1 * jax.random.normal(ks[9], (nkk, 12), jnp.float32)
    bo = 0.1 * jax.random.normal(ks[10], (nkk,), jnp.float32)
    p['outc'] = dict(wo=wo, bo=bo, boc=bo.reshape(nkk, 1))
    return p


# ---------------------------------------------------------------------------
# Plain-JAX reference (mirrors the PyTorch module)
# ---------------------------------------------------------------------------
def _conv3x3_ref(x, w_hwio, b):
    y = jax.lax.conv_general_dilated(
        x, w_hwio, (1, 1), 'SAME',
        dimension_numbers=('NCHW', 'HWIO', 'NCHW'),
        precision=jax.lax.Precision.HIGHEST)
    return y + b[None, :, None, None]


def _instnorm_relu_ref(y):
    m = y.mean(axis=(2, 3), keepdims=True)
    v = ((y - m) ** 2).mean(axis=(2, 3), keepdims=True)
    return jnp.maximum((y - m) * jax.lax.rsqrt(v + _EPS), 0.0)


def _double_conv_ref(x, p):
    y = _instnorm_relu_ref(_conv3x3_ref(x, p['w1'], p['b1']))
    return _instnorm_relu_ref(_conv3x3_ref(y, p['w2'], p['b2']))


def _up_ref(x1, x2, p):
    n, c, h, w = x1.shape
    ah = jnp.asarray(_bilinear_matrix(2 * h, h))
    aw = jnp.asarray(_bilinear_matrix(2 * w, w))
    x1u = jnp.einsum('Hh,Ww,nchw->ncHW', ah, aw, x1,
                     precision=jax.lax.Precision.HIGHEST)
    dy = x2.shape[2] - x1u.shape[2]
    dx = x2.shape[3] - x1u.shape[3]
    if dy or dx:   # not hit for the shapes used here
        x1u = jnp.pad(x1u, ((0, 0), (0, 0),
                            (dy // 2, dy - dy // 2), (dx // 2, dx - dx // 2)))
    return _double_conv_ref(jnp.concatenate([x2, x1u], axis=1), p)


def kpn_reference(x, params):
    x1 = _double_conv_ref(x, params['inc'])
    x2 = _double_conv_ref(maxpool2(x1), params['down1'])
    x3 = _double_conv_ref(maxpool2(x2), params['down2'])
    x4 = _double_conv_ref(maxpool2(x3), params['down3'])
    x5 = _double_conv_ref(maxpool2(x4), params['down4'])
    x6 = _up_ref(x5, x4, params['up1'])
    x7 = _up_ref(x6, x3, params['up2'])
    x8 = _up_ref(x7, x2, params['up3'])
    x9 = _up_ref(x8, x1, params['up4'])
    x10 = jnp.einsum('oc,nchw->nohw', params['outc']['wo'], x9,
                     precision=jax.lax.Precision.HIGHEST) \
        + params['outc']['bo'][None, :, None, None]
    x11 = x10.mean(axis=-1).mean(axis=-1)
    return x11.reshape(x.shape[0], _NK, _KK, _KK)[:, :, None, :, :]


# ---------------------------------------------------------------------------
def _probe_lane_roll():
    """Pick the lane-roll implementation used inside the conv kernels."""
    global _ROLL_WITH_PLTPU

    def k(x_ref, o_ref):
        o_ref[...] = pltpu.roll(x_ref[...], shift=33, axis=1)

    x = jnp.arange(12 * 256, dtype=jnp.float32).reshape(12, 256)
    try:
        got = pl.pallas_call(
            k, out_shape=jax.ShapeDtypeStruct((12, 256), jnp.float32))(x)
        ok = bool(jnp.array_equal(got, jnp.roll(x, 33, axis=1)))
    except Exception:
        ok = False
    _ROLL_WITH_PLTPU = ok


if __name__ == "__main__":
    _probe_lane_roll()

    key = jax.random.PRNGKey(0)
    kx, kp = jax.random.split(key)
    # Small shapes: batch=2, 1 input channel, 32x32 spatial (divisible by 2^4 so the
    # four encoder/decoder stages line up; bottleneck spatial is 2x2).
    B, H, W = 2, 32, 32
    x = jax.random.normal(kx, (B, 1, H, W), jnp.float32)
    params = make_kpn_params(kp)

    # Quick isolated check of the fused conv/IN/ReLU kernel on the first block.
    x1_pal = jax.block_until_ready(double_conv_block(x, params['inc']))
    x1_ref = _double_conv_ref(x, params['inc'])
    assert bool(jnp.allclose(x1_pal, x1_ref, atol=2e-3, rtol=2e-3)), (
        float(jnp.max(jnp.abs(x1_pal - x1_ref))))

    out = jax.jit(kpn_forward)(x, params)
    out = jax.block_until_ready(out)

    ref = kpn_reference(x, params)
    assert out.shape == (B, _NK, 1, _KK, _KK), out.shape
    assert bool(jnp.allclose(out, ref, atol=2e-2, rtol=2e-2)), (
        float(jnp.max(jnp.abs(out - ref))))
    print("KERNEL_OK")
</pallas_src>

<mosaic_0001>
module attributes {stable_mosaic.version = 11 : i64} {
  func.func @k(%arg0: memref<12x256xf32, #tpu.memory_space<vmem>>, %arg1: memref<12x256xf32, #tpu.memory_space<vmem>>) attributes {dimension_semantics = [], scalar_prefetch = 0 : i64, scratch_operands = 0 : i64, tpu.core_type = #tpu.core_type<tc>} {
    %c0 = arith.constant 0 : index
    %c0_0 = arith.constant 0 : index
    %0 = vector.load %arg0[%c0, %c0_0] : memref<12x256xf32, #tpu.memory_space<vmem>>, vector<12x256xf32>
    %c33_i32 = arith.constant 33 : i32
    %1 = tpu.dynamic_rotate %0 by %c33_i32 dim 1 : vector<12x256xf32>, i32 -> vector<12x256xf32>
    %c0_1 = arith.constant 0 : index
    %c0_2 = arith.constant 0 : index
    %2 = vector.load %arg1[%c0_1, %c0_2] : memref<12x256xf32, #tpu.memory_space<vmem>>, vector<12x256xf32>
    tpu.vector_store %arg1[%c0_1, %c0_2], %1 {strides = array<i32>} : memref<12x256xf32, #tpu.memory_space<vmem>>, vector<12x256xf32>,
    return
  }
}

module attributes {stable_mosaic.version = 11 : i64} {
  func.func @kernel(%arg0: i32, %arg1: memref<1x1x1024xf32, #tpu.memory_space<vmem>>, %arg2: memref<9x1024xf32, #tpu.memory_space<vmem>>, %arg3: memref<9x12x1xf32, #tpu.memory_space<vmem>>, %arg4: memref<12x1xf32, #tpu.memory_space<vmem>>, %arg5: memref<9x12x12xf32, #tpu.memory_space<vmem>>, %arg6: memref<12x1xf32, #tpu.memory_space<vmem>>, %arg7: memref<1x12x1024xf32, #tpu.memory_space<vmem>>) attributes {dimension_semantics = [#tpu.dimension_semantics<parallel>], iteration_bounds = array<i64: 2>, scalar_prefetch = 0 : i64, scratch_operands = 0 : i64, tpu.core_type = #tpu.core_type<tc>, window_params = [{transform_indices = @transform_0, window_bounds = array<i64: 1, 1, 1024>}, {pipeline_mode = #tpu.pipeline_mode<synchronous>, transform_indices = @transform_1, window_bounds = array<i64: 9, 1024>}, {pipeline_mode = #tpu.pipeline_mode<synchronous>, transform_indices = @transform_2, window_bounds = array<i64: 9, 12, 1>}, {pipeline_mode = #tpu.pipeline_mode<synchronous>, transform_indices = @transform_3, window_bounds = array<i64: 12, 1>}, {pipeline_mode = #tpu.pipeline_mode<synchronous>, transform_indices = @transform_4, window_bounds = array<i64: 9, 12, 12>}, {pipeline_mode = #tpu.pipeline_mode<synchronous>, transform_indices = @transform_5, window_bounds = array<i64: 12, 1>}, {transform_indices = @transform_6, window_bounds = array<i64: 1, 12, 1024>}]} {
    %c0 = arith.constant 0 : index
    %c0_0 = arith.constant 0 : index
    %c0_1 = arith.constant 0 : index
    %0 = vector.load %arg1[%c0, %c0_0, %c0_1] : memref<1x1x1024xf32, #tpu.memory_space<vmem>>, vector<1x1x1024xf32>
    %1 = vector.shape_cast %0 : vector<1x1x1024xf32> to vector<1x1024xf32>
    %cst = arith.constant 0.000000e+00 : f32
    %2 = vector.broadcast %cst : f32 to vector<12x1024xf32>
    %3 = vector.extract_strided_slice %1 {offsets = [0, 991], sizes = [1, 33], strides = [1, 1]} : vector<1x1024xf32> to vector<1x33xf32>
    %4 = vector.extract_strided_slice %1 {offsets = [0, 0], sizes = [1, 991], strides = [1, 1]} : vector<1x1024xf32> to vector<1x991xf32>
    %5 = tpu.concatenate %3, %4 in 1 : vector<1x33xf32>, vector<1x991xf32> -> vector<1x1024xf32>
    %c0_2 = arith.constant 0 : index
    %c0_3 = arith.constant 0 : index
    %6 = vector.load %arg2[%c0_2, %c0_3] : memref<9x1024xf32, #tpu.memory_space<vmem>>, vector<1x1024xf32>
    %7 = vector.shape_cast %6 : vector<1x1024xf32> to vector<1024xf32>
    %8 = vector.shape_cast %7 : vector<1024xf32> to vector<1x1024xf32>
    %9 = arith.mulf %5, %8 : vector<1x1024xf32>
    %c0_4 = arith.constant 0 : index
    %c0_5 = arith.constant 0 : index
    %c0_6 = arith.constant 0 : index
    %10 = vector.load %arg3[%c0_4, %c0_5, %c0_6] : memref<9x12x1xf32, #tpu.memory_space<vmem>>, vector<1x12x1xf32>
    %11 = vector.shape_cast %10 : vector<1x12x1xf32> to vector<12x1xf32>
    %12 = vector.broadcast %11 : vector<12x1xf32> to vector<12x1024xf32>
    %13 = vector.broadcast %9 : vector<1x1024xf32> to vector<12x1024xf32>
    %14 = arith.mulf %12, %13 : vector<12x1024xf32>
    %15 = arith.addf %2, %14 : vector<12x1024xf32>
    %16 = vector.extract_strided_slice %1 {offsets = [0, 992], sizes = [1, 32], strides = [1, 1]} : vector<1x1024xf32> to vector<1x32xf32>
    %17 = vector.extract_strided_slice %1 {offsets = [0, 0], sizes = [1, 992], strides = [1, 1]} : vector<1x1024xf32> to vector<1x992xf32>
    %18 = tpu.concatenate %16, %17 in 1 : vector<1x32xf32>, vector<1x992xf32> -> vector<1x1024xf32>
    %c1 = arith.constant 1 : index
    %c0_7 = arith.constant 0 : index
    %19 = vector.load %arg2[%c1, %c0_7] : memref<9x1024xf32, #tpu.memory_space<vmem>>, vector<1x1024xf32>
    %20 = vector.shape_cast %19 : vector<1x1024xf32> to vector<1024xf32>
    %21 = vector.shape_cast %20 : vector<1024xf32> to vector<1x1024xf32>
    %22 = arith.mulf %18, %21 : vector<1x1024xf32>
    %c1_8 = arith.constant 1 : index
    %c0_9 = arith.constant 0 : index
    %c0_10 = arith.constant 0 : index
    %23 = vector.load %arg3[%c1_8, %c0_9, %c0_10] : memref<9x12x1xf32, #tpu.memory_space<vmem>>, vector<1x12x1xf32>
    %24 = vector.shape_cast %23 : vector<1x12x1xf32> to vector<12x1xf32>
    %25 = vector.broadcast %24 : vector<12x1xf32> to vector<12x1024xf32>
    %26 = vector.broadcast %22 : vector<1x1024xf32> to vector<12x1024xf32>
    %27 = arith.mulf %25, %26 : vector<12x1024xf32>
    %28 = arith.addf %15, %27 : vector<12x1024xf32>
    %29 = vector.extract_strided_slice %1 {offsets = [0, 993], sizes = [1, 31], strides = [1, 1]} : vector<1x1024xf32> to vector<1x31xf32>
    %30 = vector.extract_strided_slice %1 {offsets = [0, 0], sizes = [1, 993], strides = [1, 1]} : vector<1x1024xf32> to vector<1x993xf32>
    %31 = tpu.concatenate %29, %30 in 1 : vector<1x31xf32>, vector<1x993xf32> -> vector<1x1024xf32>
    %c2 = arith.constant 2 : index
    %c0_11 = arith.constant 0 : index
    %32 = vector.load %arg2[%c2, %c0_11] : memref<9x1024xf32, #tpu.memory_space<vmem>>, vector<1x1024xf32>
    %33 = vector.shape_cast %32 : vector<1x1024xf32> to vector<1024xf32>
    %34 = vector.shape_cast %33 : vector<1024xf32> to vector<1x1024xf32>
    %35 = arith.mulf %31, %34 : vector<1x1024xf32>
    %c2_12 = arith.constant 2 : index
    %c0_13 = arith.constant 0 : index
    %c0_14 = arith.constant 0 : index
    %36 = vector.load %arg3[%c2_12, %c0_13, %c0_14] : memref<9x12x1xf32, #tpu.memory_space<vmem>>, vector<1x12x1xf32>
    %37 = vector.shape_cast %36 : vector<1x12x1xf32> to vector<12x1xf32>
    %38 = vector.broadcast %37 : vector<12x1xf32> to vector<12x1024xf32>
    %39 = vector.broadcast %35 : vector<1x1024xf32> to vector<12x1024xf32>
    %40 = arith.mulf %38, %39 : vector<12x1024xf32>
    %41 = arith.addf %28, %40 : vector<12x1024xf32>
    %42 = vector.extract_strided_slice %1 {offsets = [0, 1023], sizes = [1, 1], strides = [1, 1]} : vector<1x1024xf32> to vector<1x1xf32>
    %43 = vector.extract_strided_slice %1 {offsets = [0, 0], sizes = [1, 1023], strides = [1, 1]} : vector<1x1024xf32> to vector<1x1023xf32>
    %44 = tpu.concatenate %42, %43 in 1 : vector<1x1xf32>, vector<1x1023xf32> -> vector<1x1024xf32>
    %c3 = arith.constant 3 : index
    %c0_15 = arith.constant 0 : index
    %45 = vector.load %arg2[%c3, %c0_15] : memref<9x1024xf32, #tpu.memory_space<vmem>>, vector<1x1024xf32>
    %46 = vector.shape_cast %45 : vector<1x1024xf32> to vector<1024xf32>
    %47 = vector.shape_cast %46 : vector<1024xf32> to vector<1x1024xf32>
    %48 = arith.mulf %44, %47 : vector<1x1024xf32>
    %c3_16 = arith.constant 3 : index
    %c0_17 = arith.constant 0 : index
    %c0_18 = arith.constant 0 : index
    %49 = vector.load %arg3[%c3_16, %c0_17, %c0_18] : memref<9x12x1xf32, #tpu.memory_space<vmem>>, vector<1x12x1xf32>
    %50 = vector.shape_cast %49 : vector<1x12x1xf32> to vector<12x1xf32>
    %51 = vector.broadcast %50 : vector<12x1xf32> to vector<12x1024xf32>
    %52 = vector.broadcast %48 : vector<1x1024xf32> to vector<12x1024xf32>
    %53 = arith.mulf %51, %52 : vector<12x1024xf32>
    %54 = arith.addf %41, %53 : vector<12x1024xf32>
    %c4 = arith.constant 4 : index
    %c0_19 = arith.constant 0 : index
    %c0_20 = arith.constant 0 : index
    %55 = vector.load %arg3[%c4, %c0_19, %c0_20] : memref<9x12x1xf32, #tpu.memory_space<vmem>>, vector<1x12x1xf32>
    %56 = vector.shape_cast %55 : vector<1x12x1xf32> to vector<12x1xf32>
    %57 = vector.broadcast %56 : vector<12x1xf32> to vector<12x1024xf32>
    %58 = vector.broadcast %1 : vector<1x1024xf32> to vector<12x1024xf32>
    %59 = arith.mulf %57, %58 : vector<12x1024xf32>
    %60 = arith.addf %54, %59 : vector<12x1024xf32>
    %61 = vector.extract_strided_slice %1 {offsets = [0, 1], sizes = [1, 1023], strides = [1, 1]} : vector<1x1024xf32> to vector<1x1023xf32>
    %62 = vector.extract_strided_slice %1 {offsets = [0, 0], sizes = [1, 1], strides = [1, 1]} : vector<1x1024xf32> to vector<1x1xf32>
    %63 = tpu.concatenate %61, %62 in 1 : vector<1x1023xf32>, vector<1x1xf32> -> vector<1x1024xf32>
    %c5 = arith.constant 5 : index
    %c0_21 = arith.constant 0 : index
    %64 = vector.load %arg2[%c5, %c0_21] : memref<9x1024xf32, #tpu.memory_space<vmem>>, vector<1x1024xf32>
    %65 = vector.shape_cast %64 : vector<1x1024xf32> to vector<1024xf32>
    %66 = vector.shape_cast %65 : vector<1024xf32> to vector<1x1024xf32>
    %67 = arith.mulf %63, %66 : vector<1x1024xf32>
    %c5_22 = arith.constant 5 : index
    %c0_23 = arith.constant 0 : index
    %c0_24 = arith.constant 0 : index
    %68 = vector.load %arg3[%c5_22, %c0_23, %c0_24] : memref<9x12x1xf32, #tpu.memory_space<vmem>>, vector<1x12x1xf32>
    %69 = vector.shape_cast %68 : vector<1x12x1xf32> to vector<12x1xf32>
    %70 = vector.broadcast %69 : vector<12x1xf32> to vector<12x1024xf32>
    %71 = vector.broadcast %67 : vector<1x1024xf32> to vector<12x1024xf32>
    %72 = arith.mulf %70, %71 : vector<12x1024xf32>
    %73 = arith.addf %60, %72 : vector<12x1024xf32>
    %74 = vector.extract_strided_slice %1 {offsets = [0, 31], sizes = [1, 993], strides = [1, 1]} : vector<1x1024xf32> to vector<1x993xf32>
    %75 = vector.extract_strided_slice %1 {offsets = [0, 0], sizes = [1, 31], strides = [1, 1]} : vector<1x1024xf32> to vector<1x31xf32>
    %76 = tpu.concatenate %74, %75 in 1 : vector<1x993xf32>, vector<1x31xf32> -> vector<1x1024xf32>
    %c6 = arith.constant 6 : index
    %c0_25 = arith.constant 0 : index
    %77 = vector.load %arg2[%c6, %c0_25] : memref<9x1024xf32, #tpu.memory_space<vmem>>, vector<1x1024xf32>
    %78 = vector.shape_cast %77 : vector<1x1024xf32> to vector<1024xf32>
    %79 = vector.shape_cast %78 : vector<1024xf32> to vector<1x1024xf32>
    %80 = arith.mulf %76, %79 : vector<1x1024xf32>
    %c6_26 = arith.constant 6 : index
    %c0_27 = arith.constant 0 : index
    %c0_28 = arith.constant 0 : index
    %81 = vector.load %arg3[%c6_26, %c0_27, %c0_28] : memref<9x12x1xf32, #tpu.memory_space<vmem>>, vector<1x12x1xf32>
    %82 = vector.shape_cast %81 : vector<1x12x1xf32> to vector<12x1xf32>
    %83 = vector.broadcast %82 : vector<12x1xf32> to vector<12x1024xf32>
    %84 = vector.broadcast %80 : vector<1x1024xf32> to vector<12x1024xf32>
    %85 = arith.mulf %83, %84 : vector<12x1024xf32>
    %86 = arith.addf %73, %85 : vector<12x1024xf32>
    %87 = vector.extract_strided_slice %1 {offsets = [0, 32], sizes = [1, 992], strides = [1, 1]} : vector<1x1024xf32> to vector<1x992xf32>
    %88 = vector.extract_strided_slice %1 {offsets = [0, 0], sizes = [1, 32], strides = [1, 1]} : vector<1x1024xf32> to vector<1x32xf32>
    %89 = tpu.concatenate %87, %88 in 1 : vector<1x992xf32>, vector<1x32xf32> -> vector<1x1024xf32>
    %c7 = arith.constant 7 : index
    %c0_29 = arith.constant 0 : index
    %90 = vector.load %arg2[%c7, %c0_29] : memref<9x1024xf32, #tpu.memory_space<vmem>>, vector<1x1024xf32>
    %91 = vector.shape_cast %90 : vector<1x1024xf32> to vector<1024xf32>
    %92 = vector.shape_cast %91 : vector<1024xf32> to vector<1x1024xf32>
    %93 = arith.mulf %89, %92 : vector<1x1024xf32>
    %c7_30 = arith.constant 7 : index
    %c0_31 = arith.constant 0 : index
    %c0_32 = arith.constant 0 : index
    %94 = vector.load %arg3[%c7_30, %c0_31, %c0_32] : memref<9x12x1xf32, #tpu.memory_space<vmem>>, vector<1x12x1xf32>
    %95 = vector.shape_cast %94 : vector<1x12x1xf32> to vector<12x1xf32>
    %96 = vector.broadcast %95 : vector<12x1xf32> to vector<12x1024xf32>
    %97 = vector.broadcast %93 : vector<1x1024xf32> to vector<12x1024xf32>
    %98 = arith.mulf %96, %97 : vector<12x1024xf32>
    %99 = arith.addf %86, %98 : vector<12x1024xf32>
    %100 = vector.extract_strided_slice %1 {offsets = [0, 33], sizes = [1, 991], strides = [1, 1]} : vector<1x1024xf32> to vector<1x991xf32>
    %101 = vector.extract_strided_slice %1 {offsets = [0, 0], sizes = [1, 33], strides = [1, 1]} : vector<1x1024xf32> to vector<1x33xf32>
    %102 = tpu.concatenate %100, %101 in 1 : vector<1x991xf32>, vector<1x33xf32> -> vector<1x1024xf32>
    %c8 = arith.constant 8 : index
    %c0_33 = arith.constant 0 : index
    %103 = vector.load %arg2[%c8, %c0_33] : memref<9x1024xf32, #tpu.memory_space<vmem>>, vector<1x1024xf32>
    %104 = vector.shape_cast %103 : vector<1x1024xf32> to vector<1024xf32>
    %105 = vector.shape_cast %104 : vector<1024xf32> to vector<1x1024xf32>
    %106 = arith.mulf %102, %105 : vector<1x1024xf32>
    %c8_34 = arith.constant 8 : index
    %c0_35 = arith.constant 0 : index
    %c0_36 = arith.constant 0 : index
    %107 = vector.load %arg3[%c8_34, %c0_35, %c0_36] : memref<9x12x1xf32, #tpu.memory_space<vmem>>, vector<1x12x1xf32>
    %108 = vector.shape_cast %107 : vector<1x12x1xf32> to vector<12x1xf32>
    %109 = vector.broadcast %108 : vector<12x1xf32> to vector<12x1024xf32>
    %110 = vector.broadcast %106 : vector<1x1024xf32> to vector<12x1024xf32>
    %111 = arith.mulf %109, %110 : vector<12x1024xf32>
    %112 = arith.addf %99, %111 : vector<12x1024xf32>
    %c0_37 = arith.constant 0 : index
    %c0_38 = arith.constant 0 : index
    %113 = vector.load %arg4[%c0_37, %c0_38] : memref<12x1xf32, #tpu.memory_space<vmem>>, vector<12x1xf32>
    %114 = vector.broadcast %113 : vector<12x1xf32> to vector<12x1024xf32>
    %115 = arith.addf %112, %114 : vector<12x1024xf32>
    %cst_39 = arith.constant dense<0.000000e+00> : vector<12xf32>
    %116 = vector.multi_reduction <add>, %115, %cst_39 [1] : vector<12x1024xf32> to vector<12xf32>
    %117 = vector.shape_cast %116 : vector<12xf32> to vector<12x1xf32>
    %cst_40 = arith.constant 1.024000e+03 : f32
    %118 = vector.broadcast %cst_40 : f32 to vector<12x1xf32>
    %119 = arith.divf %117, %118 : vector<12x1xf32>
    %120 = vector.broadcast %119 : vector<12x1xf32> to vector<12x1024xf32>
    %121 = arith.subf %115, %120 : vector<12x1024xf32>
    %122 = arith.mulf %121, %121 : vector<12x1024xf32>
    %cst_41 = arith.constant dense<0.000000e+00> : vector<12xf32>
    %123 = vector.multi_reduction <add>, %122, %cst_41 [1] : vector<12x1024xf32> to vector<12xf32>
    %124 = vector.shape_cast %123 : vector<12xf32> to vector<12x1xf32>
    %cst_42 = arith.constant 1.024000e+03 : f32
    %125 = vector.broadcast %cst_42 : f32 to vector<12x1xf32>
    %126 = arith.divf %124, %125 : vector<12x1xf32>
    %127 = vector.broadcast %119 : vector<12x1xf32> to vector<12x1024xf32>
    %128 = arith.subf %115, %127 : vector<12x1024xf32>
    %cst_43 = arith.constant 9.99999974E-6 : f32
    %129 = vector.broadcast %cst_43 : f32 to vector<12x1xf32>
    %130 = arith.addf %126, %129 : vector<12x1xf32>
    %131 = math.rsqrt %130 : vector<12x1xf32>
    %132 = vector.broadcast %131 : vector<12x1xf32> to vector<12x1024xf32>
    %133 = arith.mulf %128, %132 : vector<12x1024xf32>
    %cst_44 = arith.constant 0.000000e+00 : f32
    %134 = vector.broadcast %cst_44 : f32 to vector<12x1024xf32>
    %135 = arith.maximumf %133, %134 : vector<12x1024xf32>
    %cst_45 = arith.constant 0.000000e+00 : f32
    %136 = vector.broadcast %cst_45 : f32 to vector<12x1024xf32>
    %137 = vector.extract_strided_slice %135 {offsets = [0, 991], sizes = [12, 33], strides = [1, 1]} : vector<12x1024xf32> to vector<12x33xf32>
    %138 = vector.extract_strided_slice %135 {offsets = [0, 0], sizes = [12, 991], strides = [1, 1]} : vector<12x1024xf32> to vector<12x991xf32>
    %139 = tpu.concatenate %137, %138 in 1 : vector<12x33xf32>, vector<12x991xf32> -> vector<12x1024xf32>
    %c0_46 = arith.constant 0 : index
    %c0_47 = arith.constant 0 : index
    %140 = vector.load %arg2[%c0_46, %c0_47] : memref<9x1024xf32, #tpu.memory_space<vmem>>, vector<1x1024xf32>
    %141 = vector.shape_cast %140 : vector<1x1024xf32> to vector<1024xf32>
    %142 = vector.shape_cast %141 : vector<1024xf32> to vector<1x1024xf32>
    %143 = vector.broadcast %142 : vector<1x1024xf32> to vector<12x1024xf32>
    %144 = arith.mulf %139, %143 : vector<12x1024xf32>
    %c0_48 = arith.constant 0 : index
    %c0_49 = arith.constant 0 : index
    %c0_50 = arith.constant 0 : index
    %145 = vector.load %arg5[%c0_48, %c0_49, %c0_50] : memref<9x12x12xf32, #tpu.memory_space<vmem>>, vector<1x12x12xf32>
    %146 = vector.shape_cast %145 : vector<1x12x12xf32> to vector<12x12xf32>
    %cst_51 = arith.constant dense<0.000000e+00> : vector<12x1024xf32>
    %147 = tpu.matmul %146, %144, %cst_51 {dimension_numbers = #tpu.dot_dimension_numbers<[1], [0], [0], [1], [0, 0, 1, 1], [], []>} : vector<12x12xf32>, vector<12x1024xf32>, vector<12x1024xf32> -> vector<12x1024xf32>
    %148 = arith.addf %136, %147 : vector<12x1024xf32>
    %149 = vector.extract_strided_slice %135 {offsets = [0, 992], sizes = [12, 32], strides = [1, 1]} : vector<12x1024xf32> to vector<12x32xf32>
    %150 = vector.extract_strided_slice %135 {offsets = [0, 0], sizes = [12, 992], strides = [1, 1]} : vector<12x1024xf32> to vector<12x992xf32>
    %151 = tpu.concatenate %149, %150 in 1 : vector<12x32xf32>, vector<12x992xf32> -> vector<12x1024xf32>
    %c1_52 = arith.constant 1 : index
    %c0_53 = arith.constant 0 : index
    %152 = vector.load %arg2[%c1_52, %c0_53] : memref<9x1024xf32, #tpu.memory_space<vmem>>, vector<1x1024xf32>
    %153 = vector.shape_cast %152 : vector<1x1024xf32> to vector<1024xf32>
    %154 = vector.shape_cast %153 : vector<1024xf32> to vector<1x1024xf32>
    %155 = vector.broadcast %154 : vector<1x1024xf32> to vector<12x1024xf32>
    %156 = arith.mulf %151, %155 : vector<12x1024xf32>
    %c1_54 = arith.constant 1 : index
    %c0_55 = arith.constant 0 : index
    %c0_56 = arith.constant 0 : index
    %157 = vector.load %arg5[%c1_54, %c0_55, %c0_56] : memref<9x12x12xf32, #tpu.memory_space<vmem>>, vector<1x12x12xf32>
    %158 = vector.shape_cast %157 : vector<1x12x12xf32> to vector<12x12xf32>
    %cst_57 = arith.constant dense<0.000000e+00> : vector<12x1024xf32>
    %159 = tpu.matmul %158, %156, %cst_57 {dimension_numbers = #tpu.dot_dimension_numbers<[1], [0], [0], [1], [0, 0, 1, 1], [], []>} : vector<12x12xf32>, vector<12x1024xf32>, vector<12x1024xf32> -> vector<12x1024xf32>
    %160 = arith.addf %148, %159 : vector<12x1024xf32>
    %161 = vector.extract_strided_slice %135 {offsets = [0, 993], sizes = [12, 31], strides = [1, 1]} : vector<12x1024xf32> to vector<12x31xf32>
    %162 = vector.extract_strided_slice %135 {offsets = [0, 0], sizes = [12, 993], strides = [1, 1]} : vector<12x1024xf32> to vector<12x993xf32>
    %163 = tpu.concatenate %161, %162 in 1 : vector<12x31xf32>, vector<12x993xf32> -> vector<12x1024xf32>
    %c2_58 = arith.constant 2 : index
    %c0_59 = arith.constant 0 : index
    %164 = vector.load %arg2[%c2_58, %c0_59] : memref<9x1024xf32, #tpu.memory_space<vmem>>, vector<1x1024xf32>
    %165 = vector.shape_cast %164 : vector<1x1024xf32> to vector<1024xf32>
    %166 = vector.shape_cast %165 : vector<1024xf32> to vector<1x1024xf32>
    %167 = vector.broadcast %166 : vector<1x1024xf32> to vector<12x1024xf32>
    %168 = arith.mulf %163, %167 : vector<12x1024xf32>
    %c2_60 = arith.constant 2 : index
    %c0_61 = arith.constant 0 : index
    %c0_62 = arith.constant 0 : index
    %169 = vector.load %arg5[%c2_60, %c0_61, %c0_62] : memref<9x12x12xf32, #tpu.memory_space<vmem>>, vector<1x12x12xf32>
    %170 = vector.shape_cast %169 : vector<1x12x12xf32> to vector<12x12xf32>
    %cst_63 = arith.constant dense<0.000000e+00> : vector<12x1024xf32>
    %171 = tpu.matmul %170, %168, %cst_63 {dimension_numbers = #tpu.dot_dimension_numbers<[1], [0], [0], [1], [0, 0, 1, 1], [], []>} : vector<12x12xf32>, vector<12x1024xf32>, vector<12x1024xf32> -> vector<12x1024xf32>
    %172 = arith.addf %160, %171 : vector<12x1024xf32>
    %173 = vector.extract_strided_slice %135 {offsets = [0, 1023], sizes = [12, 1], strides = [1, 1]} : vector<12x1024xf32> to vector<12x1xf32>
    %174 = vector.extract_strided_slice %135 {offsets = [0, 0], sizes = [12, 1023], strides = [1, 1]} : vector<12x1024xf32> to vector<12x1023xf32>
    %175 = tpu.concatenate %173, %174 in 1 : vector<12x1xf32>, vector<12x1023xf32> -> vector<12x1024xf32>
    %c3_64 = arith.constant 3 : index
    %c0_65 = arith.constant 0 : index
    %176 = vector.load %arg2[%c3_64, %c0_65] : memref<9x1024xf32, #tpu.memory_space<vmem>>, vector<1x1024xf32>
    %177 = vector.shape_cast %176 : vector<1x1024xf32> to vector<1024xf32>
    %178 = vector.shape_cast %177 : vector<1024xf32> to vector<1x1024xf32>
    %179 = vector.broadcast %178 : vector<1x1024xf32> to vector<12x1024xf32>
    %180 = arith.mulf %175, %179 : vector<12x1024xf32>
    %c3_66 = arith.constant 3 : index
    %c0_67 = arith.constant 0 : index
    %c0_68 = arith.constant 0 : index
    %181 = vector.load %arg5[%c3_66, %c0_67, %c0_68] : memref<9x12x12xf32, #tpu.memory_space<vmem>>, vector<1x12x12xf32>
    %182 = vector.shape_cast %181 : vector<1x12x12xf32> to vector<12x12xf32>
    %cst_69 = arith.constant dense<0.000000e+00> : vector<12x1024xf32>
    %183 = tpu.matmul %182, %180, %cst_69 {dimension_numbers = #tpu.dot_dimension_numbers<[1], [0], [0], [1], [0, 0, 1, 1], [], []>} : vector<12x12xf32>, vector<12x1024xf32>, vector<12x1024xf32> -> vector<12x1024xf32>
    %184 = arith.addf %172, %183 : vector<12x1024xf32>
    %c4_70 = arith.constant 4 : index
    %c0_71 = arith.constant 0 : index
    %c0_72 = arith.constant 0 : index
    %185 = vector.load %arg5[%c4_70, %c0_71, %c0_72] : memref<9x12x12xf32, #tpu.memory_space<vmem>>, vector<1x12x12xf32>
    %186 = vector.shape_cast %185 : vector<1x12x12xf32> to vector<12x12xf32>
    %cst_73 = arith.constant dense<0.000000e+00> : vector<12x1024xf32>
    %187 = tpu.matmul %186, %135, %cst_73 {dimension_numbers = #tpu.dot_dimension_numbers<[1], [0], [0], [1], [0, 0, 1, 1], [], []>} : vector<12x12xf32>, vector<12x1024xf32>, vector<12x1024xf32> -> vector<12x1024xf32>
    %188 = arith.addf %184, %187 : vector<12x1024xf32>
    %189 = vector.extract_strided_slice %135 {offsets = [0, 1], sizes = [12, 1023], strides = [1, 1]} : vector<12x1024xf32> to vector<12x1023xf32>
    %190 = vector.extract_strided_slice %135 {offsets = [0, 0], sizes = [12, 1], strides = [1, 1]} : vector<12x1024xf32> to vector<12x1xf32>
    %191 = tpu.concatenate %189, %190 in 1 : vector<12x1023xf32>, vector<12x1xf32> -> vector<12x1024xf32>
    %c5_74 = arith.constant 5 : index
    %c0_75 = arith.constant 0 : index
    %192 = vector.load %arg2[%c5_74, %c0_75] : memref<9x1024xf32, #tpu.memory_space<vmem>>, vector<1x1024xf32>
    %193 = vector.shape_cast %192 : vector<1x1024xf32> to vector<1024xf32>
    %194 = vector.shape_cast %193 : vector<1024xf32> to vector<1x1024xf32>
    %195 = vector.broadcast %194 : vector<1x1024xf32> to vector<12x1024xf32>
    %196 = arith.mulf %191, %195 : vector<12x1024xf32>
    %c5_76 = arith.constant 5 : index
    %c0_77 = arith.constant 0 : index
    %c0_78 = arith.constant 0 : index
    %197 = vector.load %arg5[%c5_76, %c0_77, %c0_78] : memref<9x12x12xf32, #tpu.memory_space<vmem>>, vector<1x12x12xf32>
    %198 = vector.shape_cast %197 : vector<1x12x12xf32> to vector<12x12xf32>
    %cst_79 = arith.constant dense<0.000000e+00> : vector<12x1024xf32>
    %199 = tpu.matmul %198, %196, %cst_79 {dimension_numbers = #tpu.dot_dimension_numbers<[1], [0], [0], [1], [0, 0, 1, 1], [], []>} : vector<12x12xf32>, vector<12x1024xf32>, vector<12x1024xf32> -> vector<12x1024xf32>
    %200 = arith.addf %188, %199 : vector<12x1024xf32>
    %201 = vector.extract_strided_slice %135 {offsets = [0, 31], sizes = [12, 993], strides = [1, 1]} : vector<12x1024xf32> to vector<12x993xf32>
    %202 = vector.extract_strided_slice %135 {offsets = [0, 0], sizes = [12, 31], strides = [1, 1]} : vector<12x1024xf32> to vector<12x31xf32>
    %203 = tpu.concatenate %201, %202 in 1 : vector<12x993xf32>, vector<12x31xf32> -> vector<12x1024xf32>
    %c6_80 = arith.constant 6 : index
    %c0_81 = arith.constant 0 : index
    %204 = vector.load %arg2[%c6_80, %c0_81] : memref<9x1024xf32, #tpu.memory_space<vmem>>, vector<1x1024xf32>
    %205 = vector.shape_cast %204 : vector<1x1024xf32> to vector<1024xf32>
    %206 = vector.shape_cast %205 : vector<1024xf32> to vector<1x1024xf32>
    %207 = vector.broadcast %206 : vector<1x1024xf32> to vector<12x1024xf32>
    %208 = arith.mulf %203, %207 : vector<12x1024xf32>
    %c6_82 = arith.constant 6 : index
    %c0_83 = arith.constant 0 : index
    %c0_84 = arith.constant 0 : index
    %209 = vector.load %arg5[%c6_82, %c0_83, %c0_84] : memref<9x12x12xf32, #tpu.memory_space<vmem>>, vector<1x12x12xf32>
    %210 = vector.shape_cast %209 : vector<1x12x12xf32> to vector<12x12xf32>
    %cst_85 = arith.constant dense<0.000000e+00> : vector<12x1024xf32>
    %211 = tpu.matmul %210, %208, %cst_85 {dimension_numbers = #tpu.dot_dimension_numbers<[1], [0], [0], [1], [0, 0, 1, 1], [], []>} : vector<12x12xf32>, vector<12x1024xf32>, vector<12x1024xf32> -> vector<12x1024xf32>
    %212 = arith.addf %200, %211 : vector<12x1024xf32>
    %213 = vector.extract_strided_slice %135 {offsets = [0, 32], sizes = [12, 992], strides = [1, 1]} : vector<12x1024xf32> to vector<12x992xf32>
    %214 = vector.extract_strided_slice %135 {offsets = [0, 0], sizes = [12, 32], strides = [1, 1]} : vector<12x1024xf32> to vector<12x32xf32>
    %215 = tpu.concatenate %213, %214 in 1 : vector<12x992xf32>, vector<12x32xf32> -> vector<12x1024xf32>
    %c7_86 = arith.constant 7 : index
    %c0_87 = arith.constant 0 : index
    %216 = vector.load %arg2[%c7_86, %c0_87] : memref<9x1024xf32, #tpu.memory_space<vmem>>, vector<1x1024xf32>
    %217 = vector.shape_cast %216 : vector<1x1024xf32> to vector<1024xf32>
    %218 = vector.shape_cast %217 : vector<1024xf32> to vector<1x1024xf32>
    %219 = vector.broadcast %218 : vector<1x1024xf32> to vector<12x1024xf32>
    %220 = arith.mulf %215, %219 : vector<12x1024xf32>
    %c7_88 = arith.constant 7 : index
    %c0_89 = arith.constant 0 : index
    %c0_90 = arith.constant 0 : index
    %221 = vector.load %arg5[%c7_88, %c0_89, %c0_90] : memref<9x12x12xf32, #tpu.memory_space<vmem>>, vector<1x12x12xf32>
    %222 = vector.shape_cast %221 : vector<1x12x12xf32> to vector<12x12xf32>
    %cst_91 = arith.constant dense<0.000000e+00> : vector<12x1024xf32>
    %223 = tpu.matmul %222, %220, %cst_91 {dimension_numbers = #tpu.dot_dimension_numbers<[1], [0], [0], [1], [0, 0, 1, 1], [], []>} : vector<12x12xf32>, vector<12x1024xf32>, vector<12x1024xf32> -> vector<12x1024xf32>
    %224 = arith.addf %212, %223 : vector<12x1024xf32>
    %225 = vector.extract_strided_slice %135 {offsets = [0, 33], sizes = [12, 991], strides = [1, 1]} : vector<12x1024xf32> to vector<12x991xf32>
    %226 = vector.extract_strided_slice %135 {offsets = [0, 0], sizes = [12, 33], strides = [1, 1]} : vector<12x1024xf32> to vector<12x33xf32>
    %227 = tpu.concatenate %225, %226 in 1 : vector<12x991xf32>, vector<12x33xf32> -> vector<12x1024xf32>
    %c8_92 = arith.constant 8 : index
    %c0_93 = arith.constant 0 : index
    %228 = vector.load %arg2[%c8_92, %c0_93] : memref<9x1024xf32, #tpu.memory_space<vmem>>, vector<1x1024xf32>
    %229 = vector.shape_cast %228 : vector<1x1024xf32> to vector<1024xf32>
    %230 = vector.shape_cast %229 : vector<1024xf32> to vector<1x1024xf32>
    %231 = vector.broadcast %230 : vector<1x1024xf32> to vector<12x1024xf32>
    %232 = arith.mulf %227, %231 : vector<12x1024xf32>
    %c8_94 = arith.constant 8 : index
    %c0_95 = arith.constant 0 : index
    %c0_96 = arith.constant 0 : index
    %233 = vector.load %arg5[%c8_94, %c0_95, %c0_96] : memref<9x12x12xf32, #tpu.memory_space<vmem>>, vector<1x12x12xf32>
    %234 = vector.shape_cast %233 : vector<1x12x12xf32> to vector<12x12xf32>
    %cst_97 = arith.constant dense<0.000000e+00> : vector<12x1024xf32>
    %235 = tpu.matmul %234, %232, %cst_97 {dimension_numbers = #tpu.dot_dimension_numbers<[1], [0], [0], [1], [0, 0, 1, 1], [], []>} : vector<12x12xf32>, vector<12x1024xf32>, vector<12x1024xf32> -> vector<12x1024xf32>
    %236 = arith.addf %224, %235 : vector<12x1024xf32>
    %c0_98 = arith.constant 0 : index
    %c0_99 = arith.constant 0 : index
    %237 = vector.load %arg6[%c0_98, %c0_99] : memref<12x1xf32, #tpu.memory_space<vmem>>, vector<12x1xf32>
    %238 = vector.broadcast %237 : vector<12x1xf32> to vector<12x1024xf32>
    %239 = arith.addf %236, %238 : vector<12x1024xf32>
    %cst_100 = arith.constant dense<0.000000e+00> : vector<12xf32>
    %240 = vector.multi_reduction <add>, %239, %cst_100 [1] : vector<12x1024xf32> to vector<12xf32>
    %241 = vector.shape_cast %240 : vector<12xf32> to vector<12x1xf32>
    %cst_101 = arith.constant 1.024000e+03 : f32
    %242 = vector.broadcast %cst_101 : f32 to vector<12x1xf32>
    %243 = arith.divf %241, %242 : vector<12x1xf32>
    %244 = vector.broadcast %243 : vector<12x1xf32> to vector<12x1024xf32>
    %245 = arith.subf %239, %244 : vector<12x1024xf32>
    %246 = arith.mulf %245, %245 : vector<12x1024xf32>
    %cst_102 = arith.constant dense<0.000000e+00> : vector<12xf32>
    %247 = vector.multi_reduction <add>, %246, %cst_102 [1] : vector<12x1024xf32> to vector<12xf32>
    %248 = vector.shape_cast %247 : vector<12xf32> to vector<12x1xf32>
    %cst_103 = arith.constant 1.024000e+03 : f32
    %249 = vector.broadcast %cst_103 : f32 to vector<12x1xf32>
    %250 = arith.divf %248, %249 : vector<12x1xf32>
    %251 = vector.broadcast %243 : vector<12x1xf32> to vector<12x1024xf32>
    %252 = arith.subf %239, %251 : vector<12x1024xf32>
    %cst_104 = arith.constant 9.99999974E-6 : f32
    %253 = vector.broadcast %cst_104 : f32 to vector<12x1xf32>
    %254 = arith.addf %250, %253 : vector<12x1xf32>
    %255 = math.rsqrt %254 : vector<12x1xf32>
    %256 = vector.broadcast %255 : vector<12x1xf32> to vector<12x1024xf32>
    %257 = arith.mulf %252, %256 : vector<12x1024xf32>
    %cst_105 = arith.constant 0.000000e+00 : f32
    %258 = vector.broadcast %cst_105 : f32 to vector<12x1024xf32>
    %259 = arith.maximumf %257, %258 : vector<12x1024xf32>
    %c0_106 = arith.constant 0 : index
    %c0_107 = arith.constant 0 : index
    %c0_108 = arith.constant 0 : index
    %260 = vector.load %arg7[%c0_106, %c0_107, %c0_108] : memref<1x12x1024xf32, #tpu.memory_space<vmem>>, vector<1x12x1024xf32>
    %261 = vector.shape_cast %260 : vector<1x12x1024xf32> to vector<12x1024xf32>
    %262 = vector.shape_cast %259 : vector<12x1024xf32> to vector<1x12x1024xf32>
    tpu.vector_store %arg7[%c0_106, %c0_107, %c0_108], %262 {strides = array<i32>} : memref<1x12x1024xf32, #tpu.memory_space<vmem>>, vector<1x12x1024xf32>,
    return
  }
  func.func @transform_0(%arg0: i32) -> (i32, i32, i32) {
    %c0_i32 = arith.constant 0 : i32
    %c0_i32_0 = arith.constant 0 : i32
    %c0_i32_1 = arith.constant 0 : i32
    return %arg0, %c0_i32, %c0_i32_0 : i32, i32, i32
  }
  func.func @transform_1(%arg0: i32) -> (i32, i32) {
    %c0_i32 = arith.constant 0 : i32
    %c0_i32_0 = arith.constant 0 : i32
    %c0_i32_1 = arith.constant 0 : i32
    return %c0_i32, %c0_i32_0 : i32, i32
  }
  func.func @transform_2(%arg0: i32) -> (i32, i32, i32) {
    %c0_i32 = arith.constant 0 : i32
    %c0_i32_0 = arith.constant 0 : i32
    %c0_i32_1 = arith.constant 0 : i32
    %c0_i32_2 = arith.constant 0 : i32
    return %c0_i32, %c0_i32_0, %c0_i32_1 : i32, i32, i32
  }
  func.func @transform_3(%arg0: i32) -> (i32, i32) {
    %c0_i32 = arith.constant 0 : i32
    %c0_i32_0 = arith.constant 0 : i32
    %c0_i32_1 = arith.constant 0 : i32
    return %c0_i32, %c0_i32_0 : i32, i32
  }
  func.func @transform_4(%arg0: i32) -> (i32, i32, i32) {
    %c0_i32 = arith.constant 0 : i32
    %c0_i32_0 = arith.constant 0 : i32
    %c0_i32_1 = arith.constant 0 : i32
    %c0_i32_2 = arith.constant 0 : i32
    return %c0_i32, %c0_i32_0, %c0_i32_1 : i32, i32, i32
  }
  func.func @transform_5(%arg0: i32) -> (i32, i32) {
    %c0_i32 = arith.constant 0 : i32
    %c0_i32_0 = arith.constant 0 : i32
    %c0_i32_1 = arith.constant 0 : i32
    return %c0_i32, %c0_i32_0 : i32, i32
  }
  func.func @transform_6(%arg0: i32) -> (i32, i32, i32) {
    %c0_i32 = arith.constant 0 : i32
    %c0_i32_0 = arith.constant 0 : i32
    %c0_i32_1 = arith.constant 0 : i32
    return %arg0, %c0_i32, %c0_i32_0 : i32, i32, i32
  }
}

</mosaic_0001>

<llo_original>
// kernel: tpu_custom_call.1
$region0: #{tpu_custom_call.1}
  #allocation0 [shape = 'u32[]', space=smem, size = 0x4, offset = 0x4, fixed_abs, tag = 'smem constant byte address 0x4 - core index']
  #allocation1 [shape = 'u32[72,128]{1,0:T(1,128)}', space=vmem, size = 0x9000, scoped, tag = 'internal scratch']
  %s0 = inlined_call_operand.hbm [shape: f32[12,256], index: 0, kind: input, shape index: {}]
  %s1 = inlined_call_operand.hbm [shape: f32[12,256], index: 1, kind: output, shape index: {}]
  %s2 = sld [smem:[#allocation0]]
  $region18: #{tpu_custom_call.1} parent=0
    _
  %s4 = ssub.s32 1, %s2
  %s5 = scalar_select 0, %s4, %s2
  $region1: #{tpu_custom_call.1} parent=0
    #allocation2 [shape = 'u8[16384]{0}', space=vmem, size = 0x4000, scoped, tag = 'input window, operand 0, single buffered']
    #allocation3 [shape = 's32[1]{0}', space=sflag, size = 0x4, scoped, tag = 'scoped memory for tpu_custom_call.1']
    #allocation4 [shape = 's32[1]{0}', space=sflag, size = 0x4, scoped, tag = 'scoped memory for tpu_custom_call.1']
    #allocation5 [shape = 'u8[16384]{0}', space=vmem, size = 0x4000, scoped, tag = 'output window, operand 0, single buffered']
    %6 = vsyncpa [#allocation3], 0
    %7 = vsyncpa [#allocation4], 0
    // Predicated region
    $region2: #{tpu_custom_call.1} parent=1 // pred_check
      _
    $region3: #{tpu_custom_call.1} parent=1 // pred_check_branch
      %9 = sbr.rel (0) target = $region5
    $region4: #{tpu_custom_call.1} parent=1 // pred_region
      %11 = vsyncadd [#allocation3], 0
      %s12 = sshll.u32 %s0, 4
      %s13 = int_to_ptr.hbm [resolvable:$true] %s12
      %s14 = sshll.u32 [#allocation2], 4
      %s15 = int_to_ptr.vmem [resolvable:$true] %s14
      %20 = dma.hbm_to_vmem [thread:$0]  %s13, 512, %s15, [#allocation3], 256, 256, 16
    $region5: #{tpu_custom_call.1} parent=1 // pred_fallthru
      _
    // Predicated region
    $region6: #{tpu_custom_call.1} parent=1 // pred_check
      _
    $region7: #{tpu_custom_call.1} parent=1 // pred_check_branch
      %22 = sbr.rel (0) target = $region9
    $region8: #{tpu_custom_call.1} parent=1 // pred_region
      %24 = dma.done [#allocation3], 512
    $region9: #{tpu_custom_call.1} parent=1 // pred_fallthru
      _
    %v25 = vld [vmem:[#allocation2] sm:$0xff]
    %v26 = vld [vmem:[#allocation2 + $0x8] sm:$0xff]
    %v27 = vld [vmem:[#allocation2 + $0x10] sm:$0xf]
    %v28 = vld [vmem:[#allocation2 + $0x18] sm:$0xf]
    %29 = vrot.lane.b32.xlu0 %v25, 33
    %v30 = vpop.permute.xlu0 %29
    %31 = vrot.lane.b32.xlu0 %v27, 33
    %v32 = vpop.permute.xlu0 %31
    %33 = vrot.lane.b32.xlu0 %v26, 33
    %v34 = vpop.permute.xlu0 %33
    %35 = vrot.lane.b32.xlu0 %v28, 33
    %v36 = vpop.permute.xlu0 %35
    %v37 = vlaneseq
    %v38 = vand.u32 %v37, 127
    %vm39 = vcmp.lt.s32.totalorder %v38, 33
    %v40 = vsel %vm39, %v30, %v34
    %v41 = vsel %vm39, %v32, %v36
    %v42 = vsel %vm39, %v34, %v30
    %v43 = vsel %vm39, %v36, %v32
    %44 = vst [vmem:[#allocation5] sm:$0xff] %v42
    %45 = vst [vmem:[#allocation5 + $0x8] sm:$0xff] %v40
    %46 = vst [vmem:[#allocation5 + $0x10] sm:$0xf] %v43
    %47 = vst [vmem:[#allocation5 + $0x18] sm:$0xf] %v41
    // Predicated region
    $region10: #{tpu_custom_call.1} parent=1 // pred_check
      _
    $region11: #{tpu_custom_call.1} parent=1 // pred_check_branch
      %49 = sbr.rel (0) target = $region13
    $region12: #{tpu_custom_call.1} parent=1 // pred_region
      %51 = vsyncadd [#allocation4], 0
      %s52 = sshll.u32 [#allocation5], 4
      %s53 = int_to_ptr.vmem [resolvable:$true] %s52
      %s54 = sshll.u32 %s1, 4
      %s55 = int_to_ptr.hbm [resolvable:$true] %s54
      %60 = dma.vmem_to_hbm [thread:$0]  %s53, 512, %s55, [#allocation4], 256, 256, 16
    $region13: #{tpu_custom_call.1} parent=1 // pred_fallthru
      _
    // Predicated region
    $region14: #{tpu_custom_call.1} parent=1 // pred_check
      _
    $region15: #{tpu_custom_call.1} parent=1 // pred_check_branch
      %62 = sbr.rel (0) target = $region17
    $region16: #{tpu_custom_call.1} parent=1 // pred_region
      %64 = dma.done [#allocation4], 512
    $region17: #{tpu_custom_call.1} parent=1 // pred_fallthru
      _
    %65 = vsyncpa [#allocation3], 1
    %66 = vsyncpa [#allocation4], 1

// kernel: tpu_custom_call.1
$region0: #{tpu_custom_call.1}
  #allocation0 [shape = 'u32[]', space=smem, size = 0x4, offset = 0x4, fixed_abs, tag = 'smem constant byte address 0x4 - core index']
  #allocation1 [shape = 'u32[72,128]{1,0:T(1,128)}', space=vmem, size = 0x9000, scoped, tag = 'internal scratch']
  %s0 = inlined_call_operand.vmem [shape: f32[2,1,1024], index: 0, kind: input, shape index: {}]
  %s1 = inlined_call_operand.hbm [shape: f32[9,1024], index: 1, kind: input, shape index: {}]
  %s2 = inlined_call_operand.vmem [shape: f32[9,12,1], index: 2, kind: input, shape index: {}]
  %s3 = inlined_call_operand.vmem [shape: f32[12,1], index: 3, kind: input, shape index: {}]
  %s4 = inlined_call_operand.vmem [shape: f32[9,12,12], index: 4, kind: input, shape index: {}]
  %s5 = inlined_call_operand.vmem [shape: f32[12,1], index: 5, kind: input, shape index: {}]
  %s6 = inlined_call_operand.vmem [shape: f32[2,12,1024], index: 6, kind: output, shape index: {}]
  %s7 = sld [smem:[#allocation0]]
  $region61: #{tpu_custom_call.1} parent=0
    _
  %s9 = ssub.s32 1, %s7
  %s10 = scalar_select 0, %s9, %s7
  $region1: #{tpu_custom_call.1} parent=0
    #allocation2 [shape = 'u8[65536]{0}', space=vmem, size = 0x10000, scoped, tag = 'input window, operand 1, single buffered']
    #allocation3 [shape = 's32[2]{0}', space=sflag, size = 0x8, scoped, tag = 'scoped memory for tpu_custom_call.1']
    %11 = vsyncpa [#allocation3], 0
    loop: start=0, step=1, limit=4
    $region2: #{tpu_custom_call.1} parent=1 // loop_pre_header
      _
    $region3: #{tpu_custom_call.1} parent=1 // loop_header
      %s13 = sphi 0, %s17
      %p14 = scmp.ge.s32.totalorder %s13, 4
      %s23 = sphi 0, %s25
      %s26 = sphi 0, %s23
      %s27 = sphi 0, %s26
      %s43 = sphi 0, %s27
      %s47 = sphi 0, %s47
      %s49 = sphi 0, %s47
      %s50 = sphi 0, %s49
      %s64 = sphi 0, %s50
      %s68 = sphi 0, %s68
      %s70 = sphi 0, %s68
      %s71 = sphi 0, %s70
      %s85 = sphi 0, %s71
      %s89 = sphi 0, %s89
      %s91 = sphi 0, %s89
      %s92 = sphi 0, %s91
      %s106 = sphi 0, %s92
      %s110 = sphi 0, %s110
      %s112 = sphi 0, %s110
      %s113 = sphi 0, %s112
      %s127 = sphi 0, %s113
      %s131 = sphi 0, %s131
      %s133 = sphi 0, %s131
      %s134 = sphi 0, %s133
      %s148 = sphi 0, %s134
      %s154 = sphi 0, %s156
      %s157 = sphi 0, %s154
      %s158 = sphi 0, %s157
      %s174 = sphi 0, %s158
    $region4: #{tpu_custom_call.1} parent=1 // loop_header_branch
      %16 = sbr.rel (%p14) target = $region8
    $region5: #{tpu_custom_call.1} parent=1 // loop_body
      %s18 = ssub.s32 %s13, 1
      %s19 = ssub.s32 %s13, 2
      %s20 = sadd.s32 %s13, 1
      %s21 = ssub.s32 %s13, %s20
      %p22 = scmp.eq.s32.totalorder %s21, 0
      %s24 = sadd.s32 %s23, 1
      %s25 = scalar_select %p22, %s23, %s24
      %p28 = pneg %p22
      %p29 = scmp.eq.s32.totalorder %s13, 1
      %p30 = por %p28, %p29
      %p31 = scmp.ne.s32.totalorder %s23, %s26
      %p32 = scmp.eq.s32.totalorder %s13, 0
      %p33 = por %p31, %p32
      %p34 = scmp.ne.s32.totalorder %s23, %s26
      %p35 = scmp.eq.s32.totalorder %s18, 1
      %p36 = por %p34, %p35
      %p37 = scmp.ne.s32.totalorder %s26, %s27
      %p38 = scmp.eq.s32.totalorder %s18, 0
      %p39 = por %p37, %p38
      %p40 = scmp.ne.s32.totalorder %s26, %s27
      %p41 = scmp.eq.s32.totalorder %s19, 1
      %p42 = por %p40, %p41
      %p44 = scmp.ne.s32.totalorder %s27, %s43
      %p45 = scmp.eq.s32.totalorder %s19, 0
      %p46 = por %p44, %p45
      %s48 = sadd.s32 %s47, 1
      %p51 = scmp.eq.s32.totalorder %s13, 1
      %p52 = scmp.ne.s32.totalorder %s47, %s49
      %p53 = scmp.eq.s32.totalorder %s13, 0
      %p54 = por %p52, %p53
      %p55 = scmp.ne.s32.totalorder %s47, %s49
      %p56 = scmp.eq.s32.totalorder %s18, 1
      %p57 = por %p55, %p56
      %p58 = scmp.ne.s32.totalorder %s49, %s50
      %p59 = scmp.eq.s32.totalorder %s18, 0
      %p60 = por %p58, %p59
      %p61 = scmp.ne.s32.totalorder %s49, %s50
      %p62 = scmp.eq.s32.totalorder %s19, 1
      %p63 = por %p61, %p62
      %p65 = scmp.ne.s32.totalorder %s50, %s64
      %p66 = scmp.eq.s32.totalorder %s19, 0
      %p67 = por %p65, %p66
      %s69 = sadd.s32 %s68, 1
      %p72 = scmp.eq.s32.totalorder %s13, 1
      %p73 = scmp.ne.s32.totalorder %s68, %s70
      %p74 = scmp.eq.s32.totalorder %s13, 0
      %p75 = por %p73, %p74
      %p76 = scmp.ne.s32.totalorder %s68, %s70
      %p77 = scmp.eq.s32.totalorder %s18, 1
      %p78 = por %p76, %p77
      %p79 = scmp.ne.s32.totalorder %s70, %s71
      %p80 = scmp.eq.s32.totalorder %s18, 0
      %p81 = por %p79, %p80
      %p82 = scmp.ne.s32.totalorder %s70, %s71
      %p83 = scmp.eq.s32.totalorder %s19, 1
      %p84 = por %p82, %p83
      %p86 = scmp.ne.s32.totalorder %s71, %s85
      %p87 = scmp.eq.s32.totalorder %s19, 0
      %p88 = por %p86, %p87
      %s90 = sadd.s32 %s89, 1
      %p93 = scmp.eq.s32.totalorder %s13, 1
      %p94 = scmp.ne.s32.totalorder %s89, %s91
      %p95 = scmp.eq.s32.totalorder %s13, 0
      %p96 = por %p94, %p95
      %p97 = scmp.ne.s32.totalorder %s89, %s91
      %p98 = scmp.eq.s32.totalorder %s18, 1
      %p99 = por %p97, %p98
      %p100 = scmp.ne.s32.totalorder %s91, %s92
      %p101 = scmp.eq.s32.totalorder %s18, 0
      %p102 = por %p100, %p101
      %p103 = scmp.ne.s32.totalorder %s91, %s92
      %p104 = scmp.eq.s32.totalorder %s19, 1
      %p105 = por %p103, %p104
      %p107 = scmp.ne.s32.totalorder %s92, %s106
      %p108 = scmp.eq.s32.totalorder %s19, 0
      %p109 = por %p107, %p108
      %s111 = sadd.s32 %s110, 1
      %p114 = scmp.eq.s32.totalorder %s13, 1
      %p115 = scmp.ne.s32.totalorder %s110, %s112
      %p116 = scmp.eq.s32.totalorder %s13, 0
      %p117 = por %p115, %p116
      %p118 = scmp.ne.s32.totalorder %s110, %s112
      %p119 = scmp.eq.s32.totalorder %s18, 1
      %p120 = por %p118, %p119
      %p121 = scmp.ne.s32.totalorder %s112, %s113
      %p122 = scmp.eq.s32.totalorder %s18, 0
      %p123 = por %p121, %p122
      %p124 = scmp.ne.s32.totalorder %s112, %s113
      %p125 = scmp.eq.s32.totalorder %s19, 1
      %p126 = por %p124, %p125
      %p128 = scmp.ne.s32.totalorder %s113, %s127
      %p129 = scmp.eq.s32.totalorder %s19, 0
      %p130 = por %p128, %p129
      %s132 = sadd.s32 %s131, 1
      %p135 = scmp.eq.s32.totalorder %s13, 1
      %p136 = scmp.ne.s32.totalorder %s131, %s133
      %p137 = scmp.eq.s32.totalorder %s13, 0
      %p138 = por %p136, %p137
      %p139 = scmp.ne.s32.totalorder %s131, %s133
      %p140 = scmp.eq.s32.totalorder %s18, 1
      %p141 = por %p139, %p140
      %p142 = scmp.ne.s32.totalorder %s133, %s134
      %p143 = scmp.eq.s32.totalorder %s18, 0
      %p144 = por %p142, %p143
      %p145 = scmp.ne.s32.totalorder %s133, %s134
      %p146 = scmp.eq.s32.totalorder %s19, 1
      %p147 = por %p145, %p146
      %p149 = scmp.ne.s32.totalorder %s134, %s148
      %p150 = scmp.eq.s32.totalorder %s19, 0
      %p151 = por %p149, %p150
      %s152 = ssub.s32 %s13, %s20
      %p153 = scmp.eq.s32.totalorder %s152, 0
      %s155 = sadd.s32 %s154, 1
      %s156 = scalar_select %p153, %s154, %s155
      %p159 = pneg %p153
      %p160 = scmp.eq.s32.totalorder %s13, 1
      %p161 = por %p159, %p160
      %p162 = scmp.ne.s32.totalorder %s154, %s157
      %p163 = scmp.eq.s32.totalorder %s13, 0
      %p164 = por %p162, %p163
      %p165 = scmp.ne.s32.totalorder %s154, %s157
      %p166 = scmp.eq.s32.totalorder %s18, 1
      %p167 = por %p165, %p166
      %p168 = scmp.ne.s32.totalorder %s157, %s158
      %p169 = scmp.eq.s32.totalorder %s18, 0
      %p170 = por %p168, %p169
      %p171 = scmp.ne.s32.totalorder %s157, %s158
      %p172 = scmp.eq.s32.totalorder %s19, 1
      %p173 = por %p171, %p172
      %p175 = scmp.ne.s32.totalorder %s158, %s174
      %p176 = scmp.eq.s32.totalorder %s19, 0
      %p177 = por %p175, %p176
      %p178 = scmp.le.s32.totalorder 1, %s13
      %p179 = scmp.lt.s32.totalorder %s13, 3
      %p180 = pnand %p178, %p179
      %p181 = pneg %p180
      // Predicated region
      $region9: #{tpu_custom_call.1} parent=5 // pred_check
        _
      $region10: #{tpu_custom_call.1} parent=5 // pred_check_branch
        %183 = sbr.rel (%p180) target = $region12
      $region11: #{tpu_custom_call.1} parent=5 // pred_region
        %s184 = ssub.s32 %s13, 1
        // Predicated region
        $region13: #{tpu_custom_call.1} parent=11 // pred_check
          %p185 = pneg %p60
        $region14: #{tpu_custom_call.1} parent=11 // pred_check_branch
          %187 = sbr.rel (%p185) target = $region16
        $region15: #{tpu_custom_call.1} parent=11 // pred_region
          %189 = vsyncadd [#allocation3], 0
          %s190 = sshll.u32 %s1, 4
          %s191 = int_to_ptr.hbm [resolvable:$true] %s190
          %s192 = sshll.u32 [#allocation2], 4
          %s193 = int_to_ptr.vmem [resolvable:$true] %s192
          %198 = dma.hbm_to_vmem [thread:$0]  %s191, 2048, %s193, [#allocation3], 1024, 1024, 64
        $region16: #{tpu_custom_call.1} parent=11 // pred_fallthru
          _
        // Predicated region
        $region17: #{tpu_custom_call.1} parent=11 // pred_check
          %p199 = pneg %p81
        $region18: #{tpu_custom_call.1} parent=11 // pred_check_branch
          %201 = sbr.rel (%p199) target = $region20
        $region19: #{tpu_custom_call.1} parent=11 // pred_region
          _
        $region20: #{tpu_custom_call.1} parent=11 // pred_fallthru
          _
        // Predicated region
        $region21: #{tpu_custom_call.1} parent=11 // pred_check
          %p202 = pneg %p102
        $region22: #{tpu_custom_call.1} parent=11 // pred_check_branch
          %204 = sbr.rel (%p202) target = $region24
        $region23: #{tpu_custom_call.1} parent=11 // pred_region
          _
        $region24: #{tpu_custom_call.1} parent=11 // pred_fallthru
          _
        // Predicated region
        $region25: #{tpu_custom_call.1} parent=11 // pred_check
          %p205 = pneg %p123
        $region26: #{tpu_custom_call.1} parent=11 // pred_check_branch
          %207 = sbr.rel (%p205) target = $region28
        $region27: #{tpu_custom_call.1} parent=11 // pred_region
          _
        $region28: #{tpu_custom_call.1} parent=11 // pred_fallthru
          _
        // Predicated region
        $region29: #{tpu_custom_call.1} parent=11 // pred_check
          %p208 = pneg %p144
        $region30: #{tpu_custom_call.1} parent=11 // pred_check_branch
          %210 = sbr.rel (%p208) target = $region32
        $region31: #{tpu_custom_call.1} parent=11 // pred_region
          _
        $region32: #{tpu_custom_call.1} parent=11 // pred_fallthru
          _
      $region12: #{tpu_custom_call.1} parent=5 // pred_fallthru
        _
      %p211 = scmp.lt.s32.totalorder %s13, 2
      // Predicated region
      $region33: #{tpu_custom_call.1} parent=5 // pred_check
        %p212 = pneg %p211
      $region34: #{tpu_custom_call.1} parent=5 // pred_check_branch
        %214 = sbr.rel (%p212) target = $region36
      $region35: #{tpu_custom_call.1} parent=5 // pred_region
        // Predicated region
        $region37: #{tpu_custom_call.1} parent=35 // pred_check
          %p215 = pneg %p33
        $region38: #{tpu_custom_call.1} parent=35 // pred_check_branch
          %217 = sbr.rel (%p215) target = $region40
        $region39: #{tpu_custom_call.1} parent=35 // pred_region
          %p218 = scmp.lt.s32.totalorder %s13, 1
          %s219 = scalar_select %p218, %s13, 1
          %s220 = smul.addr %s219, 8
          %s221 = scalar_lea.vmem %s0, %s220
        $region40: #{tpu_custom_call.1} parent=35 // pred_fallthru
          _
      $region36: #{tpu_custom_call.1} parent=5 // pred_fallthru
        _
      %p222 = scmp.le.s32.totalorder 1, %s13
      %p223 = scmp.lt.s32.totalorder %s13, 3
      %p224 = pnand %p222, %p223
      %p225 = pneg %p224
      // Predicated region
      $region41: #{tpu_custom_call.1} parent=5 // pred_check
        _
      $region42: #{tpu_custom_call.1} parent=5 // pred_check_branch
        %227 = sbr.rel (%p224) target = $region44
      $region43: #{tpu_custom_call.1} parent=5 // pred_region
        %s228 = ssub.s32 %s13, 1
        // Predicated region
        $region45: #{tpu_custom_call.1} parent=43 // pred_check
          %p229 = pneg %p60
        $region46: #{tpu_custom_call.1} parent=43 // pred_check_branch
          %231 = sbr.rel (%p229) target = $region48
        $region47: #{tpu_custom_call.1} parent=43 // pred_region
          %233 = dma.done [#allocation3], 2048
        $region48: #{tpu_custom_call.1} parent=43 // pred_fallthru
          _
        %p234 = scmp.lt.s32.totalorder %s18, 1
        %s235 = scalar_select %p234, %s18, 1
        %s236 = smul.addr %s235, 8
        %s237 = scalar_lea.vmem %s0, %s236
        %p238 = pneg %p39
        %p239 = pneg %p36
        %p240 = pneg %p60
        %p241 = pneg %p57
        %p242 = pneg %p81
        %p243 = pneg %p78
        %p244 = pneg %p102
        %p245 = pneg %p99
        %p246 = pneg %p123
        %p247 = pneg %p120
        %p248 = pneg %p144
        %p249 = pneg %p141
        %p250 = pneg %p170
        %p251 = pneg %p167
        %p252 = scmp.lt.s32.totalorder %s18, 1
        %s253 = scalar_select %p252, %s18, 1
        %s254 = smul.addr %s253, 16
        %s255 = smul.addr %s254, 8
        %s256 = scalar_lea.vmem %s6, %s255
        %p257 = scmp.lt.s32.totalorder %s18, 1
        %s258 = scalar_select %p257, %s18, 1
        %s259 = smul.addr %s258, 8
        %s260 = scalar_lea.vmem %s0, %s259
        %p261 = scmp.lt.s32.totalorder %s18, 1
        %s262 = scalar_select %p261, %s18, 1
        %s263 = smul.addr %s262, 16
        %s264 = smul.addr %s263, 8
        %s265 = scalar_lea.vmem %s6, %s264
        %v266 = vld [vmem:[%s260] sm:$0xff]
        %v268 = vperm.slane %v266, 7
        %269 = vrot.lane.b32.xlu0 %v268, 33
        %v270 = vpop.permute.xlu0 %269
        %v272 = vperm.slane %v266, 0
        %v273 = vperm.slane %v266, 1
        %v274 = vperm.slane %v266, 2
        %v275 = vperm.slane %v266, 3
        %v276 = vperm.slane %v266, 4
        %v277 = vperm.slane %v266, 5
        %v278 = vperm.slane %v266, 6
        %279 = vrot.lane.b32.xlu0 %v272, 33
        %v280 = vpop.permute.xlu0 %279
        %281 = vrot.lane.b32.xlu0 %v273, 33
        %v282 = vpop.permute.xlu0 %281
        %283 = vrot.lane.b32.xlu0 %v274, 33
        %v284 = vpop.permute.xlu0 %283
        %285 = vrot.lane.b32.xlu0 %v275, 33
        %v286 = vpop.permute.xlu0 %285
        %287 = vrot.lane.b32.xlu0 %v276, 33
        %v288 = vpop.permute.xlu0 %287
        %289 = vrot.lane.b32.xlu0 %v277, 33
        %v290 = vpop.permute.xlu0 %289
        %291 = vrot.lane.b32.xlu0 %v278, 33
        %v292 = vpop.permute.xlu0 %291
        %vm293 = vcmask 269312
        %v294 = vsel %vm293, %v280, %v282
        %v295 = vsel %vm293, %v282, %v284
        %v296 = vsel %vm293, %v284, %v286
        %v297 = vsel %vm293, %v286, %v288
        %v298 = vsel %vm293, %v288, %v290
        %v299 = vsel %vm293, %v290, %v292
        %v300 = vsel %vm293, %v292, %v270
        %v309 = vsel %vm293, %v270, %v280
        %v310 = vld [vmem:[#allocation2] ss:$8 sm:$0xf]
        %v311 = vld [vmem:[#allocation2] ss:$8 sm:$0xf0]
        %v312 = vor.u32 %v310, %v311
        %v314 = vperm.slane %v312, 0
        %v315 = vperm.slane %v312, 1
        %v316 = vperm.slane %v312, 2
        %v317 = vperm.slane %v312, 3
        %v318 = vperm.slane %v312, 4
        %v319 = vperm.slane %v312, 5
        %v320 = vperm.slane %v312, 6
        %v321 = vperm.slane %v312, 7
        %v330 = vmul.f32 %v309, %v314
        %v331 = vmul.f32 %v294, %v315
        %v332 = vmul.f32 %v295, %v316
        %v333 = vmul.f32 %v296, %v317
        %v334 = vmul.f32 %v297, %v318
        %v335 = vmul.f32 %v298, %v319
        %v336 = vmul.f32 %v299, %v320
        %v337 = vmul.f32 %v300, %v321
        %v338 = vld [vmem:[%s2] sm:$0xff]
        %v339 = vld [vmem:[%s2 + $0x8] sm:$0xf]
        %341 = vset.pattern.permute.xlu0 0
        %342 = vperm.xlu0 %341, %v338
        %v343 = vpop.permute.xlu0 %342
        %346 = vset.pattern.permute.xlu0 0
        %347 = vperm.xlu0 %346, %v339
        %v348 = vpop.permute.xlu0 %347
        %v350 = vperm.slane %v330, 0
        %v351 = vperm.slane %v331, 0
        %v352 = vperm.slane %v332, 0
        %v353 = vperm.slane %v333, 0
        %v354 = vperm.slane %v334, 0
        %v355 = vperm.slane %v335, 0
        %v356 = vperm.slane %v336, 0
        %v357 = vperm.slane %v337, 0
        %v358 = vmul.f32 %v343, %v350
        %v359 = vmul.f32 %v343, %v351
        %v360 = vmul.f32 %v343, %v352
        %v361 = vmul.f32 %v343, %v353
        %v362 = vmul.f32 %v343, %v354
        %v363 = vmul.f32 %v343, %v355
        %v364 = vmul.f32 %v343, %v356
        %v365 = vmul.f32 %v343, %v357
        %v366 = vmul.f32 %v348, %v350
        %v367 = vmul.f32 %v348, %v351
        %v368 = vmul.f32 %v348, %v352
        %v369 = vmul.f32 %v348, %v353
        %v370 = vmul.f32 %v348, %v354
        %v371 = vmul.f32 %v348, %v355
        %v372 = vmul.f32 %v348, %v356
        %v373 = vmul.f32 %v348, %v357
        %v374 = vadd.f32 %v358, 0.0
        %v375 = vadd.f32 %v359, 0.0
        %v376 = vadd.f32 %v360, 0.0
        %v377 = vadd.f32 %v361, 0.0
        %v378 = vadd.f32 %v362, 0.0
        %v379 = vadd.f32 %v363, 0.0
        %v380 = vadd.f32 %v364, 0.0
        %v381 = vadd.f32 %v365, 0.0
        %v382 = vadd.f32 %v366, 0.0
        %v383 = vadd.f32 %v367, 0.0
        %v384 = vadd.f32 %v368, 0.0
        %v385 = vadd.f32 %v369, 0.0
        %v386 = vadd.f32 %v370, 0.0
        %v387 = vadd.f32 %v371, 0.0
        %v388 = vadd.f32 %v372, 0.0
        %v389 = vadd.f32 %v373, 0.0
        %390 = vrot.lane.b32.xlu0 %v268, 32
        %v391 = vpop.permute.xlu0 %390
        %393 = vrot.lane.b32.xlu0 %v272, 32
        %v394 = vpop.permute.xlu0 %393
        %395 = vrot.lane.b32.xlu0 %v273, 32
        %v396 = vpop.permute.xlu0 %395
        %397 = vrot.lane.b32.xlu0 %v274, 32
        %v398 = vpop.permute.xlu0 %397
        %399 = vrot.lane.b32.xlu0 %v275, 32
        %v400 = vpop.permute.xlu0 %399
        %401 = vrot.lane.b32.xlu0 %v276, 32
        %v402 = vpop.permute.xlu0 %401
        %403 = vrot.lane.b32.xlu0 %v277, 32
        %v404 = vpop.permute.xlu0 %403
        %405 = vrot.lane.b32.xlu0 %v278, 32
        %v406 = vpop.permute.xlu0 %405
        %vm407 = vcmask 261120
        %v408 = vsel %vm407, %v394, %v396
        %v409 = vsel %vm407, %v396, %v398
        %v410 = vsel %vm407, %v398, %v400
        %v411 = vsel %vm407, %v400, %v402
        %v412 = vsel %vm407, %v402, %v404
        %v413 = vsel %vm407, %v404, %v406
        %v414 = vsel %vm407, %v406, %v391
        %v423 = vsel %vm407, %v391, %v394
        %s424 = scalar_lea.vmem [#allocation2], 1
        %v425 = vld [vmem:[%s424] ss:$8 sm:$0xf]
        %v426 = vld [vmem:[%s424] ss:$8 sm:$0xf0]
        %v427 = vor.u32 %v425, %v426
        %v429 = vperm.slane %v427, 0
        %v430 = vperm.slane %v427, 1
        %v431 = vperm.slane %v427, 2
        %v432 = vperm.slane %v427, 3
        %v433 = vperm.slane %v427, 4
        %v434 = vperm.slane %v427, 5
        %v435 = vperm.slane %v427, 6
        %v436 = vperm.slane %v427, 7
        %v445 = vmul.f32 %v423, %v429
        %v446 = vmul.f32 %v408, %v430
        %v447 = vmul.f32 %v409, %v431
        %v448 = vmul.f32 %v410, %v432
        %v449 = vmul.f32 %v411, %v433
        %v450 = vmul.f32 %v412, %v434
        %v451 = vmul.f32 %v413, %v435
        %v452 = vmul.f32 %v414, %v436
        %s453 = scalar_lea.vmem %s2, 16
        %v454 = vld [vmem:[%s453] sm:$0xff]
        %v455 = vld [vmem:[%s453 + $0x8] sm:$0xf]
        %457 = vset.pattern.permute.xlu0 0
        %458 = vperm.xlu0 %457, %v454
        %v459 = vpop.permute.xlu0 %458
        %462 = vset.pattern.permute.xlu0 0
        %463 = vperm.xlu0 %462, %v455
        %v464 = vpop.permute.xlu0 %463
        %v466 = vperm.slane %v445, 0
        %v467 = vperm.slane %v446, 0
        %v468 = vperm.slane %v447, 0
        %v469 = vperm.slane %v448, 0
        %v470 = vperm.slane %v449, 0
        %v471 = vperm.slane %v450, 0
        %v472 = vperm.slane %v451, 0
        %v473 = vperm.slane %v452, 0
        %v474 = vmul.f32 %v459, %v466
        %v475 = vmul.f32 %v459, %v467
        %v476 = vmul.f32 %v459, %v468
        %v477 = vmul.f32 %v459, %v469
        %v478 = vmul.f32 %v459, %v470
        %v479 = vmul.f32 %v459, %v471
        %v480 = vmul.f32 %v459, %v472
        %v481 = vmul.f32 %v459, %v473
        %v482 = vmul.f32 %v464, %v466
        %v483 = vmul.f32 %v464, %v467
        %v484 = vmul.f32 %v464, %v468
        %v485 = vmul.f32 %v464, %v469
        %v486 = vmul.f32 %v464, %v470
        %v487 = vmul.f32 %v464, %v471
        %v488 = vmul.f32 %v464, %v472
        %v489 = vmul.f32 %v464, %v473
        %v490 = vadd.f32 %v374, %v474
        %v491 = vadd.f32 %v375, %v475
        %v492 = vadd.f32 %v376, %v476
        %v493 = vadd.f32 %v377, %v477
        %v494 = vadd.f32 %v378, %v478
        %v495 = vadd.f32 %v379, %v479
        %v496 = vadd.f32 %v380, %v480
        %v497 = vadd.f32 %v381, %v481
        %v498 = vadd.f32 %v382, %v482
        %v499 = vadd.f32 %v383, %v483
        %v500 = vadd.f32 %v384, %v484
        %v501 = vadd.f32 %v385, %v485
        %v502 = vadd.f32 %v386, %v486
        %v503 = vadd.f32 %v387, %v487
        %v504 = vadd.f32 %v388, %v488
        %v505 = vadd.f32 %v389, %v489
        %506 = vrot.lane.b32.xlu0 %v268, 31
        %v507 = vpop.permute.xlu0 %506
        %509 = vrot.lane.b32.xlu0 %v272, 31
        %v510 = vpop.permute.xlu0 %509
        %511 = vrot.lane.b32.xlu0 %v273, 31
        %v512 = vpop.permute.xlu0 %511
        %513 = vrot.lane.b32.xlu0 %v274, 31
        %v514 = vpop.permute.xlu0 %513
        %515 = vrot.lane.b32.xlu0 %v275, 31
        %v516 = vpop.permute.xlu0 %515
        %517 = vrot.lane.b32.xlu0 %v276, 31
        %v518 = vpop.permute.xlu0 %517
        %519 = vrot.lane.b32.xlu0 %v277, 31
        %v520 = vpop.permute.xlu0 %519
        %521 = vrot.lane.b32.xlu0 %v278, 31
        %v522 = vpop.permute.xlu0 %521
        %vm523 = vcmask 252928
        %v524 = vsel %vm523, %v510, %v512
        %v525 = vsel %vm523, %v512, %v514
        %v526 = vsel %vm523, %v514, %v516
        %v527 = vsel %vm523, %v516, %v518
        %v528 = vsel %vm523, %v518, %v520
        %v529 = vsel %vm523, %v520, %v522
        %v530 = vsel %vm523, %v522, %v507
        %v539 = vsel %vm523, %v507, %v510
        %s540 = scalar_lea.vmem [#allocation2], 2
        %v541 = vld [vmem:[%s540] ss:$8 sm:$0xf]
        %v542 = vld [vmem:[%s540] ss:$8 sm:$0xf0]
        %v543 = vor.u32 %v541, %v542
        %v545 = vperm.slane %v543, 0
        %v546 = vperm.slane %v543, 1
        %v547 = vperm.slane %v543, 2
        %v548 = vperm.slane %v543, 3
        %v549 = vperm.slane %v543, 4
        %v550 = vperm.slane %v543, 5
        %v551 = vperm.slane %v543, 6
        %v552 = vperm.slane %v543, 7
        %v561 = vmul.f32 %v539, %v545
        %v562 = vmul.f32 %v524, %v546
        %v563 = vmul.f32 %v525, %v547
        %v564 = vmul.f32 %v526, %v548
        %v565 = vmul.f32 %v527, %v549
        %v566 = vmul.f32 %v528, %v550
        %v567 = vmul.f32 %v529, %v551
        %v568 = vmul.f32 %v530, %v552
        %s569 = scalar_lea.vmem %s2, 32
        %v570 = vld [vmem:[%s569] sm:$0xff]
        %v571 = vld [vmem:[%s569 + $0x8] sm:$0xf]
        %573 = vset.pattern.permute.xlu0 0
        %574 = vperm.xlu0 %573, %v570
        %v575 = vpop.permute.xlu0 %574
        %578 = vset.pattern.permute.xlu0 0
        %579 = vperm.xlu0 %578, %v571
        %v580 = vpop.permute.xlu0 %579
        %v582 = vperm.slane %v561, 0
        %v583 = vperm.slane %v562, 0
        %v584 = vperm.slane %v563, 0
        %v585 = vperm.slane %v564, 0
        %v586 = vperm.slane %v565, 0
        %v587 = vperm.slane %v566, 0
        %v588 = vperm.slane %v567, 0
        %v589 = vperm.slane %v568, 0
        %v590 = vmul.f32 %v575, %v582
        %v591 = vmul.f32 %v575, %v583
        %v592 = vmul.f32 %v575, %v584
        %v593 = vmul.f32 %v575, %v585
        %v594 = vmul.f32 %v575, %v586
        %v595 = vmul.f32 %v575, %v587
        %v596 = vmul.f32 %v575, %v588
        %v597 = vmul.f32 %v575, %v589
        %v598 = vmul.f32 %v580, %v582
        %v599 = vmul.f32 %v580, %v583
        %v600 = vmul.f32 %v580, %v584
        %v601 = vmul.f32 %v580, %v585
        %v602 = vmul.f32 %v580, %v586
        %v603 = vmul.f32 %v580, %v587
        %v604 = vmul.f32 %v580, %v588
        %v605 = vmul.f32 %v580, %v589
        %v606 = vadd.f32 %v490, %v590
        %v607 = vadd.f32 %v491, %v591
        %v608 = vadd.f32 %v492, %v592
        %v609 = vadd.f32 %v493, %v593
        %v610 = vadd.f32 %v494, %v594
        %v611 = vadd.f32 %v495, %v595
        %v612 = vadd.f32 %v496, %v596
        %v613 = vadd.f32 %v497, %v597
        %v614 = vadd.f32 %v498, %v598
        %v615 = vadd.f32 %v499, %v599
        %v616 = vadd.f32 %v500, %v600
        %v617 = vadd.f32 %v501, %v601
        %v618 = vadd.f32 %v502, %v602
        %v619 = vadd.f32 %v503, %v603
        %v620 = vadd.f32 %v504, %v604
        %v621 = vadd.f32 %v505, %v605
        %622 = vrot.lane.b32.xlu0 %v268, 1
        %v623 = vpop.permute.xlu0 %622
        %625 = vrot.lane.b32.xlu0 %v272, 1
        %v626 = vpop.permute.xlu0 %625
        %627 = vrot.lane.b32.xlu0 %v273, 1
        %v628 = vpop.permute.xlu0 %627
        %629 = vrot.lane.b32.xlu0 %v274, 1
        %v630 = vpop.permute.xlu0 %629
        %631 = vrot.lane.b32.xlu0 %v275, 1
        %v632 = vpop.permute.xlu0 %631
        %633 = vrot.lane.b32.xlu0 %v276, 1
        %v634 = vpop.permute.xlu0 %633
        %635 = vrot.lane.b32.xlu0 %v277, 1
        %v636 = vpop.permute.xlu0 %635
        %637 = vrot.lane.b32.xlu0 %v278, 1
        %v638 = vpop.permute.xlu0 %637
        %vm639 = vcmask 7168
        %v640 = vsel %vm639, %v626, %v628
        %v641 = vsel %vm639, %v628, %v630
        %v642 = vsel %vm639, %v630, %v632
        %v643 = vsel %vm639, %v632, %v634
        %v644 = vsel %vm639, %v634, %v636
        %v645 = vsel %vm639, %v636, %v638
        %v646 = vsel %vm639, %v638, %v623
        %v655 = vsel %vm639, %v623, %v626
        %s656 = scalar_lea.vmem [#allocation2], 3
        %v657 = vld [vmem:[%s656] ss:$8 sm:$0xf]
        %v658 = vld [vmem:[%s656] ss:$8 sm:$0xf0]
        %v659 = vor.u32 %v657, %v658
        %v661 = vperm.slane %v659, 0
        %v662 = vperm.slane %v659, 1
        %v663 = vperm.slane %v659, 2
        %v664 = vperm.slane %v659, 3
        %v665 = vperm.slane %v659, 4
        %v666 = vperm.slane %v659, 5
        %v667 = vperm.slane %v659, 6
        %v668 = vperm.slane %v659, 7
        %v677 = vmul.f32 %v655, %v661
        %v678 = vmul.f32 %v640, %v662
        %v679 = vmul.f32 %v641, %v663
        %v680 = vmul.f32 %v642, %v664
        %v681 = vmul.f32 %v643, %v665
        %v682 = vmul.f32 %v644, %v666
        %v683 = vmul.f32 %v645, %v667
        %v684 = vmul.f32 %v646, %v668
        %s685 = scalar_lea.vmem %s2, 48
        %v686 = vld [vmem:[%s685] sm:$0xff]
        %v687 = vld [vmem:[%s685 + $0x8] sm:$0xf]
        %689 = vset.pattern.permute.xlu0 0
        %690 = vperm.xlu0 %689, %v686
        %v691 = vpop.permute.xlu0 %690
        %694 = vset.pattern.permute.xlu0 0
        %695 = vperm.xlu0 %694, %v687
        %v696 = vpop.permute.xlu0 %695
        %v698 = vperm.slane %v677, 0
        %v699 = vperm.slane %v678, 0
        %v700 = vperm.slane %v679, 0
        %v701 = vperm.slane %v680, 0
        %v702 = vperm.slane %v681, 0
        %v703 = vperm.slane %v682, 0
        %v704 = vperm.slane %v683, 0
        %v705 = vperm.slane %v684, 0
        %v706 = vmul.f32 %v691, %v698
        %v707 = vmul.f32 %v691, %v699
        %v708 = vmul.f32 %v691, %v700
        %v709 = vmul.f32 %v691, %v701
        %v710 = vmul.f32 %v691, %v702
        %v711 = vmul.f32 %v691, %v703
        %v712 = vmul.f32 %v691, %v704
        %v713 = vmul.f32 %v691, %v705
        %v714 = vmul.f32 %v696, %v698
        %v715 = vmul.f32 %v696, %v699
        %v716 = vmul.f32 %v696, %v700
        %v717 = vmul.f32 %v696, %v701
        %v718 = vmul.f32 %v696, %v702
        %v719 = vmul.f32 %v696, %v703
        %v720 = vmul.f32 %v696, %v704
        %v721 = vmul.f32 %v696, %v705
        %v722 = vadd.f32 %v606, %v706
        %v723 = vadd.f32 %v607, %v707
        %v724 = vadd.f32 %v608, %v708
        %v725 = vadd.f32 %v609, %v709
        %v726 = vadd.f32 %v610, %v710
        %v727 = vadd.f32 %v611, %v711
        %v728 = vadd.f32 %v612, %v712
        %v729 = vadd.f32 %v613, %v713
        %v730 = vadd.f32 %v614, %v714
        %v731 = vadd.f32 %v615, %v715
        %v732 = vadd.f32 %v616, %v716
        %v733 = vadd.f32 %v617, %v717
        %v734 = vadd.f32 %v618, %v718
        %v735 = vadd.f32 %v619, %v719
        %v736 = vadd.f32 %v620, %v720
        %v737 = vadd.f32 %v621, %v721
        %s738 = scalar_lea.vmem %s2, 64
        %v739 = vld [vmem:[%s738] sm:$0xff]
        %v740 = vld [vmem:[%s738 + $0x8] sm:$0xf]
        %742 = vset.pattern.permute.xlu0 0
        %743 = vperm.xlu0 %742, %v739
        %v744 = vpop.permute.xlu0 %743
        %747 = vset.pattern.permute.xlu0 0
        %748 = vperm.xlu0 %747, %v740
        %v749 = vpop.permute.xlu0 %748
        %v759 = vmul.f32 %v744, %v272
        %v760 = vmul.f32 %v744, %v273
        %v761 = vmul.f32 %v744, %v274
        %v762 = vmul.f32 %v744, %v275
        %v763 = vmul.f32 %v744, %v276
        %v764 = vmul.f32 %v744, %v277
        %v765 = vmul.f32 %v744, %v278
        %v766 = vmul.f32 %v744, %v268
        %v767 = vmul.f32 %v749, %v272
        %v768 = vmul.f32 %v749, %v273
        %v769 = vmul.f32 %v749, %v274
        %v770 = vmul.f32 %v749, %v275
        %v771 = vmul.f32 %v749, %v276
        %v772 = vmul.f32 %v749, %v277
        %v773 = vmul.f32 %v749, %v278
        %v774 = vmul.f32 %v749, %v268
        %v775 = vadd.f32 %v722, %v759
        %v776 = vadd.f32 %v723, %v760
        %v777 = vadd.f32 %v724, %v761
        %v778 = vadd.f32 %v725, %v762
        %v779 = vadd.f32 %v726, %v763
        %v780 = vadd.f32 %v727, %v764
        %v781 = vadd.f32 %v728, %v765
        %v782 = vadd.f32 %v729, %v766
        %v783 = vadd.f32 %v730, %v767
        %v784 = vadd.f32 %v731, %v768
        %v785 = vadd.f32 %v732, %v769
        %v786 = vadd.f32 %v733, %v770
        %v787 = vadd.f32 %v734, %v771
        %v788 = vadd.f32 %v735, %v772
        %v789 = vadd.f32 %v736, %v773
        %v790 = vadd.f32 %v737, %v774
        %791 = vrot.lane.b32.xlu0 %v272, 127
        %v792 = vpop.permute.xlu0 %791
        %793 = vrot.lane.b32.xlu0 %v273, 127
        %v794 = vpop.permute.xlu0 %793
        %795 = vrot.lane.b32.xlu0 %v274, 127
        %v796 = vpop.permute.xlu0 %795
        %797 = vrot.lane.b32.xlu0 %v275, 127
        %v798 = vpop.permute.xlu0 %797
        %799 = vrot.lane.b32.xlu0 %v276, 127
        %v800 = vpop.permute.xlu0 %799
        %801 = vrot.lane.b32.xlu0 %v277, 127
        %v802 = vpop.permute.xlu0 %801
        %803 = vrot.lane.b32.xlu0 %v278, 127
        %v804 = vpop.permute.xlu0 %803
        %805 = vrot.lane.b32.xlu0 %v268, 127
        %v806 = vpop.permute.xlu0 %805
        %vm807 = vcmask 1039360
        %v808 = vsel %vm807, %v792, %v794
        %v809 = vsel %vm807, %v794, %v796
        %v810 = vsel %vm807, %v796, %v798
        %v811 = vsel %vm807, %v798, %v800
        %v812 = vsel %vm807, %v800, %v802
        %v813 = vsel %vm807, %v802, %v804
        %v814 = vsel %vm807, %v804, %v806
        %v824 = vsel %vm807, %v806, %v792
        %s825 = scalar_lea.vmem [#allocation2], 5
        %v826 = vld [vmem:[%s825] ss:$8 sm:$0xf]
        %v827 = vld [vmem:[%s825] ss:$8 sm:$0xf0]
        %v828 = vor.u32 %v826, %v827
        %v830 = vperm.slane %v828, 0
        %v831 = vperm.slane %v828, 1
        %v832 = vperm.slane %v828, 2
        %v833 = vperm.slane %v828, 3
        %v834 = vperm.slane %v828, 4
        %v835 = vperm.slane %v828, 5
        %v836 = vperm.slane %v828, 6
        %v837 = vperm.slane %v828, 7
        %v846 = vmul.f32 %v808, %v830
        %v847 = vmul.f32 %v809, %v831
        %v848 = vmul.f32 %v810, %v832
        %v849 = vmul.f32 %v811, %v833
        %v850 = vmul.f32 %v812, %v834
        %v851 = vmul.f32 %v813, %v835
        %v852 = vmul.f32 %v814, %v836
        %v853 = vmul.f32 %v824, %v837
        %s854 = scalar_lea.vmem %s2, 80
        %v855 = vld [vmem:[%s854] sm:$0xff]
        %v856 = vld [vmem:[%s854 + $0x8] sm:$0xf]
        %858 = vset.pattern.permute.xlu0 0
        %859 = vperm.xlu0 %858, %v855
        %v860 = vpop.permute.xlu0 %859
        %863 = vset.pattern.permute.xlu0 0
        %864 = vperm.xlu0 %863, %v856
        %v865 = vpop.permute.xlu0 %864
        %v867 = vperm.slane %v846, 0
        %v868 = vperm.slane %v847, 0
        %v869 = vperm.slane %v848, 0
        %v870 = vperm.slane %v849, 0
        %v871 = vperm.slane %v850, 0
        %v872 = vperm.slane %v851, 0
        %v873 = vperm.slane %v852, 0
        %v874 = vperm.slane %v853, 0
        %v875 = vmul.f32 %v860, %v867
        %v876 = vmul.f32 %v860, %v868
        %v877 = vmul.f32 %v860, %v869
        %v878 = vmul.f32 %v860, %v870
        %v879 = vmul.f32 %v860, %v871
        %v880 = vmul.f32 %v860, %v872
        %v881 = vmul.f32 %v860, %v873
        %v882 = vmul.f32 %v860, %v874
        %v883 = vmul.f32 %v865, %v867
        %v884 = vmul.f32 %v865, %v868
        %v885 = vmul.f32 %v865, %v869
        %v886 = vmul.f32 %v865, %v870
        %v887 = vmul.f32 %v865, %v871
        %v888 = vmul.f32 %v865, %v872
        %v889 = vmul.f32 %v865, %v873
        %v890 = vmul.f32 %v865, %v874
        %v891 = vadd.f32 %v775, %v875
        %v892 = vadd.f32 %v776, %v876
        %v893 = vadd.f32 %v777, %v877
        %v894 = vadd.f32 %v778, %v878
        %v895 = vadd.f32 %v779, %v879
        %v896 = vadd.f32 %v780, %v880
        %v897 = vadd.f32 %v781, %v881
        %v898 = vadd.f32 %v782, %v882
        %v899 = vadd.f32 %v783, %v883
        %v900 = vadd.f32 %v784, %v884
        %v901 = vadd.f32 %v785, %v885
        %v902 = vadd.f32 %v786, %v886
        %v903 = vadd.f32 %v787, %v887
        %v904 = vadd.f32 %v788, %v888
        %v905 = vadd.f32 %v789, %v889
        %v906 = vadd.f32 %v790, %v890
        %907 = vrot.lane.b32.xlu0 %v272, 97
        %v908 = vpop.permute.xlu0 %907
        %909 = vrot.lane.b32.xlu0 %v273, 97
        %v910 = vpop.permute.xlu0 %909
        %911 = vrot.lane.b32.xlu0 %v274, 97
        %v912 = vpop.permute.xlu0 %911
        %913 = vrot.lane.b32.xlu0 %v275, 97
        %v914 = vpop.permute.xlu0 %913
        %915 = vrot.lane.b32.xlu0 %v276, 97
        %v916 = vpop.permute.xlu0 %915
        %917 = vrot.lane.b32.xlu0 %v277, 97
        %v918 = vpop.permute.xlu0 %917
        %919 = vrot.lane.b32.xlu0 %v278, 97
        %v920 = vpop.permute.xlu0 %919
        %921 = vrot.lane.b32.xlu0 %v268, 97
        %v922 = vpop.permute.xlu0 %921
        %vm923 = vcmask 793600
        %v924 = vsel %vm923, %v908, %v910
        %v925 = vsel %vm923, %v910, %v912
        %v926 = vsel %vm923, %v912, %v914
        %v927 = vsel %vm923, %v914, %v916
        %v928 = vsel %vm923, %v916, %v918
        %v929 = vsel %vm923, %v918, %v920
        %v930 = vsel %vm923, %v920, %v922
        %v940 = vsel %vm923, %v922, %v908
        %s941 = scalar_lea.vmem [#allocation2], 6
        %v942 = vld [vmem:[%s941] ss:$8 sm:$0xf]
        %v943 = vld [vmem:[%s941] ss:$8 sm:$0xf0]
        %v944 = vor.u32 %v942, %v943
        %v946 = vperm.slane %v944, 0
        %v947 = vperm.slane %v944, 1
        %v948 = vperm.slane %v944, 2
        %v949 = vperm.slane %v944, 3
        %v950 = vperm.slane %v944, 4
        %v951 = vperm.slane %v944, 5
        %v952 = vperm.slane %v944, 6
        %v953 = vperm.slane %v944, 7
        %v962 = vmul.f32 %v924, %v946
        %v963 = vmul.f32 %v925, %v947
        %v964 = vmul.f32 %v926, %v948
        %v965 = vmul.f32 %v927, %v949
        %v966 = vmul.f32 %v928, %v950
        %v967 = vmul.f32 %v929, %v951
        %v968 = vmul.f32 %v930, %v952
        %v969 = vmul.f32 %v940, %v953
        %s970 = scalar_lea.vmem %s2, 96
        %v971 = vld [vmem:[%s970] sm:$0xff]
        %v972 = vld [vmem:[%s970 + $0x8] sm:$0xf]
        %974 = vset.pattern.permute.xlu0 0
        %975 = vperm.xlu0 %974, %v971
        %v976 = vpop.permute.xlu0 %975
        %979 = vset.pattern.permute.xlu0 0
        %980 = vperm.xlu0 %979, %v972
        %v981 = vpop.permute.xlu0 %980
        %v983 = vperm.slane %v962, 0
        %v984 = vperm.slane %v963, 0
        %v985 = vperm.slane %v964, 0
        %v986 = vperm.slane %v965, 0
        %v987 = vperm.slane %v966, 0
        %v988 = vperm.slane %v967, 0
        %v989 = vperm.slane %v968, 0
        %v990 = vperm.slane %v969, 0
        %v991 = vmul.f32 %v976, %v983
        %v992 = vmul.f32 %v976, %v984
        %v993 = vmul.f32 %v976, %v985
        %v994 = vmul.f32 %v976, %v986
        %v995 = vmul.f32 %v976, %v987
        %v996 = vmul.f32 %v976, %v988
        %v997 = vmul.f32 %v976, %v989
        %v998 = vmul.f32 %v976, %v990
        %v999 = vmul.f32 %v981, %v983
        %v1000 = vmul.f32 %v981, %v984
        %v1001 = vmul.f32 %v981, %v985
        %v1002 = vmul.f32 %v981, %v986
        %v1003 = vmul.f32 %v981, %v987
        %v1004 = vmul.f32 %v981, %v988
        %v1005 = vmul.f32 %v981, %v989
        %v1006 = vmul.f32 %v981, %v990
        %v1007 = vadd.f32 %v891, %v991
        %v1008 = vadd.f32 %v892, %v992
        %v1009 = vadd.f32 %v893, %v993
        %v1010 = vadd.f32 %v894, %v994
        %v1011 = vadd.f32 %v895, %v995
        %v1012 = vadd.f32 %v896, %v996
        %v1013 = vadd.f32 %v897, %v997
        %v1014 = vadd.f32 %v898, %v998
        %v1015 = vadd.f32 %v899, %v999
        %v1016 = vadd.f32 %v900, %v1000
        %v1017 = vadd.f32 %v901, %v1001
        %v1018 = vadd.f32 %v902, %v1002
        %v1019 = vadd.f32 %v903, %v1003
        %v1020 = vadd.f32 %v904, %v1004
        %v1021 = vadd.f32 %v905, %v1005
        %v1022 = vadd.f32 %v906, %v1006
        %1023 = vrot.lane.b32.xlu0 %v272, 96
        %v1024 = vpop.permute.xlu0 %1023
        %1025 = vrot.lane.b32.xlu0 %v273, 96
        %v1026 = vpop.permute.xlu0 %1025
        %1027 = vrot.lane.b32.xlu0 %v274, 96
        %v1028 = vpop.permute.xlu0 %1027
        %1029 = vrot.lane.b32.xlu0 %v275, 96
        %v1030 = vpop.permute.xlu0 %1029
        %1031 = vrot.lane.b32.xlu0 %v276, 96
        %v1032 = vpop.permute.xlu0 %1031
        %1033 = vrot.lane.b32.xlu0 %v277, 96
        %v1034 = vpop.permute.xlu0 %1033
        %1035 = vrot.lane.b32.xlu0 %v278, 96
        %v1036 = vpop.permute.xlu0 %1035
        %1037 = vrot.lane.b32.xlu0 %v268, 96
        %v1038 = vpop.permute.xlu0 %1037
        %vm1039 = vcmask 785408
        %v1040 = vsel %vm1039, %v1024, %v1026
        %v1041 = vsel %vm1039, %v1026, %v1028
        %v1042 = vsel %vm1039, %v1028, %v1030
        %v1043 = vsel %vm1039, %v1030, %v1032
        %v1044 = vsel %vm1039, %v1032, %v1034
        %v1045 = vsel %vm1039, %v1034, %v1036
        %v1046 = vsel %vm1039, %v1036, %v1038
        %v1056 = vsel %vm1039, %v1038, %v1024
        %s1057 = scalar_lea.vmem [#allocation2], 7
        %v1058 = vld [vmem:[%s1057] ss:$8 sm:$0xf]
        %v1059 = vld [vmem:[%s1057] ss:$8 sm:$0xf0]
        %v1060 = vor.u32 %v1058, %v1059
        %v1062 = vperm.slane %v1060, 0
        %v1063 = vperm.slane %v1060, 1
        %v1064 = vperm.slane %v1060, 2
        %v1065 = vperm.slane %v1060, 3
        %v1066 = vperm.slane %v1060, 4
        %v1067 = vperm.slane %v1060, 5
        %v1068 = vperm.slane %v1060, 6
        %v1069 = vperm.slane %v1060, 7
        %v1078 = vmul.f32 %v1040, %v1062
        %v1079 = vmul.f32 %v1041, %v1063
        %v1080 = vmul.f32 %v1042, %v1064
        %v1081 = vmul.f32 %v1043, %v1065
        %v1082 = vmul.f32 %v1044, %v1066
        %v1083 = vmul.f32 %v1045, %v1067
        %v1084 = vmul.f32 %v1046, %v1068
        %v1085 = vmul.f32 %v1056, %v1069
        %s1086 = scalar_lea.vmem %s2, 112
        %v1087 = vld [vmem:[%s1086] sm:$0xff]
        %v1088 = vld [vmem:[%s1086 + $0x8] sm:$0xf]
        %1090 = vset.pattern.permute.xlu0 0
        %1091 = vperm.xlu0 %1090, %v1087
        %v1092 = vpop.permute.xlu0 %1091
        %1095 = vset.pattern.permute.xlu0 0
        %1096 = vperm.xlu0 %1095, %v1088
        %v1097 = vpop.permute.xlu0 %1096
        %v1099 = vperm.slane %v1078, 0
        %v1100 = vperm.slane %v1079, 0
        %v1101 = vperm.slane %v1080, 0
        %v1102 = vperm.slane %v1081, 0
        %v1103 = vperm.slane %v1082, 0
        %v1104 = vperm.slane %v1083, 0
        %v1105 = vperm.slane %v1084, 0
        %v1106 = vperm.slane %v1085, 0
        %v1107 = vmul.f32 %v1092, %v1099
        %v1108 = vmul.f32 %v1092, %v1100
        %v1109 = vmul.f32 %v1092, %v1101
        %v1110 = vmul.f32 %v1092, %v1102
        %v1111 = vmul.f32 %v1092, %v1103
        %v1112 = vmul.f32 %v1092, %v1104
        %v1113 = vmul.f32 %v1092, %v1105
        %v1114 = vmul.f32 %v1092, %v1106
        %v1115 = vmul.f32 %v1097, %v1099
        %v1116 = vmul.f32 %v1097, %v1100
        %v1117 = vmul.f32 %v1097, %v1101
        %v1118 = vmul.f32 %v1097, %v1102
        %v1119 = vmul.f32 %v1097, %v1103
        %v1120 = vmul.f32 %v1097, %v1104
        %v1121 = vmul.f32 %v1097, %v1105
        %v1122 = vmul.f32 %v1097, %v1106
        %v1123 = vadd.f32 %v1007, %v1107
        %v1124 = vadd.f32 %v1008, %v1108
        %v1125 = vadd.f32 %v1009, %v1109
        %v1126 = vadd.f32 %v1010, %v1110
        %v1127 = vadd.f32 %v1011, %v1111
        %v1128 = vadd.f32 %v1012, %v1112
        %v1129 = vadd.f32 %v1013, %v1113
        %v1130 = vadd.f32 %v1014, %v1114
        %v1131 = vadd.f32 %v1015, %v1115
        %v1132 = vadd.f32 %v1016, %v1116
        %v1133 = vadd.f32 %v1017, %v1117
        %v1134 = vadd.f32 %v1018, %v1118
        %v1135 = vadd.f32 %v1019, %v1119
        %v1136 = vadd.f32 %v1020, %v1120
        %v1137 = vadd.f32 %v1021, %v1121
        %v1138 = vadd.f32 %v1022, %v1122
        %1139 = vrot.lane.b32.xlu0 %v272, 95
        %v1140 = vpop.permute.xlu0 %1139
        %1141 = vrot.lane.b32.xlu0 %v273, 95
        %v1142 = vpop.permute.xlu0 %1141
        %1143 = vrot.lane.b32.xlu0 %v274, 95
        %v1144 = vpop.permute.xlu0 %1143
        %1145 = vrot.lane.b32.xlu0 %v275, 95
        %v1146 = vpop.permute.xlu0 %1145
        %1147 = vrot.lane.b32.xlu0 %v276, 95
        %v1148 = vpop.permute.xlu0 %1147
        %1149 = vrot.lane.b32.xlu0 %v277, 95
        %v1150 = vpop.permute.xlu0 %1149
        %1151 = vrot.lane.b32.xlu0 %v278, 95
        %v1152 = vpop.permute.xlu0 %1151
        %1153 = vrot.lane.b32.xlu0 %v268, 95
        %v1154 = vpop.permute.xlu0 %1153
        %vm1155 = vcmask 777216
        %v1156 = vsel %vm1155, %v1140, %v1142
        %v1157 = vsel %vm1155, %v1142, %v1144
        %v1158 = vsel %vm1155, %v1144, %v1146
        %v1159 = vsel %vm1155, %v1146, %v1148
        %v1160 = vsel %vm1155, %v1148, %v1150
        %v1161 = vsel %vm1155, %v1150, %v1152
        %v1162 = vsel %vm1155, %v1152, %v1154
        %v1172 = vsel %vm1155, %v1154, %v1140
        %s1173 = scalar_lea.vmem [#allocation2], 64
        %v1174 = vld [vmem:[%s1173] ss:$8 sm:$0xf]
        %v1175 = vld [vmem:[%s1173] ss:$8 sm:$0xf0]
        %v1176 = vor.u32 %v1174, %v1175
        %v1178 = vperm.slane %v1176, 0
        %v1179 = vperm.slane %v1176, 1
        %v1180 = vperm.slane %v1176, 2
        %v1181 = vperm.slane %v1176, 3
        %v1182 = vperm.slane %v1176, 4
        %v1183 = vperm.slane %v1176, 5
        %v1184 = vperm.slane %v1176, 6
        %v1185 = vperm.slane %v1176, 7
        %v1194 = vmul.f32 %v1156, %v1178
        %v1195 = vmul.f32 %v1157, %v1179
        %v1196 = vmul.f32 %v1158, %v1180
        %v1197 = vmul.f32 %v1159, %v1181
        %v1198 = vmul.f32 %v1160, %v1182
        %v1199 = vmul.f32 %v1161, %v1183
        %v1200 = vmul.f32 %v1162, %v1184
        %v1201 = vmul.f32 %v1172, %v1185
        %s1202 = scalar_lea.vmem %s2, 128
        %v1203 = vld [vmem:[%s1202] sm:$0xff]
        %v1204 = vld [vmem:[%s1202 + $0x8] sm:$0xf]
        %1206 = vset.pattern.permute.xlu0 0
        %1207 = vperm.xlu0 %1206, %v1203
        %v1208 = vpop.permute.xlu0 %1207
        %1211 = vset.pattern.permute.xlu0 0
        %1212 = vperm.xlu0 %1211, %v1204
        %v1213 = vpop.permute.xlu0 %1212
        %v1215 = vperm.slane %v1194, 0
        %v1216 = vperm.slane %v1195, 0
        %v1217 = vperm.slane %v1196, 0
        %v1218 = vperm.slane %v1197, 0
        %v1219 = vperm.slane %v1198, 0
        %v1220 = vperm.slane %v1199, 0
        %v1221 = vperm.slane %v1200, 0
        %v1222 = vperm.slane %v1201, 0
        %v1223 = vmul.f32 %v1208, %v1215
        %v1224 = vmul.f32 %v1208, %v1216
        %v1225 = vmul.f32 %v1208, %v1217
        %v1226 = vmul.f32 %v1208, %v1218
        %v1227 = vmul.f32 %v1208, %v1219
        %v1228 = vmul.f32 %v1208, %v1220
        %v1229 = vmul.f32 %v1208, %v1221
        %v1230 = vmul.f32 %v1208, %v1222
        %v1231 = vmul.f32 %v1213, %v1215
        %v1232 = vmul.f32 %v1213, %v1216
        %v1233 = vmul.f32 %v1213, %v1217
        %v1234 = vmul.f32 %v1213, %v1218
        %v1235 = vmul.f32 %v1213, %v1219
        %v1236 = vmul.f32 %v1213, %v1220
        %v1237 = vmul.f32 %v1213, %v1221
        %v1238 = vmul.f32 %v1213, %v1222
        %v1239 = vadd.f32 %v1123, %v1223
        %v1240 = vadd.f32 %v1124, %v1224
        %v1241 = vadd.f32 %v1125, %v1225
        %v1242 = vadd.f32 %v1126, %v1226
        %v1243 = vadd.f32 %v1127, %v1227
        %v1244 = vadd.f32 %v1128, %v1228
        %v1245 = vadd.f32 %v1129, %v1229
        %v1246 = vadd.f32 %v1130, %v1230
        %v1247 = vadd.f32 %v1131, %v1231
        %v1248 = vadd.f32 %v1132, %v1232
        %v1249 = vadd.f32 %v1133, %v1233
        %v1250 = vadd.f32 %v1134, %v1234
        %v1251 = vadd.f32 %v1135, %v1235
        %v1252 = vadd.f32 %v1136, %v1236
        %v1253 = vadd.f32 %v1137, %v1237
        %v1254 = vadd.f32 %v1138, %v1238
        %v1255 = vld [vmem:[%s3] sm:$0xff]
        %v1256 = vld [vmem:[%s3 + $0x8] sm:$0xf]
        %1258 = vset.pattern.permute.xlu0 0
        %1259 = vperm.xlu0 %1258, %v1255
        %v1260 = vpop.permute.xlu0 %1259
        %1263 = vset.pattern.permute.xlu0 0
        %1264 = vperm.xlu0 %1263, %v1256
        %v1265 = vpop.permute.xlu0 %1264
        %v1267 = vadd.f32 %v1239, %v1260
        %v1268 = vadd.f32 %v1240, %v1260
        %v1269 = vadd.f32 %v1241, %v1260
        %v1270 = vadd.f32 %v1242, %v1260
        %v1271 = vadd.f32 %v1243, %v1260
        %v1272 = vadd.f32 %v1244, %v1260
        %v1273 = vadd.f32 %v1245, %v1260
        %v1274 = vadd.f32 %v1246, %v1260
        %v1275 = vadd.f32 %v1247, %v1265
        %v1276 = vadd.f32 %v1248, %v1265
        %v1277 = vadd.f32 %v1249, %v1265
        %v1278 = vadd.f32 %v1250, %v1265
        %v1279 = vadd.f32 %v1251, %v1265
        %v1280 = vadd.f32 %v1252, %v1265
        %v1281 = vadd.f32 %v1253, %v1265
        %v1282 = vadd.f32 %v1254, %v1265
        %v1283 = vadd.f32 %v1267, %v1268
        %v1284 = vadd.f32 %v1283, %v1269
        %v1285 = vadd.f32 %v1284, %v1270
        %v1286 = vadd.f32 %v1285, %v1271
        %v1287 = vadd.f32 %v1286, %v1272
        %v1288 = vadd.f32 %v1287, %v1273
        %v1289 = vadd.f32 %v1288, %v1274
        %1290 = vadd.xlane.f32.xlu0 %v1289
        %v1291 = vpop.xlane.xlu0 %1290
        %vm1292 = vcmask 1043456
        %v1293 = vsel %vm1292, %v1275, 0.0
        %v1294 = vsel %vm1292, %v1276, 0.0
        %v1295 = vadd.f32 %v1293, %v1294
        %v1296 = vsel %vm1292, %v1277, 0.0
        %v1297 = vadd.f32 %v1295, %v1296
        %v1298 = vsel %vm1292, %v1278, 0.0
        %v1299 = vadd.f32 %v1297, %v1298
        %v1300 = vsel %vm1292, %v1279, 0.0
        %v1301 = vadd.f32 %v1299, %v1300
        %v1302 = vsel %vm1292, %v1280, 0.0
        %v1303 = vadd.f32 %v1301, %v1302
        %v1304 = vsel %vm1292, %v1281, 0.0
        %v1305 = vadd.f32 %v1303, %v1304
        %v1306 = vsel %vm1292, %v1282, 0.0
        %v1307 = vadd.f32 %v1305, %v1306
        %1308 = vadd.xlane.f32.xlu0 %v1307
        %v1309 = vpop.xlane.xlu0 %1308
        %v1310 = vrcp.pop 1024.0
        %v1311 = vmul.f32 1024.0, %v1310
        %v1312 = vsub.f32 1.0, %v1311
        %v1313 = vmul.f32 %v1310, %v1312
        %v1314 = vadd.f32 %v1310, %v1313
        %vm1315 = vweird.f32 %v1310
        %v1316 = vsel %vm1315, %v1310, %v1314
        %v1317 = vmul.f32 %v1291, %v1316
        %v1318 = vmul.f32 %v1309, %v1316
        %v1319 = vsub.f32 %v1267, %v1317
        %v1320 = vsub.f32 %v1268, %v1317
        %v1321 = vsub.f32 %v1269, %v1317
        %v1322 = vsub.f32 %v1270, %v1317
        %v1323 = vsub.f32 %v1271, %v1317
        %v1324 = vsub.f32 %v1272, %v1317
        %v1325 = vsub.f32 %v1273, %v1317
        %v1326 = vsub.f32 %v1274, %v1317
        %v1327 = vsub.f32 %v1275, %v1318
        %v1328 = vsub.f32 %v1276, %v1318
        %v1329 = vsub.f32 %v1277, %v1318
        %v1330 = vsub.f32 %v1278, %v1318
        %v1331 = vsub.f32 %v1279, %v1318
        %v1332 = vsub.f32 %v1280, %v1318
        %v1333 = vsub.f32 %v1281, %v1318
        %v1334 = vsub.f32 %v1282, %v1318
        %v1335 = vmul.f32 %v1319, %v1319
        %v1336 = vmul.f32 %v1320, %v1320
        %v1337 = vmul.f32 %v1321, %v1321
        %v1338 = vmul.f32 %v1322, %v1322
        %v1339 = vmul.f32 %v1323, %v1323
        %v1340 = vmul.f32 %v1324, %v1324
        %v1341 = vmul.f32 %v1325, %v1325
        %v1342 = vmul.f32 %v1326, %v1326
        %v1343 = vmul.f32 %v1327, %v1327
        %v1344 = vmul.f32 %v1328, %v1328
        %v1345 = vmul.f32 %v1329, %v1329
        %v1346 = vmul.f32 %v1330, %v1330
        %v1347 = vmul.f32 %v1331, %v1331
        %v1348 = vmul.f32 %v1332, %v1332
        %v1349 = vmul.f32 %v1333, %v1333
        %v1350 = vmul.f32 %v1334, %v1334
        %v1351 = vadd.f32 %v1335, %v1336
        %v1352 = vadd.f32 %v1351, %v1337
        %v1353 = vadd.f32 %v1352, %v1338
        %v1354 = vadd.f32 %v1353, %v1339
        %v1355 = vadd.f32 %v1354, %v1340
        %v1356 = vadd.f32 %v1355, %v1341
        %v1357 = vadd.f32 %v1356, %v1342
        %1358 = vadd.xlane.f32.xlu0 %v1357
        %v1359 = vpop.xlane.xlu0 %1358
        %v1360 = vsel %vm1292, %v1343, 0.0
        %v1361 = vsel %vm1292, %v1344, 0.0
        %v1362 = vadd.f32 %v1360, %v1361
        %v1363 = vsel %vm1292, %v1345, 0.0
        %v1364 = vadd.f32 %v1362, %v1363
        %v1365 = vsel %vm1292, %v1346, 0.0
        %v1366 = vadd.f32 %v1364, %v1365
        %v1367 = vsel %vm1292, %v1347, 0.0
        %v1368 = vadd.f32 %v1366, %v1367
        %v1369 = vsel %vm1292, %v1348, 0.0
        %v1370 = vadd.f32 %v1368, %v1369
        %v1371 = vsel %vm1292, %v1349, 0.0
        %v1372 = vadd.f32 %v1370, %v1371
        %v1373 = vsel %vm1292, %v1350, 0.0
        %v1374 = vadd.f32 %v1372, %v1373
        %1375 = vadd.xlane.f32.xlu0 %v1374
        %v1376 = vpop.xlane.xlu0 %1375
        %v1377 = vmul.f32 %v1359, %v1316
        %v1378 = vmul.f32 %v1376, %v1316
        %v1379 = vadd.f32 %v1377, 1e-05
        %v1380 = vadd.f32 %v1378, 1e-05
        %v1381 = vrsqrt.pop %v1379
        %v1382 = vmul.f32 %v1381, %v1379
        %v1383 = vmul.f32 %v1382, %v1381
        %v1384 = vmul.f32 0.5, %v1383
        %v1385 = vsub.f32 1.5, %v1384
        %v1386 = vmul.f32 %v1381, %v1385
        %vm1387 = vweird.f32 %v1379
        %vm1388 = vweird.f32 %v1381
        %vm1389 = vmor %vm1387, %vm1388
        %v1390 = vsel %vm1389, %v1381, %v1386
        %v1391 = vrsqrt.pop %v1380
        %v1392 = vmul.f32 %v1391, %v1380
        %v1393 = vmul.f32 %v1392, %v1391
        %v1394 = vmul.f32 0.5, %v1393
        %v1395 = vsub.f32 1.5, %v1394
        %v1396 = vmul.f32 %v1391, %v1395
        %vm1397 = vweird.f32 %v1380
        %vm1398 = vweird.f32 %v1391
        %vm1399 = vmor %vm1397, %vm1398
        %v1400 = vsel %vm1399, %v1391, %v1396
        %v1401 = vmul.f32 %v1319, %v1390
        %v1402 = vmul.f32 %v1320, %v1390
        %v1403 = vmul.f32 %v1321, %v1390
        %v1404 = vmul.f32 %v1322, %v1390
        %v1405 = vmul.f32 %v1323, %v1390
        %v1406 = vmul.f32 %v1324, %v1390
        %v1407 = vmul.f32 %v1325, %v1390
        %v1408 = vmul.f32 %v1326, %v1390
        %v1409 = vmul.f32 %v1327, %v1400
        %v1410 = vmul.f32 %v1328, %v1400
        %v1411 = vmul.f32 %v1329, %v1400
        %v1412 = vmul.f32 %v1330, %v1400
        %v1413 = vmul.f32 %v1331, %v1400
        %v1414 = vmul.f32 %v1332, %v1400
        %v1415 = vmul.f32 %v1333, %v1400
        %v1416 = vmul.f32 %v1334, %v1400
        %v1417 = vmax.f32 %v1401, 0.0
        %v1418 = vmax.f32 %v1402, 0.0
        %v1419 = vmax.f32 %v1403, 0.0
        %v1420 = vmax.f32 %v1404, 0.0
        %v1421 = vmax.f32 %v1405, 0.0
        %v1422 = vmax.f32 %v1406, 0.0
        %v1423 = vmax.f32 %v1407, 0.0
        %v1424 = vmax.f32 %v1408, 0.0
        %v1425 = vmax.f32 %v1409, 0.0
        %v1426 = vmax.f32 %v1410, 0.0
        %v1427 = vmax.f32 %v1411, 0.0
        %v1428 = vmax.f32 %v1412, 0.0
        %v1429 = vmax.f32 %v1413, 0.0
        %v1430 = vmax.f32 %v1414, 0.0
        %v1431 = vmax.f32 %v1415, 0.0
        %v1432 = vmax.f32 %v1416, 0.0
        %1435 = vrot.lane.b32.xlu0 %v1424, 33
        %v1436 = vpop.permute.xlu0 %1435
        %1437 = vrot.lane.b32.xlu0 %v1432, 33
        %v1438 = vpop.permute.xlu0 %1437
        %1455 = vrot.lane.b32.xlu0 %v1417, 33
        %v1456 = vpop.permute.xlu0 %1455
        %1457 = vrot.lane.b32.xlu0 %v1418, 33
        %v1458 = vpop.permute.xlu0 %1457
        %1459 = vrot.lane.b32.xlu0 %v1419, 33
        %v1460 = vpop.permute.xlu0 %1459
        %1461 = vrot.lane.b32.xlu0 %v1420, 33
        %v1462 = vpop.permute.xlu0 %1461
        %1463 = vrot.lane.b32.xlu0 %v1421, 33
        %v1464 = vpop.permute.xlu0 %1463
        %1465 = vrot.lane.b32.xlu0 %v1422, 33
        %v1466 = vpop.permute.xlu0 %1465
        %1467 = vrot.lane.b32.xlu0 %v1423, 33
        %v1468 = vpop.permute.xlu0 %1467
        %1469 = vrot.lane.b32.xlu0 %v1425, 33
        %v1470 = vpop.permute.xlu0 %1469
        %1471 = vrot.lane.b32.xlu0 %v1426, 33
        %v1472 = vpop.permute.xlu0 %1471
        %1473 = vrot.lane.b32.xlu0 %v1427, 33
        %v1474 = vpop.permute.xlu0 %1473
        %1475 = vrot.lane.b32.xlu0 %v1428, 33
        %v1476 = vpop.permute.xlu0 %1475
        %1477 = vrot.lane.b32.xlu0 %v1429, 33
        %v1478 = vpop.permute.xlu0 %1477
        %1479 = vrot.lane.b32.xlu0 %v1430, 33
        %v1480 = vpop.permute.xlu0 %1479
        %1481 = vrot.lane.b32.xlu0 %v1431, 33
        %v1482 = vpop.permute.xlu0 %1481
        %v1483 = vsel %vm293, %v1456, %v1458
        %v1484 = vsel %vm293, %v1458, %v1460
        %v1485 = vsel %vm293, %v1460, %v1462
        %v1486 = vsel %vm293, %v1462, %v1464
        %v1487 = vsel %vm293, %v1464, %v1466
        %v1488 = vsel %vm293, %v1466, %v1468
        %v1489 = vsel %vm293, %v1468, %v1436
        %v1490 = vsel %vm293, %v1470, %v1472
        %v1491 = vsel %vm293, %v1472, %v1474
        %v1492 = vsel %vm293, %v1474, %v1476
        %v1493 = vsel %vm293, %v1476, %v1478
        %v1494 = vsel %vm293, %v1478, %v1480
        %v1495 = vsel %vm293, %v1480, %v1482
        %v1496 = vsel %vm293, %v1482, %v1438
        %v1513 = vsel %vm293, %v1436, %v1456
        %v1514 = vsel %vm293, %v1438, %v1470
        %v1515 = vmul.f32 %v1513, %v314
        %v1516 = vmul.f32 %v1483, %v315
        %v1517 = vmul.f32 %v1484, %v316
        %v1518 = vmul.f32 %v1485, %v317
        %v1519 = vmul.f32 %v1486, %v318
        %v1520 = vmul.f32 %v1487, %v319
        %v1521 = vmul.f32 %v1488, %v320
        %v1522 = vmul.f32 %v1489, %v321
        %v1523 = vmul.f32 %v1514, %v314
        %v1524 = vmul.f32 %v1490, %v315
        %v1525 = vmul.f32 %v1491, %v316
        %v1526 = vmul.f32 %v1492, %v317
        %v1527 = vmul.f32 %v1493, %v318
        %v1528 = vmul.f32 %v1494, %v319
        %v1529 = vmul.f32 %v1495, %v320
        %v1530 = vmul.f32 %v1496, %v321
        %v1531 = vld [vmem:[%s4] sm:$0xff]
        %v1532 = vld [vmem:[%s4 + $0x8] sm:$0xf]
        %1533 = vrot.lane.b32.xlu0 %v1424, 32
        %v1534 = vpop.permute.xlu0 %1533
        %1535 = vrot.lane.b32.xlu0 %v1432, 32
        %v1536 = vpop.permute.xlu0 %1535
        %1539 = vrot.lane.b32.xlu0 %v1417, 32
        %v1540 = vpop.permute.xlu0 %1539
        %1541 = vrot.lane.b32.xlu0 %v1418, 32
        %v1542 = vpop.permute.xlu0 %1541
        %1543 = vrot.lane.b32.xlu0 %v1419, 32
        %v1544 = vpop.permute.xlu0 %1543
        %1545 = vrot.lane.b32.xlu0 %v1420, 32
        %v1546 = vpop.permute.xlu0 %1545
        %1547 = vrot.lane.b32.xlu0 %v1421, 32
        %v1548 = vpop.permute.xlu0 %1547
        %1549 = vrot.lane.b32.xlu0 %v1422, 32
        %v1550 = vpop.permute.xlu0 %1549
        %1551 = vrot.lane.b32.xlu0 %v1423, 32
        %v1552 = vpop.permute.xlu0 %1551
        %1553 = vrot.lane.b32.xlu0 %v1425, 32
        %v1554 = vpop.permute.xlu0 %1553
        %1555 = vrot.lane.b32.xlu0 %v1426, 32
        %v1556 = vpop.permute.xlu0 %1555
        %1557 = vrot.lane.b32.xlu0 %v1427, 32
        %v1558 = vpop.permute.xlu0 %1557
        %1559 = vrot.lane.b32.xlu0 %v1428, 32
        %v1560 = vpop.permute.xlu0 %1559
        %1561 = vrot.lane.b32.xlu0 %v1429, 32
        %v1562 = vpop.permute.xlu0 %1561
        %1563 = vrot.lane.b32.xlu0 %v1430, 32
        %v1564 = vpop.permute.xlu0 %1563
        %1565 = vrot.lane.b32.xlu0 %v1431, 32
        %v1566 = vpop.permute.xlu0 %1565
        %v1567 = vsel %vm407, %v1540, %v1542
        %v1568 = vsel %vm407, %v1542, %v1544
        %v1569 = vsel %vm407, %v1544, %v1546
        %v1570 = vsel %vm407, %v1546, %v1548
        %v1571 = vsel %vm407, %v1548, %v1550
        %v1572 = vsel %vm407, %v1550, %v1552
        %v1573 = vsel %vm407, %v1552, %v1534
        %v1574 = vsel %vm407, %v1554, %v1556
        %v1575 = vsel %vm407, %v1556, %v1558
        %v1576 = vsel %vm407, %v1558, %v1560
        %v1577 = vsel %vm407, %v1560, %v1562
        %v1578 = vsel %vm407, %v1562, %v1564
        %v1579 = vsel %vm407, %v1564, %v1566
        %v1580 = vsel %vm407, %v1566, %v1536
        %v1597 = vsel %vm407, %v1534, %v1540
        %v1598 = vsel %vm407, %v1536, %v1554
        %v1599 = vmul.f32 %v1597, %v429
        %v1600 = vmul.f32 %v1567, %v430
        %v1601 = vmul.f32 %v1568, %v431
        %v1602 = vmul.f32 %v1569, %v432
        %v1603 = vmul.f32 %v1570, %v433
        %v1604 = vmul.f32 %v1571, %v434
        %v1605 = vmul.f32 %v1572, %v435
        %v1606 = vmul.f32 %v1573, %v436
        %v1607 = vmul.f32 %v1598, %v429
        %v1608 = vmul.f32 %v1574, %v430
        %v1609 = vmul.f32 %v1575, %v431
        %v1610 = vmul.f32 %v1576, %v432
        %v1611 = vmul.f32 %v1577, %v433
        %v1612 = vmul.f32 %v1578, %v434
        %v1613 = vmul.f32 %v1579, %v435
        %v1614 = vmul.f32 %v1580, %v436
        %s1615 = scalar_lea.vmem %s4, 16
        %v1616 = vld [vmem:[%s1615] sm:$0xff]
        %v1617 = vld [vmem:[%s1615 + $0x8] sm:$0xf]
        %vm1618 = vcmask 97280
        %v1620 = vsel %vm1618, %v1616, 0
        %v1623 = vsel %vm1618, %v1617, 0
        %v1626 = vsel %vm1292, %v1607, 0
        %v1629 = vsel %vm1292, %v1608, 0
        %v1632 = vsel %vm1292, %v1609, 0
        %v1635 = vsel %vm1292, %v1610, 0
        %v1638 = vsel %vm1292, %v1611, 0
        %v1641 = vsel %vm1292, %v1612, 0
        %v1644 = vsel %vm1292, %v1613, 0
        %v1647 = vsel %vm1292, %v1614, 0
        %1649 = vmatpush.msra.mxu0 0.0
        %1650 = vmatpush.msra.mxu0 0.0
        %1651 = vmatpush.msra.mxu0 0.0
        %1652 = vmatpush.msra.mxu0 0.0
        %1653 = vmatpush.msra.mxu0 0.0
        %1654 = vmatpush.msra.mxu0 0.0
        %1655 = vmatpush.msra.mxu0 0.0
        %1656 = vmatpush.msra.mxu0 0.0
        %1657 = vmatpush.msra.mxu0 0.0
        %1658 = vmatpush.msra.mxu0 0.0
        %1659 = vmatpush.msra.mxu0 0.0
        %1660 = vmatpush.msra.mxu0 0.0
        %1661 = vmatpush.msra.mxu0 0.0
        %1662 = vmatpush.msra.mxu0 0.0
        %1663 = vmatpush.msra.mxu0 %v1626
        %1664 = vmatpush.msra.mxu0 %v1599
        %1665 = vmatmul.f32.gmra.mxu0 %v1620
        %v1666 = vpop.f32.mrf.mxu0
        %v1667 = vadd.f32 0.0, %v1666
        %1668 = vmatmul.f32.gmra.mxu0 %v1623
        %v1669 = vpop.f32.mrf.mxu0
        %v1670 = vadd.f32 0.0, %v1669
        %1671 = vdwg.mxu0
        %1672 = vmatpush.msra.mxu0 0.0
        %1673 = vmatpush.msra.mxu0 0.0
        %1674 = vmatpush.msra.mxu0 0.0
        %1675 = vmatpush.msra.mxu0 0.0
        %1676 = vmatpush.msra.mxu0 0.0
        %1677 = vmatpush.msra.mxu0 0.0
        %1678 = vmatpush.msra.mxu0 0.0
        %1679 = vmatpush.msra.mxu0 0.0
        %1680 = vmatpush.msra.mxu0 0.0
        %1681 = vmatpush.msra.mxu0 0.0
        %1682 = vmatpush.msra.mxu0 0.0
        %1683 = vmatpush.msra.mxu0 0.0
        %1684 = vmatpush.msra.mxu0 0.0
        %1685 = vmatpush.msra.mxu0 0.0
        %1686 = vmatpush.msra.mxu0 %v1629
        %1687 = vmatpush.msra.mxu0 %v1600
        %1688 = vmatmul.f32.gmra.mxu0 %v1620
        %v1689 = vpop.f32.mrf.mxu0
        %v1690 = vadd.f32 0.0, %v1689
        %1691 = vmatmul.f32.gmra.mxu0 %v1623
        %v1692 = vpop.f32.mrf.mxu0
        %v1693 = vadd.f32 0.0, %v1692
        %1694 = vdwg.mxu0
        %1695 = vmatpush.msra.mxu0 0.0
        %1696 = vmatpush.msra.mxu0 0.0
        %1697 = vmatpush.msra.mxu0 0.0
        %1698 = vmatpush.msra.mxu0 0.0
        %1699 = vmatpush.msra.mxu0 0.0
        %1700 = vmatpush.msra.mxu0 0.0
        %1701 = vmatpush.msra.mxu0 0.0
        %1702 = vmatpush.msra.mxu0 0.0
        %1703 = vmatpush.msra.mxu0 0.0
        %1704 = vmatpush.msra.mxu0 0.0
        %1705 = vmatpush.msra.mxu0 0.0
        %1706 = vmatpush.msra.mxu0 0.0
        %1707 = vmatpush.msra.mxu0 0.0
        %1708 = vmatpush.msra.mxu0 0.0
        %1709 = vmatpush.msra.mxu0 %v1632
        %1710 = vmatpush.msra.mxu0 %v1601
        %1711 = vmatmul.f32.gmra.mxu0 %v1620
        %v1712 = vpop.f32.mrf.mxu0
        %v1713 = vadd.f32 0.0, %v1712
        %1714 = vmatmul.f32.gmra.mxu0 %v1623
        %v1715 = vpop.f32.mrf.mxu0
        %v1716 = vadd.f32 0.0, %v1715
        %1717 = vdwg.mxu0
        %1718 = vmatpush.msra.mxu0 0.0
        %1719 = vmatpush.msra.mxu0 0.0
        %1720 = vmatpush.msra.mxu0 0.0
        %1721 = vmatpush.msra.mxu0 0.0
        %1722 = vmatpush.msra.mxu0 0.0
        %1723 = vmatpush.msra.mxu0 0.0
        %1724 = vmatpush.msra.mxu0 0.0
        %1725 = vmatpush.msra.mxu0 0.0
        %1726 = vmatpush.msra.mxu0 0.0
        %1727 = vmatpush.msra.mxu0 0.0
        %1728 = vmatpush.msra.mxu0 0.0
        %1729 = vmatpush.msra.mxu0 0.0
        %1730 = vmatpush.msra.mxu0 0.0
        %1731 = vmatpush.msra.mxu0 0.0
        %1732 = vmatpush.msra.mxu0 %v1635
        %1733 = vmatpush.msra.mxu0 %v1602
        %1734 = vmatmul.f32.gmra.mxu0 %v1620
        %v1735 = vpop.f32.mrf.mxu0
        %v1736 = vadd.f32 0.0, %v1735
        %1737 = vmatmul.f32.gmra.mxu0 %v1623
        %v1738 = vpop.f32.mrf.mxu0
        %v1739 = vadd.f32 0.0, %v1738
        %1740 = vdwg.mxu0
        %1741 = vmatpush.msra.mxu0 0.0
        %1742 = vmatpush.msra.mxu0 0.0
        %1743 = vmatpush.msra.mxu0 0.0
        %1744 = vmatpush.msra.mxu0 0.0
        %1745 = vmatpush.msra.mxu0 0.0
        %1746 = vmatpush.msra.mxu0 0.0
        %1747 = vmatpush.msra.mxu0 0.0
        %1748 = vmatpush.msra.mxu0 0.0
        %1749 = vmatpush.msra.mxu0 0.0
        %1750 = vmatpush.msra.mxu0 0.0
        %1751 = vmatpush.msra.mxu0 0.0
        %1752 = vmatpush.msra.mxu0 0.0
        %1753 = vmatpush.msra.mxu0 0.0
        %1754 = vmatpush.msra.mxu0 0.0
        %1755 = vmatpush.msra.mxu0 %v1638
        %1756 = vmatpush.msra.mxu0 %v1603
        %1757 = vmatmul.f32.gmra.mxu0 %v1620
        %v1758 = vpop.f32.mrf.mxu0
        %v1759 = vadd.f32 0.0, %v1758
        %1760 = vmatmul.f32.gmra.mxu0 %v1623
        %v1761 = vpop.f32.mrf.mxu0
        %v1762 = vadd.f32 0.0, %v1761
        %1763 = vdwg.mxu0
        %1764 = vmatpush.msra.mxu0 0.0
        %1765 = vmatpush.msra.mxu0 0.0
        %1766 = vmatpush.msra.mxu0 0.0
        %1767 = vmatpush.msra.mxu0 0.0
        %1768 = vmatpush.msra.mxu0 0.0
        %1769 = vmatpush.msra.mxu0 0.0
        %1770 = vmatpush.msra.mxu0 0.0
        %1771 = vmatpush.msra.mxu0 0.0
        %1772 = vmatpush.msra.mxu0 0.0
        %1773 = vmatpush.msra.mxu0 0.0
        %1774 = vmatpush.msra.mxu0 0.0
        %1775 = vmatpush.msra.mxu0 0.0
        %1776 = vmatpush.msra.mxu0 0.0
        %1777 = vmatpush.msra.mxu0 0.0
        %1778 = vmatpush.msra.mxu0 %v1641
        %1779 = vmatpush.msra.mxu0 %v1604
        %1780 = vmatmul.f32.gmra.mxu0 %v1620
        %v1781 = vpop.f32.mrf.mxu0
        %v1782 = vadd.f32 0.0, %v1781
        %1783 = vmatmul.f32.gmra.mxu0 %v1623
        %v1784 = vpop.f32.mrf.mxu0
        %v1785 = vadd.f32 0.0, %v1784
        %1786 = vdwg.mxu0
        %1787 = vmatpush.msra.mxu0 0.0
        %1788 = vmatpush.msra.mxu0 0.0
        %1789 = vmatpush.msra.mxu0 0.0
        %1790 = vmatpush.msra.mxu0 0.0
        %1791 = vmatpush.msra.mxu0 0.0
        %1792 = vmatpush.msra.mxu0 0.0
        %1793 = vmatpush.msra.mxu0 0.0
        %1794 = vmatpush.msra.mxu0 0.0
        %1795 = vmatpush.msra.mxu0 0.0
        %1796 = vmatpush.msra.mxu0 0.0
        %1797 = vmatpush.msra.mxu0 0.0
        %1798 = vmatpush.msra.mxu0 0.0
        %1799 = vmatpush.msra.mxu0 0.0
        %1800 = vmatpush.msra.mxu0 0.0
        %1801 = vmatpush.msra.mxu0 %v1644
        %1802 = vmatpush.msra.mxu0 %v1605
        %1803 = vmatmul.f32.gmra.mxu0 %v1620
        %v1804 = vpop.f32.mrf.mxu0
        %v1805 = vadd.f32 0.0, %v1804
        %1806 = vmatmul.f32.gmra.mxu0 %v1623
        %v1807 = vpop.f32.mrf.mxu0
        %v1808 = vadd.f32 0.0, %v1807
        %1809 = vdwg.mxu0
        %1810 = vmatpush.msra.mxu0 0.0
        %1811 = vmatpush.msra.mxu0 0.0
        %1812 = vmatpush.msra.mxu0 0.0
        %1813 = vmatpush.msra.mxu0 0.0
        %1814 = vmatpush.msra.mxu0 0.0
        %1815 = vmatpush.msra.mxu0 0.0
        %1816 = vmatpush.msra.mxu0 0.0
        %1817 = vmatpush.msra.mxu0 0.0
        %1818 = vmatpush.msra.mxu0 0.0
        %1819 = vmatpush.msra.mxu0 0.0
        %1820 = vmatpush.msra.mxu0 0.0
        %1821 = vmatpush.msra.mxu0 0.0
        %1822 = vmatpush.msra.mxu0 0.0
        %1823 = vmatpush.msra.mxu0 0.0
        %1824 = vmatpush.msra.mxu0 %v1647
        %1825 = vmatpush.msra.mxu0 %v1606
        %1826 = vmatmul.f32.gmra.mxu0 %v1620
        %v1827 = vpop.f32.mrf.mxu0
        %v1828 = vadd.f32 0.0, %v1827
        %1829 = vmatmul.f32.gmra.mxu0 %v1623
        %v1830 = vpop.f32.mrf.mxu0
        %v1831 = vadd.f32 0.0, %v1830
        %1832 = vdwg.mxu0
        %v1834 = vsel %vm1618, %v1531, 0
        %v1837 = vsel %vm1618, %v1532, 0
        %v1840 = vsel %vm1292, %v1523, 0
        %v1843 = vsel %vm1292, %v1524, 0
        %v1846 = vsel %vm1292, %v1525, 0
        %v1849 = vsel %vm1292, %v1526, 0
        %v1852 = vsel %vm1292, %v1527, 0
        %v1855 = vsel %vm1292, %v1528, 0
        %v1858 = vsel %vm1292, %v1529, 0
        %v1861 = vsel %vm1292, %v1530, 0
        %1863 = vmatpush.msra.mxu0 0.0
        %1864 = vmatpush.msra.mxu0 0.0
        %1865 = vmatpush.msra.mxu0 0.0
        %1866 = vmatpush.msra.mxu0 0.0
        %1867 = vmatpush.msra.mxu0 0.0
        %1868 = vmatpush.msra.mxu0 0.0
        %1869 = vmatpush.msra.mxu0 0.0
        %1870 = vmatpush.msra.mxu0 0.0
        %1871 = vmatpush.msra.mxu0 0.0
        %1872 = vmatpush.msra.mxu0 0.0
        %1873 = vmatpush.msra.mxu0 0.0
        %1874 = vmatpush.msra.mxu0 0.0
        %1875 = vmatpush.msra.mxu0 0.0
        %1876 = vmatpush.msra.mxu0 0.0
        %1877 = vmatpush.msra.mxu0 %v1840
        %1878 = vmatpush.msra.mxu0 %v1515
        %1879 = vmatmul.f32.gmra.mxu0 %v1834
        %v1880 = vpop.f32.mrf.mxu0
        %v1881 = vadd.f32 %v1667, %v1880
        %1882 = vmatmul.f32.gmra.mxu0 %v1837
        %v1883 = vpop.f32.mrf.mxu0
        %v1884 = vadd.f32 %v1670, %v1883
        %1885 = vdwg.mxu0
        %1886 = vmatpush.msra.mxu0 0.0
        %1887 = vmatpush.msra.mxu0 0.0
        %1888 = vmatpush.msra.mxu0 0.0
        %1889 = vmatpush.msra.mxu0 0.0
        %1890 = vmatpush.msra.mxu0 0.0
        %1891 = vmatpush.msra.mxu0 0.0
        %1892 = vmatpush.msra.mxu0 0.0
        %1893 = vmatpush.msra.mxu0 0.0
        %1894 = vmatpush.msra.mxu0 0.0
        %1895 = vmatpush.msra.mxu0 0.0
        %1896 = vmatpush.msra.mxu0 0.0
        %1897 = vmatpush.msra.mxu0 0.0
        %1898 = vmatpush.msra.mxu0 0.0
        %1899 = vmatpush.msra.mxu0 0.0
        %1900 = vmatpush.msra.mxu0 %v1843
        %1901 = vmatpush.msra.mxu0 %v1516
        %1902 = vmatmul.f32.gmra.mxu0 %v1834
        %v1903 = vpop.f32.mrf.mxu0
        %v1904 = vadd.f32 %v1690, %v1903
        %1905 = vmatmul.f32.gmra.mxu0 %v1837
        %v1906 = vpop.f32.mrf.mxu0
        %v1907 = vadd.f32 %v1693, %v1906
        %1908 = vdwg.mxu0
        %1909 = vmatpush.msra.mxu0 0.0
        %1910 = vmatpush.msra.mxu0 0.0
        %1911 = vmatpush.msra.mxu0 0.0
        %1912 = vmatpush.msra.mxu0 0.0
        %1913 = vmatpush.msra.mxu0 0.0
        %1914 = vmatpush.msra.mxu0 0.0
        %1915 = vmatpush.msra.mxu0 0.0
        %1916 = vmatpush.msra.mxu0 0.0
        %1917 = vmatpush.msra.mxu0 0.0
        %1918 = vmatpush.msra.mxu0 0.0
        %1919 = vmatpush.msra.mxu0 0.0
        %1920 = vmatpush.msra.mxu0 0.0
        %1921 = vmatpush.msra.mxu0 0.0
        %1922 = vmatpush.msra.mxu0 0.0
        %1923 = vmatpush.msra.mxu0 %v1846
        %1924 = vmatpush.msra.mxu0 %v1517
        %1925 = vmatmul.f32.gmra.mxu0 %v1834
        %v1926 = vpop.f32.mrf.mxu0
        %v1927 = vadd.f32 %v1713, %v1926
        %1928 = vmatmul.f32.gmra.mxu0 %v1837
        %v1929 = vpop.f32.mrf.mxu0
        %v1930 = vadd.f32 %v1716, %v1929
        %1931 = vdwg.mxu0
        %1932 = vmatpush.msra.mxu0 0.0
        %1933 = vmatpush.msra.mxu0 0.0
        %1934 = vmatpush.msra.mxu0 0.0
        %1935 = vmatpush.msra.mxu0 0.0
        %1936 = vmatpush.msra.mxu0 0.0
        %1937 = vmatpush.msra.mxu0 0.0
        %1938 = vmatpush.msra.mxu0 0.0
        %1939 = vmatpush.msra.mxu0 0.0
        %1940 = vmatpush.msra.mxu0 0.0
        %1941 = vmatpush.msra.mxu0 0.0
        %1942 = vmatpush.msra.mxu0 0.0
        %1943 = vmatpush.msra.mxu0 0.0
        %1944 = vmatpush.msra.mxu0 0.0
        %1945 = vmatpush.msra.mxu0 0.0
        %1946 = vmatpush.msra.mxu0 %v1849
        %1947 = vmatpush.msra.mxu0 %v1518
        %1948 = vmatmul.f32.gmra.mxu0 %v1834
        %v1949 = vpop.f32.mrf.mxu0
        %v1950 = vadd.f32 %v1736, %v1949
        %1951 = vmatmul.f32.gmra.mxu0 %v1837
        %v1952 = vpop.f32.mrf.mxu0
        %v1953 = vadd.f32 %v1739, %v1952
        %1954 = vdwg.mxu0
        %1955 = vmatpush.msra.mxu0 0.0
        %1956 = vmatpush.msra.mxu0 0.0
        %1957 = vmatpush.msra.mxu0 0.0
        %1958 = vmatpush.msra.mxu0 0.0
        %1959 = vmatpush.msra.mxu0 0.0
        %1960 = vmatpush.msra.mxu0 0.0
        %1961 = vmatpush.msra.mxu0 0.0
        %1962 = vmatpush.msra.mxu0 0.0
        %1963 = vmatpush.msra.mxu0 0.0
        %1964 = vmatpush.msra.mxu0 0.0
        %1965 = vmatpush.msra.mxu0 0.0
        %1966 = vmatpush.msra.mxu0 0.0
        %1967 = vmatpush.msra.mxu0 0.0
        %1968 = vmatpush.msra.mxu0 0.0
        %1969 = vmatpush.msra.mxu0 %v1852
        %1970 = vmatpush.msra.mxu0 %v1519
        %1971 = vmatmul.f32.gmra.mxu0 %v1834
        %v1972 = vpop.f32.mrf.mxu0
        %v1973 = vadd.f32 %v1759, %v1972
        %1974 = vmatmul.f32.gmra.mxu0 %v1837
        %v1975 = vpop.f32.mrf.mxu0
        %v1976 = vadd.f32 %v1762, %v1975
        %1977 = vdwg.mxu0
        %1978 = vmatpush.msra.mxu0 0.0
        %1979 = vmatpush.msra.mxu0 0.0
        %1980 = vmatpush.msra.mxu0 0.0
        %1981 = vmatpush.msra.mxu0 0.0
        %1982 = vmatpush.msra.mxu0 0.0
        %1983 = vmatpush.msra.mxu0 0.0
        %1984 = vmatpush.msra.mxu0 0.0
        %1985 = vmatpush.msra.mxu0 0.0
        %1986 = vmatpush.msra.mxu0 0.0
        %1987 = vmatpush.msra.mxu0 0.0
        %1988 = vmatpush.msra.mxu0 0.0
        %1989 = vmatpush.msra.mxu0 0.0
        %1990 = vmatpush.msra.mxu0 0.0
        %1991 = vmatpush.msra.mxu0 0.0
        %1992 = vmatpush.msra.mxu0 %v1855
        %1993 = vmatpush.msra.mxu0 %v1520
        %1994 = vmatmul.f32.gmra.mxu0 %v1834
        %v1995 = vpop.f32.mrf.mxu0
        %v1996 = vadd.f32 %v1782, %v1995
        %1997 = vmatmul.f32.gmra.mxu0 %v1837
        %v1998 = vpop.f32.mrf.mxu0
        %v1999 = vadd.f32 %v1785, %v1998
        %2000 = vdwg.mxu0
        %2001 = vmatpush.msra.mxu0 0.0
        %2002 = vmatpush.msra.mxu0 0.0
        %2003 = vmatpush.msra.mxu0 0.0
        %2004 = vmatpush.msra.mxu0 0.0
        %2005 = vmatpush.msra.mxu0 0.0
        %2006 = vmatpush.msra.mxu0 0.0
        %2007 = vmatpush.msra.mxu0 0.0
        %2008 = vmatpush.msra.mxu0 0.0
        %2009 = vmatpush.msra.mxu0 0.0
        %2010 = vmatpush.msra.mxu0 0.0
        %2011 = vmatpush.msra.mxu0 0.0
        %2012 = vmatpush.msra.mxu0 0.0
        %2013 = vmatpush.msra.mxu0 0.0
        %2014 = vmatpush.msra.mxu0 0.0
        %2015 = vmatpush.msra.mxu0 %v1858
        %2016 = vmatpush.msra.mxu0 %v1521
        %2017 = vmatmul.f32.gmra.mxu0 %v1834
        %v2018 = vpop.f32.mrf.mxu0
        %v2019 = vadd.f32 %v1805, %v2018
        %2020 = vmatmul.f32.gmra.mxu0 %v1837
        %v2021 = vpop.f32.mrf.mxu0
        %v2022 = vadd.f32 %v1808, %v2021
        %2023 = vdwg.mxu0
        %2024 = vmatpush.msra.mxu0 0.0
        %2025 = vmatpush.msra.mxu0 0.0
        %2026 = vmatpush.msra.mxu0 0.0
        %2027 = vmatpush.msra.mxu0 0.0
        %2028 = vmatpush.msra.mxu0 0.0
        %2029 = vmatpush.msra.mxu0 0.0
        %2030 = vmatpush.msra.mxu0 0.0
        %2031 = vmatpush.msra.mxu0 0.0
        %2032 = vmatpush.msra.mxu0 0.0
        %2033 = vmatpush.msra.mxu0 0.0
        %2034 = vmatpush.msra.mxu0 0.0
        %2035 = vmatpush.msra.mxu0 0.0
        %2036 = vmatpush.msra.mxu0 0.0
        %2037 = vmatpush.msra.mxu0 0.0
        %2038 = vmatpush.msra.mxu0 %v1861
        %2039 = vmatpush.msra.mxu0 %v1522
        %2040 = vmatmul.f32.gmra.mxu0 %v1834
        %v2041 = vpop.f32.mrf.mxu0
        %v2042 = vadd.f32 %v1828, %v2041
        %2043 = vmatmul.f32.gmra.mxu0 %v1837
        %v2044 = vpop.f32.mrf.mxu0
        %v2045 = vadd.f32 %v1831, %v2044
        %2046 = vdwg.mxu0
        %2047 = vrot.lane.b32.xlu0 %v1424, 31
        %v2048 = vpop.permute.xlu0 %2047
        %2049 = vrot.lane.b32.xlu0 %v1432, 31
        %v2050 = vpop.permute.xlu0 %2049
        %2053 = vrot.lane.b32.xlu0 %v1417, 31
        %v2054 = vpop.permute.xlu0 %2053
        %2055 = vrot.lane.b32.xlu0 %v1418, 31
        %v2056 = vpop.permute.xlu0 %2055
        %2057 = vrot.lane.b32.xlu0 %v1419, 31
        %v2058 = vpop.permute.xlu0 %2057
        %2059 = vrot.lane.b32.xlu0 %v1420, 31
        %v2060 = vpop.permute.xlu0 %2059
        %2061 = vrot.lane.b32.xlu0 %v1421, 31
        %v2062 = vpop.permute.xlu0 %2061
        %2063 = vrot.lane.b32.xlu0 %v1422, 31
        %v2064 = vpop.permute.xlu0 %2063
        %2065 = vrot.lane.b32.xlu0 %v1423, 31
        %v2066 = vpop.permute.xlu0 %2065
        %2067 = vrot.lane.b32.xlu0 %v1425, 31
        %v2068 = vpop.permute.xlu0 %2067
        %2069 = vrot.lane.b32.xlu0 %v1426, 31
        %v2070 = vpop.permute.xlu0 %2069
        %2071 = vrot.lane.b32.xlu0 %v1427, 31
        %v2072 = vpop.permute.xlu0 %2071
        %2073 = vrot.lane.b32.xlu0 %v1428, 31
        %v2074 = vpop.permute.xlu0 %2073
        %2075 = vrot.lane.b32.xlu0 %v1429, 31
        %v2076 = vpop.permute.xlu0 %2075
        %2077 = vrot.lane.b32.xlu0 %v1430, 31
        %v2078 = vpop.permute.xlu0 %2077
        %2079 = vrot.lane.b32.xlu0 %v1431, 31
        %v2080 = vpop.permute.xlu0 %2079
        %v2081 = vsel %vm523, %v2054, %v2056
        %v2082 = vsel %vm523, %v2056, %v2058
        %v2083 = vsel %vm523, %v2058, %v2060
        %v2084 = vsel %vm523, %v2060, %v2062
        %v2085 = vsel %vm523, %v2062, %v2064
        %v2086 = vsel %vm523, %v2064, %v2066
        %v2087 = vsel %vm523, %v2066, %v2048
        %v2088 = vsel %vm523, %v2068, %v2070
        %v2089 = vsel %vm523, %v2070, %v2072
        %v2090 = vsel %vm523, %v2072, %v2074
        %v2091 = vsel %vm523, %v2074, %v2076
        %v2092 = vsel %vm523, %v2076, %v2078
        %v2093 = vsel %vm523, %v2078, %v2080
        %v2094 = vsel %vm523, %v2080, %v2050
        %v2111 = vsel %vm523, %v2048, %v2054
        %v2112 = vsel %vm523, %v2050, %v2068
        %v2113 = vmul.f32 %v2111, %v545
        %v2114 = vmul.f32 %v2081, %v546
        %v2115 = vmul.f32 %v2082, %v547
        %v2116 = vmul.f32 %v2083, %v548
        %v2117 = vmul.f32 %v2084, %v549
        %v2118 = vmul.f32 %v2085, %v550
        %v2119 = vmul.f32 %v2086, %v551
        %v2120 = vmul.f32 %v2087, %v552
        %v2121 = vmul.f32 %v2112, %v545
        %v2122 = vmul.f32 %v2088, %v546
        %v2123 = vmul.f32 %v2089, %v547
        %v2124 = vmul.f32 %v2090, %v548
        %v2125 = vmul.f32 %v2091, %v549
        %v2126 = vmul.f32 %v2092, %v550
        %v2127 = vmul.f32 %v2093, %v551
        %v2128 = vmul.f32 %v2094, %v552
        %s2129 = scalar_lea.vmem %s4, 32
        %v2130 = vld [vmem:[%s2129] sm:$0xff]
        %v2131 = vld [vmem:[%s2129 + $0x8] sm:$0xf]
        %v2133 = vsel %vm1618, %v2130, 0
        %v2136 = vsel %vm1618, %v2131, 0
        %v2139 = vsel %vm1292, %v2121, 0
        %v2142 = vsel %vm1292, %v2122, 0
        %v2145 = vsel %vm1292, %v2123, 0
        %v2148 = vsel %vm1292, %v2124, 0
        %v2151 = vsel %vm1292, %v2125, 0
        %v2154 = vsel %vm1292, %v2126, 0
        %v2157 = vsel %vm1292, %v2127, 0
        %v2160 = vsel %vm1292, %v2128, 0
        %2162 = vmatpush.msra.mxu0 0.0
        %2163 = vmatpush.msra.mxu0 0.0
        %2164 = vmatpush.msra.mxu0 0.0
        %2165 = vmatpush.msra.mxu0 0.0
        %2166 = vmatpush.msra.mxu0 0.0
        %2167 = vmatpush.msra.mxu0 0.0
        %2168 = vmatpush.msra.mxu0 0.0
        %2169 = vmatpush.msra.mxu0 0.0
        %2170 = vmatpush.msra.mxu0 0.0
        %2171 = vmatpush.msra.mxu0 0.0
        %2172 = vmatpush.msra.mxu0 0.0
        %2173 = vmatpush.msra.mxu0 0.0
        %2174 = vmatpush.msra.mxu0 0.0
        %2175 = vmatpush.msra.mxu0 0.0
        %2176 = vmatpush.msra.mxu0 %v2139
        %2177 = vmatpush.msra.mxu0 %v2113
        %2178 = vmatmul.f32.gmra.mxu0 %v2133
        %v2179 = vpop.f32.mrf.mxu0
        %v2180 = vadd.f32 0.0, %v2179
        %2181 = vmatmul.f32.gmra.mxu0 %v2136
        %v2182 = vpop.f32.mrf.mxu0
        %v2183 = vadd.f32 0.0, %v2182
        %2184 = vdwg.mxu0
        %2185 = vmatpush.msra.mxu0 0.0
        %2186 = vmatpush.msra.mxu0 0.0
        %2187 = vmatpush.msra.mxu0 0.0
        %2188 = vmatpush.msra.mxu0 0.0
        %2189 = vmatpush.msra.mxu0 0.0
        %2190 = vmatpush.msra.mxu0 0.0
        %2191 = vmatpush.msra.mxu0 0.0
        %2192 = vmatpush.msra.mxu0 0.0
        %2193 = vmatpush.msra.mxu0 0.0
        %2194 = vmatpush.msra.mxu0 0.0
        %2195 = vmatpush.msra.mxu0 0.0
        %2196 = vmatpush.msra.mxu0 0.0
        %2197 = vmatpush.msra.mxu0 0.0
        %2198 = vmatpush.msra.mxu0 0.0
        %2199 = vmatpush.msra.mxu0 %v2142
        %2200 = vmatpush.msra.mxu0 %v2114
        %2201 = vmatmul.f32.gmra.mxu0 %v2133
        %v2202 = vpop.f32.mrf.mxu0
        %v2203 = vadd.f32 0.0, %v2202
        %2204 = vmatmul.f32.gmra.mxu0 %v2136
        %v2205 = vpop.f32.mrf.mxu0
        %v2206 = vadd.f32 0.0, %v2205
        %2207 = vdwg.mxu0
        %2208 = vmatpush.msra.mxu0 0.0
        %2209 = vmatpush.msra.mxu0 0.0
        %2210 = vmatpush.msra.mxu0 0.0
        %2211 = vmatpush.msra.mxu0 0.0
        %2212 = vmatpush.msra.mxu0 0.0
        %2213 = vmatpush.msra.mxu0 0.0
        %2214 = vmatpush.msra.mxu0 0.0
        %2215 = vmatpush.msra.mxu0 0.0
        %2216 = vmatpush.msra.mxu0 0.0
        %2217 = vmatpush.msra.mxu0 0.0
        %2218 = vmatpush.msra.mxu0 0.0
        %2219 = vmatpush.msra.mxu0 0.0
        %2220 = vmatpush.msra.mxu0 0.0
        %2221 = vmatpush.msra.mxu0 0.0
        %2222 = vmatpush.msra.mxu0 %v2145
        %2223 = vmatpush.msra.mxu0 %v2115
        %2224 = vmatmul.f32.gmra.mxu0 %v2133
        %v2225 = vpop.f32.mrf.mxu0
        %v2226 = vadd.f32 0.0, %v2225
        %2227 = vmatmul.f32.gmra.mxu0 %v2136
        %v2228 = vpop.f32.mrf.mxu0
        %v2229 = vadd.f32 0.0, %v2228
        %2230 = vdwg.mxu0
        %2231 = vmatpush.msra.mxu0 0.0
        %2232 = vmatpush.msra.mxu0 0.0
        %2233 = vmatpush.msra.mxu0 0.0
        %2234 = vmatpush.msra.mxu0 0.0
        %2235 = vmatpush.msra.mxu0 0.0
        %2236 = vmatpush.msra.mxu0 0.0
        %2237 = vmatpush.msra.mxu0 0.0
        %2238 = vmatpush.msra.mxu0 0.0
        %2239 = vmatpush.msra.mxu0 0.0
        %2240 = vmatpush.msra.mxu0 0.0
        %2241 = vmatpush.msra.mxu0 0.0
        %2242 = vmatpush.msra.mxu0 0.0
        %2243 = vmatpush.msra.mxu0 0.0
        %2244 = vmatpush.msra.mxu0 0.0
        %2245 = vmatpush.msra.mxu0 %v2148
        %2246 = vmatpush.msra.mxu0 %v2116
        %2247 = vmatmul.f32.gmra.mxu0 %v2133
        %v2248 = vpop.f32.mrf.mxu0
        %v2249 = vadd.f32 0.0, %v2248
        %2250 = vmatmul.f32.gmra.mxu0 %v2136
        %v2251 = vpop.f32.mrf.mxu0
        %v2252 = vadd.f32 0.0, %v2251
        %2253 = vdwg.mxu0
        %2254 = vmatpush.msra.mxu0 0.0
        %2255 = vmatpush.msra.mxu0 0.0
        %2256 = vmatpush.msra.mxu0 0.0
        %2257 = vmatpush.msra.mxu0 0.0
        %2258 = vmatpush.msra.mxu0 0.0
        %2259 = vmatpush.msra.mxu0 0.0
        %2260 = vmatpush.msra.mxu0 0.0
        %2261 = vmatpush.msra.mxu0 0.0
        %2262 = vmatpush.msra.mxu0 0.0
        %2263 = vmatpush.msra.mxu0 0.0
        %2264 = vmatpush.msra.mxu0 0.0
        %2265 = vmatpush.msra.mxu0 0.0
        %2266 = vmatpush.msra.mxu0 0.0
        %2267 = vmatpush.msra.mxu0 0.0
        %2268 = vmatpush.msra.mxu0 %v2151
        %2269 = vmatpush.msra.mxu0 %v2117
        %2270 = vmatmul.f32.gmra.mxu0 %v2133
        %v2271 = vpop.f32.mrf.mxu0
        %v2272 = vadd.f32 0.0, %v2271
        %2273 = vmatmul.f32.gmra.mxu0 %v2136
        %v2274 = vpop.f32.mrf.mxu0
        %v2275 = vadd.f32 0.0, %v2274
        %2276 = vdwg.mxu0
        %2277 = vmatpush.msra.mxu0 0.0
        %2278 = vmatpush.msra.mxu0 0.0
        %2279 = vmatpush.msra.mxu0 0.0
        %2280 = vmatpush.msra.mxu0 0.0
        %2281 = vmatpush.msra.mxu0 0.0
        %2282 = vmatpush.msra.mxu0 0.0
        %2283 = vmatpush.msra.mxu0 0.0
        %2284 = vmatpush.msra.mxu0 0.0
        %2285 = vmatpush.msra.mxu0 0.0
        %2286 = vmatpush.msra.mxu0 0.0
        %2287 = vmatpush.msra.mxu0 0.0
        %2288 = vmatpush.msra.mxu0 0.0
        %2289 = vmatpush.msra.mxu0 0.0
        %2290 = vmatpush.msra.mxu0 0.0
        %2291 = vmatpush.msra.mxu0 %v2154
        %2292 = vmatpush.msra.mxu0 %v2118
        %2293 = vmatmul.f32.gmra.mxu0 %v2133
        %v2294 = vpop.f32.mrf.mxu0
        %v2295 = vadd.f32 0.0, %v2294
        %2296 = vmatmul.f32.gmra.mxu0 %v2136
        %v2297 = vpop.f32.mrf.mxu0
        %v2298 = vadd.f32 0.0, %v2297
        %2299 = vdwg.mxu0
        %2300 = vmatpush.msra.mxu0 0.0
        %2301 = vmatpush.msra.mxu0 0.0
        %2302 = vmatpush.msra.mxu0 0.0
        %2303 = vmatpush.msra.mxu0 0.0
        %2304 = vmatpush.msra.mxu0 0.0
        %2305 = vmatpush.msra.mxu0 0.0
        %2306 = vmatpush.msra.mxu0 0.0
        %2307 = vmatpush.msra.mxu0 0.0
        %2308 = vmatpush.msra.mxu0 0.0
        %2309 = vmatpush.msra.mxu0 0.0
        %2310 = vmatpush.msra.mxu0 0.0
        %2311 = vmatpush.msra.mxu0 0.0
        %2312 = vmatpush.msra.mxu0 0.0
        %2313 = vmatpush.msra.mxu0 0.0
        %2314 = vmatpush.msra.mxu0 %v2157
        %2315 = vmatpush.msra.mxu0 %v2119
        %2316 = vmatmul.f32.gmra.mxu0 %v2133
        %v2317 = vpop.f32.mrf.mxu0
        %v2318 = vadd.f32 0.0, %v2317
        %2319 = vmatmul.f32.gmra.mxu0 %v2136
        %v2320 = vpop.f32.mrf.mxu0
        %v2321 = vadd.f32 0.0, %v2320
        %2322 = vdwg.mxu0
        %2323 = vmatpush.msra.mxu0 0.0
        %2324 = vmatpush.msra.mxu0 0.0
        %2325 = vmatpush.msra.mxu0 0.0
        %2326 = vmatpush.msra.mxu0 0.0
        %2327 = vmatpush.msra.mxu0 0.0
        %2328 = vmatpush.msra.mxu0 0.0
        %2329 = vmatpush.msra.mxu0 0.0
        %2330 = vmatpush.msra.mxu0 0.0
        %2331 = vmatpush.msra.mxu0 0.0
        %2332 = vmatpush.msra.mxu0 0.0
        %2333 = vmatpush.msra.mxu0 0.0
        %2334 = vmatpush.msra.mxu0 0.0
        %2335 = vmatpush.msra.mxu0 0.0
        %2336 = vmatpush.msra.mxu0 0.0
        %2337 = vmatpush.msra.mxu0 %v2160
        %2338 = vmatpush.msra.mxu0 %v2120
        %2339 = vmatmul.f32.gmra.mxu0 %v2133
        %v2340 = vpop.f32.mrf.mxu0
        %v2341 = vadd.f32 0.0, %v2340
        %2342 = vmatmul.f32.gmra.mxu0 %v2136
        %v2343 = vpop.f32.mrf.mxu0
        %v2344 = vadd.f32 0.0, %v2343
        %2345 = vdwg.mxu0
        %v2346 = vadd.f32 %v1881, %v2180
        %v2347 = vadd.f32 %v1904, %v2203
        %v2348 = vadd.f32 %v1927, %v2226
        %v2349 = vadd.f32 %v1950, %v2249
        %v2350 = vadd.f32 %v1973, %v2272
        %v2351 = vadd.f32 %v1996, %v2295
        %v2352 = vadd.f32 %v2019, %v2318
        %v2353 = vadd.f32 %v2042, %v2341
        %v2354 = vadd.f32 %v1884, %v2183
        %v2355 = vadd.f32 %v1907, %v2206
        %v2356 = vadd.f32 %v1930, %v2229
        %v2357 = vadd.f32 %v1953, %v2252
        %v2358 = vadd.f32 %v1976, %v2275
        %v2359 = vadd.f32 %v1999, %v2298
        %v2360 = vadd.f32 %v2022, %v2321
        %v2361 = vadd.f32 %v2045, %v2344
        %2362 = vrot.lane.b32.xlu0 %v1424, 1
        %v2363 = vpop.permute.xlu0 %2362
        %2364 = vrot.lane.b32.xlu0 %v1432, 1
        %v2365 = vpop.permute.xlu0 %2364
        %2368 = vrot.lane.b32.xlu0 %v1417, 1
        %v2369 = vpop.permute.xlu0 %2368
        %2370 = vrot.lane.b32.xlu0 %v1418, 1
        %v2371 = vpop.permute.xlu0 %2370
        %2372 = vrot.lane.b32.xlu0 %v1419, 1
        %v2373 = vpop.permute.xlu0 %2372
        %2374 = vrot.lane.b32.xlu0 %v1420, 1
        %v2375 = vpop.permute.xlu0 %2374
        %2376 = vrot.lane.b32.xlu0 %v1421, 1
        %v2377 = vpop.permute.xlu0 %2376
        %2378 = vrot.lane.b32.xlu0 %v1422, 1
        %v2379 = vpop.permute.xlu0 %2378
        %2380 = vrot.lane.b32.xlu0 %v1423, 1
        %v2381 = vpop.permute.xlu0 %2380
        %2382 = vrot.lane.b32.xlu0 %v1425, 1
        %v2383 = vpop.permute.xlu0 %2382
        %2384 = vrot.lane.b32.xlu0 %v1426, 1
        %v2385 = vpop.permute.xlu0 %2384
        %2386 = vrot.lane.b32.xlu0 %v1427, 1
        %v2387 = vpop.permute.xlu0 %2386
        %2388 = vrot.lane.b32.xlu0 %v1428, 1
        %v2389 = vpop.permute.xlu0 %2388
        %2390 = vrot.lane.b32.xlu0 %v1429, 1
        %v2391 = vpop.permute.xlu0 %2390
        %2392 = vrot.lane.b32.xlu0 %v1430, 1
        %v2393 = vpop.permute.xlu0 %2392
        %2394 = vrot.lane.b32.xlu0 %v1431, 1
        %v2395 = vpop.permute.xlu0 %2394
        %v2396 = vsel %vm639, %v2369, %v2371
        %v2397 = vsel %vm639, %v2371, %v2373
        %v2398 = vsel %vm639, %v2373, %v2375
        %v2399 = vsel %vm639, %v2375, %v2377
        %v2400 = vsel %vm639, %v2377, %v2379
        %v2401 = vsel %vm639, %v2379, %v2381
        %v2402 = vsel %vm639, %v2381, %v2363
        %v2403 = vsel %vm639, %v2383, %v2385
        %v2404 = vsel %vm639, %v2385, %v2387
        %v2405 = vsel %vm639, %v2387, %v2389
        %v2406 = vsel %vm639, %v2389, %v2391
        %v2407 = vsel %vm639, %v2391, %v2393
        %v2408 = vsel %vm639, %v2393, %v2395
        %v2409 = vsel %vm639, %v2395, %v2365
        %v2426 = vsel %vm639, %v2363, %v2369
        %v2427 = vsel %vm639, %v2365, %v2383
        %v2428 = vmul.f32 %v2426, %v661
        %v2429 = vmul.f32 %v2396, %v662
        %v2430 = vmul.f32 %v2397, %v663
        %v2431 = vmul.f32 %v2398, %v664
        %v2432 = vmul.f32 %v2399, %v665
        %v2433 = vmul.f32 %v2400, %v666
        %v2434 = vmul.f32 %v2401, %v667
        %v2435 = vmul.f32 %v2402, %v668
        %v2436 = vmul.f32 %v2427, %v661
        %v2437 = vmul.f32 %v2403, %v662
        %v2438 = vmul.f32 %v2404, %v663
        %v2439 = vmul.f32 %v2405, %v664
        %v2440 = vmul.f32 %v2406, %v665
        %v2441 = vmul.f32 %v2407, %v666
        %v2442 = vmul.f32 %v2408, %v667
        %v2443 = vmul.f32 %v2409, %v668
        %s2444 = scalar_lea.vmem %s4, 48
        %v2445 = vld [vmem:[%s2444] sm:$0xff]
        %v2446 = vld [vmem:[%s2444 + $0x8] sm:$0xf]
        %v2448 = vsel %vm1618, %v2445, 0
        %v2451 = vsel %vm1618, %v2446, 0
        %v2454 = vsel %vm1292, %v2436, 0
        %v2457 = vsel %vm1292, %v2437, 0
        %v2460 = vsel %vm1292, %v2438, 0
        %v2463 = vsel %vm1292, %v2439, 0
        %v2466 = vsel %vm1292, %v2440, 0
        %v2469 = vsel %vm1292, %v2441, 0
        %v2472 = vsel %vm1292, %v2442, 0
        %v2475 = vsel %vm1292, %v2443, 0
        %2477 = vmatpush.msra.mxu0 0.0
        %2478 = vmatpush.msra.mxu0 0.0
        %2479 = vmatpush.msra.mxu0 0.0
        %2480 = vmatpush.msra.mxu0 0.0
        %2481 = vmatpush.msra.mxu0 0.0
        %2482 = vmatpush.msra.mxu0 0.0
        %2483 = vmatpush.msra.mxu0 0.0
        %2484 = vmatpush.msra.mxu0 0.0
        %2485 = vmatpush.msra.mxu0 0.0
        %2486 = vmatpush.msra.mxu0 0.0
        %2487 = vmatpush.msra.mxu0 0.0
        %2488 = vmatpush.msra.mxu0 0.0
        %2489 = vmatpush.msra.mxu0 0.0
        %2490 = vmatpush.msra.mxu0 0.0
        %2491 = vmatpush.msra.mxu0 %v2454
        %2492 = vmatpush.msra.mxu0 %v2428
        %2493 = vmatmul.f32.gmra.mxu0 %v2448
        %v2494 = vpop.f32.mrf.mxu0
        %v2495 = vadd.f32 0.0, %v2494
        %2496 = vmatmul.f32.gmra.mxu0 %v2451
        %v2497 = vpop.f32.mrf.mxu0
        %v2498 = vadd.f32 0.0, %v2497
        %2499 = vdwg.mxu0
        %2500 = vmatpush.msra.mxu0 0.0
        %2501 = vmatpush.msra.mxu0 0.0
        %2502 = vmatpush.msra.mxu0 0.0
        %2503 = vmatpush.msra.mxu0 0.0
        %2504 = vmatpush.msra.mxu0 0.0
        %2505 = vmatpush.msra.mxu0 0.0
        %2506 = vmatpush.msra.mxu0 0.0
        %2507 = vmatpush.msra.mxu0 0.0
        %2508 = vmatpush.msra.mxu0 0.0
        %2509 = vmatpush.msra.mxu0 0.0
        %2510 = vmatpush.msra.mxu0 0.0
        %2511 = vmatpush.msra.mxu0 0.0
        %2512 = vmatpush.msra.mxu0 0.0
        %2513 = vmatpush.msra.mxu0 0.0
        %2514 = vmatpush.msra.mxu0 %v2457
        %2515 = vmatpush.msra.mxu0 %v2429
        %2516 = vmatmul.f32.gmra.mxu0 %v2448
        %v2517 = vpop.f32.mrf.mxu0
        %v2518 = vadd.f32 0.0, %v2517
        %2519 = vmatmul.f32.gmra.mxu0 %v2451
        %v2520 = vpop.f32.mrf.mxu0
        %v2521 = vadd.f32 0.0, %v2520
        %2522 = vdwg.mxu0
        %2523 = vmatpush.msra.mxu0 0.0
        %2524 = vmatpush.msra.mxu0 0.0
        %2525 = vmatpush.msra.mxu0 0.0
        %2526 = vmatpush.msra.mxu0 0.0
        %2527 = vmatpush.msra.mxu0 0.0
        %2528 = vmatpush.msra.mxu0 0.0
        %2529 = vmatpush.msra.mxu0 0.0
        %2530 = vmatpush.msra.mxu0 0.0
        %2531 = vmatpush.msra.mxu0 0.0
        %2532 = vmatpush.msra.mxu0 0.0
        %2533 = vmatpush.msra.mxu0 0.0
        %2534 = vmatpush.msra.mxu0 0.0
        %2535 = vmatpush.msra.mxu0 0.0
        %2536 = vmatpush.msra.mxu0 0.0
        %2537 = vmatpush.msra.mxu0 %v2460
        %2538 = vmatpush.msra.mxu0 %v2430
        %2539 = vmatmul.f32.gmra.mxu0 %v2448
        %v2540 = vpop.f32.mrf.mxu0
        %v2541 = vadd.f32 0.0, %v2540
        %2542 = vmatmul.f32.gmra.mxu0 %v2451
        %v2543 = vpop.f32.mrf.mxu0
        %v2544 = vadd.f32 0.0, %v2543
        %2545 = vdwg.mxu0
        %2546 = vmatpush.msra.mxu0 0.0
        %2547 = vmatpush.msra.mxu0 0.0
        %2548 = vmatpush.msra.mxu0 0.0
        %2549 = vmatpush.msra.mxu0 0.0
        %2550 = vmatpush.msra.mxu0 0.0
        %2551 = vmatpush.msra.mxu0 0.0
        %2552 = vmatpush.msra.mxu0 0.0
        %2553 = vmatpush.msra.mxu0 0.0
        %2554 = vmatpush.msra.mxu0 0.0
        %2555 = vmatpush.msra.mxu0 0.0
        %2556 = vmatpush.msra.mxu0 0.0
        %2557 = vmatpush.msra.mxu0 0.0
        %2558 = vmatpush.msra.mxu0 0.0
        %2559 = vmatpush.msra.mxu0 0.0
        %2560 = vmatpush.msra.mxu0 %v2463
        %2561 = vmatpush.msra.mxu0 %v2431
        %2562 = vmatmul.f32.gmra.mxu0 %v2448
        %v2563 = vpop.f32.mrf.mxu0
        %v2564 = vadd.f32 0.0, %v2563
        %2565 = vmatmul.f32.gmra.mxu0 %v2451
        %v2566 = vpop.f32.mrf.mxu0
        %v2567 = vadd.f32 0.0, %v2566
        %2568 = vdwg.mxu0
        %2569 = vmatpush.msra.mxu0 0.0
        %2570 = vmatpush.msra.mxu0 0.0
        %2571 = vmatpush.msra.mxu0 0.0
        %2572 = vmatpush.msra.mxu0 0.0
        %2573 = vmatpush.msra.mxu0 0.0
        %2574 = vmatpush.msra.mxu0 0.0
        %2575 = vmatpush.msra.mxu0 0.0
        %2576 = vmatpush.msra.mxu0 0.0
        %2577 = vmatpush.msra.mxu0 0.0
        %2578 = vmatpush.msra.mxu0 0.0
        %2579 = vmatpush.msra.mxu0 0.0
        %2580 = vmatpush.msra.mxu0 0.0
        %2581 = vmatpush.msra.mxu0 0.0
        %2582 = vmatpush.msra.mxu0 0.0
        %2583 = vmatpush.msra.mxu0 %v2466
        %2584 = vmatpush.msra.mxu0 %v2432
        %2585 = vmatmul.f32.gmra.mxu0 %v2448
        %v2586 = vpop.f32.mrf.mxu0
        %v2587 = vadd.f32 0.0, %v2586
        %2588 = vmatmul.f32.gmra.mxu0 %v2451
        %v2589 = vpop.f32.mrf.mxu0
        %v2590 = vadd.f32 0.0, %v2589
        %2591 = vdwg.mxu0
        %2592 = vmatpush.msra.mxu0 0.0
        %2593 = vmatpush.msra.mxu0 0.0
        %2594 = vmatpush.msra.mxu0 0.0
        %2595 = vmatpush.msra.mxu0 0.0
        %2596 = vmatpush.msra.mxu0 0.0
        %2597 = vmatpush.msra.mxu0 0.0
        %2598 = vmatpush.msra.mxu0 0.0
        %2599 = vmatpush.msra.mxu0 0.0
        %2600 = vmatpush.msra.mxu0 0.0
        %2601 = vmatpush.msra.mxu0 0.0
        %2602 = vmatpush.msra.mxu0 0.0
        %2603 = vmatpush.msra.mxu0 0.0
        %2604 = vmatpush.msra.mxu0 0.0
        %2605 = vmatpush.msra.mxu0 0.0
        %2606 = vmatpush.msra.mxu0 %v2469
        %2607 = vmatpush.msra.mxu0 %v2433
        %2608 = vmatmul.f32.gmra.mxu0 %v2448
        %v2609 = vpop.f32.mrf.mxu0
        %v2610 = vadd.f32 0.0, %v2609
        %2611 = vmatmul.f32.gmra.mxu0 %v2451
        %v2612 = vpop.f32.mrf.mxu0
        %v2613 = vadd.f32 0.0, %v2612
        %2614 = vdwg.mxu0
        %2615 = vmatpush.msra.mxu0 0.0
        %2616 = vmatpush.msra.mxu0 0.0
        %2617 = vmatpush.msra.mxu0 0.0
        %2618 = vmatpush.msra.mxu0 0.0
        %2619 = vmatpush.msra.mxu0 0.0
        %2620 = vmatpush.msra.mxu0 0.0
        %2621 = vmatpush.msra.mxu0 0.0
        %2622 = vmatpush.msra.mxu0 0.0
        %2623 = vmatpush.msra.mxu0 0.0
        %2624 = vmatpush.msra.mxu0 0.0
        %2625 = vmatpush.msra.mxu0 0.0
        %2626 = vmatpush.msra.mxu0 0.0
        %2627 = vmatpush.msra.mxu0 0.0
        %2628 = vmatpush.msra.mxu0 0.0
        %2629 = vmatpush.msra.mxu0 %v2472
        %2630 = vmatpush.msra.mxu0 %v2434
        %2631 = vmatmul.f32.gmra.mxu0 %v2448
        %v2632 = vpop.f32.mrf.mxu0
        %v2633 = vadd.f32 0.0, %v2632
        %2634 = vmatmul.f32.gmra.mxu0 %v2451
        %v2635 = vpop.f32.mrf.mxu0
        %v2636 = vadd.f32 0.0, %v2635
        %2637 = vdwg.mxu0
        %2638 = vmatpush.msra.mxu0 0.0
        %2639 = vmatpush.msra.mxu0 0.0
        %2640 = vmatpush.msra.mxu0 0.0
        %2641 = vmatpush.msra.mxu0 0.0
        %2642 = vmatpush.msra.mxu0 0.0
        %2643 = vmatpush.msra.mxu0 0.0
        %2644 = vmatpush.msra.mxu0 0.0
        %2645 = vmatpush.msra.mxu0 0.0
        %2646 = vmatpush.msra.mxu0 0.0
        %2647 = vmatpush.msra.mxu0 0.0
        %2648 = vmatpush.msra.mxu0 0.0
        %2649 = vmatpush.msra.mxu0 0.0
        %2650 = vmatpush.msra.mxu0 0.0
        %2651 = vmatpush.msra.mxu0 0.0
        %2652 = vmatpush.msra.mxu0 %v2475
        %2653 = vmatpush.msra.mxu0 %v2435
        %2654 = vmatmul.f32.gmra.mxu0 %v2448
        %v2655 = vpop.f32.mrf.mxu0
        %v2656 = vadd.f32 0.0, %v2655
        %2657 = vmatmul.f32.gmra.mxu0 %v2451
        %v2658 = vpop.f32.mrf.mxu0
        %v2659 = vadd.f32 0.0, %v2658
        %2660 = vdwg.mxu0
        %v2661 = vadd.f32 %v2346, %v2495
        %v2662 = vadd.f32 %v2347, %v2518
        %v2663 = vadd.f32 %v2348, %v2541
        %v2664 = vadd.f32 %v2349, %v2564
        %v2665 = vadd.f32 %v2350, %v2587
        %v2666 = vadd.f32 %v2351, %v2610
        %v2667 = vadd.f32 %v2352, %v2633
        %v2668 = vadd.f32 %v2353, %v2656
        %v2669 = vadd.f32 %v2354, %v2498
        %v2670 = vadd.f32 %v2355, %v2521
        %v2671 = vadd.f32 %v2356, %v2544
        %v2672 = vadd.f32 %v2357, %v2567
        %v2673 = vadd.f32 %v2358, %v2590
        %v2674 = vadd.f32 %v2359, %v2613
        %v2675 = vadd.f32 %v2360, %v2636
        %v2676 = vadd.f32 %v2361, %v2659
        %s2677 = scalar_lea.vmem %s4, 64
        %v2678 = vld [vmem:[%s2677] sm:$0xff]
        %v2679 = vld [vmem:[%s2677 + $0x8] sm:$0xf]
        %v2681 = vsel %vm1618, %v2678, 0
        %v2684 = vsel %vm1618, %v2679, 0
        %v2686 = vsel %vm1292, %v1425, 0
        %v2688 = vsel %vm1292, %v1426, 0
        %v2690 = vsel %vm1292, %v1427, 0
        %v2692 = vsel %vm1292, %v1428, 0
        %v2694 = vsel %vm1292, %v1429, 0
        %v2696 = vsel %vm1292, %v1430, 0
        %v2698 = vsel %vm1292, %v1431, 0
        %v2700 = vsel %vm1292, %v1432, 0
        %2702 = vmatpush.msra.mxu0 0.0
        %2703 = vmatpush.msra.mxu0 0.0
        %2704 = vmatpush.msra.mxu0 0.0
        %2705 = vmatpush.msra.mxu0 0.0
        %2706 = vmatpush.msra.mxu0 0.0
        %2707 = vmatpush.msra.mxu0 0.0
        %2708 = vmatpush.msra.mxu0 0.0
        %2709 = vmatpush.msra.mxu0 0.0
        %2710 = vmatpush.msra.mxu0 0.0
        %2711 = vmatpush.msra.mxu0 0.0
        %2712 = vmatpush.msra.mxu0 0.0
        %2713 = vmatpush.msra.mxu0 0.0
        %2714 = vmatpush.msra.mxu0 0.0
        %2715 = vmatpush.msra.mxu0 0.0
        %2716 = vmatpush.msra.mxu0 %v2686
        %2717 = vmatpush.msra.mxu0 %v1417
        %2718 = vmatmul.f32.gmra.mxu0 %v2681
        %v2719 = vpop.f32.mrf.mxu0
        %v2720 = vadd.f32 0.0, %v2719
        %2721 = vmatmul.f32.gmra.mxu0 %v2684
        %v2722 = vpop.f32.mrf.mxu0
        %v2723 = vadd.f32 0.0, %v2722
        %2724 = vdwg.mxu0
        %2725 = vmatpush.msra.mxu0 0.0
        %2726 = vmatpush.msra.mxu0 0.0
        %2727 = vmatpush.msra.mxu0 0.0
        %2728 = vmatpush.msra.mxu0 0.0
        %2729 = vmatpush.msra.mxu0 0.0
        %2730 = vmatpush.msra.mxu0 0.0
        %2731 = vmatpush.msra.mxu0 0.0
        %2732 = vmatpush.msra.mxu0 0.0
        %2733 = vmatpush.msra.mxu0 0.0
        %2734 = vmatpush.msra.mxu0 0.0
        %2735 = vmatpush.msra.mxu0 0.0
        %2736 = vmatpush.msra.mxu0 0.0
        %2737 = vmatpush.msra.mxu0 0.0
        %2738 = vmatpush.msra.mxu0 0.0
        %2739 = vmatpush.msra.mxu0 %v2688
        %2740 = vmatpush.msra.mxu0 %v1418
        %2741 = vmatmul.f32.gmra.mxu0 %v2681
        %v2742 = vpop.f32.mrf.mxu0
        %v2743 = vadd.f32 0.0, %v2742
        %2744 = vmatmul.f32.gmra.mxu0 %v2684
        %v2745 = vpop.f32.mrf.mxu0
        %v2746 = vadd.f32 0.0, %v2745
        %2747 = vdwg.mxu0
        %2748 = vmatpush.msra.mxu0 0.0
        %2749 = vmatpush.msra.mxu0 0.0
        %2750 = vmatpush.msra.mxu0 0.0
        %2751 = vmatpush.msra.mxu0 0.0
        %2752 = vmatpush.msra.mxu0 0.0
        %2753 = vmatpush.msra.mxu0 0.0
        %2754 = vmatpush.msra.mxu0 0.0
        %2755 = vmatpush.msra.mxu0 0.0
        %2756 = vmatpush.msra.mxu0 0.0
        %2757 = vmatpush.msra.mxu0 0.0
        %2758 = vmatpush.msra.mxu0 0.0
        %2759 = vmatpush.msra.mxu0 0.0
        %2760 = vmatpush.msra.mxu0 0.0
        %2761 = vmatpush.msra.mxu0 0.0
        %2762 = vmatpush.msra.mxu0 %v2690
        %2763 = vmatpush.msra.mxu0 %v1419
        %2764 = vmatmul.f32.gmra.mxu0 %v2681
        %v2765 = vpop.f32.mrf.mxu0
        %v2766 = vadd.f32 0.0, %v2765
        %2767 = vmatmul.f32.gmra.mxu0 %v2684
        %v2768 = vpop.f32.mrf.mxu0
        %v2769 = vadd.f32 0.0, %v2768
        %2770 = vdwg.mxu0
        %2771 = vmatpush.msra.mxu0 0.0
        %2772 = vmatpush.msra.mxu0 0.0
        %2773 = vmatpush.msra.mxu0 0.0
        %2774 = vmatpush.msra.mxu0 0.0
        %2775 = vmatpush.msra.mxu0 0.0
        %2776 = vmatpush.msra.mxu0 0.0
        %2777 = vmatpush.msra.mxu0 0.0
        %2778 = vmatpush.msra.mxu0 0.0
        %2779 = vmatpush.msra.mxu0 0.0
        %2780 = vmatpush.msra.mxu0 0.0
        %2781 = vmatpush.msra.mxu0 0.0
        %2782 = vmatpush.msra.mxu0 0.0
        %2783 = vmatpush.msra.mxu0 0.0
        %2784 = vmatpush.msra.mxu0 0.0
        %2785 = vmatpush.msra.mxu0 %v2692
        %2786 = vmatpush.msra.mxu0 %v1420
        %2787 = vmatmul.f32.gmra.mxu0 %v2681
        %v2788 = vpop.f32.mrf.mxu0
        %v2789 = vadd.f32 0.0, %v2788
        %2790 = vmatmul.f32.gmra.mxu0 %v2684
        %v2791 = vpop.f32.mrf.mxu0
        %v2792 = vadd.f32 0.0, %v2791
        %2793 = vdwg.mxu0
        %2794 = vmatpush.msra.mxu0 0.0
        %2795 = vmatpush.msra.mxu0 0.0
        %2796 = vmatpush.msra.mxu0 0.0
        %2797 = vmatpush.msra.mxu0 0.0
        %2798 = vmatpush.msra.mxu0 0.0
        %2799 = vmatpush.msra.mxu0 0.0
        %2800 = vmatpush.msra.mxu0 0.0
        %2801 = vmatpush.msra.mxu0 0.0
        %2802 = vmatpush.msra.mxu0 0.0
        %2803 = vmatpush.msra.mxu0 0.0
        %2804 = vmatpush.msra.mxu0 0.0
        %2805 = vmatpush.msra.mxu0 0.0
        %2806 = vmatpush.msra.mxu0 0.0
        %2807 = vmatpush.msra.mxu0 0.0
        %2808 = vmatpush.msra.mxu0 %v2694
        %2809 = vmatpush.msra.mxu0 %v1421
        %2810 = vmatmul.f32.gmra.mxu0 %v2681
        %v2811 = vpop.f32.mrf.mxu0
        %v2812 = vadd.f32 0.0, %v2811
        %2813 = vmatmul.f32.gmra.mxu0 %v2684
        %v2814 = vpop.f32.mrf.mxu0
        %v2815 = vadd.f32 0.0, %v2814
        %2816 = vdwg.mxu0
        %2817 = vmatpush.msra.mxu0 0.0
        %2818 = vmatpush.msra.mxu0 0.0
        %2819 = vmatpush.msra.mxu0 0.0
        %2820 = vmatpush.msra.mxu0 0.0
        %2821 = vmatpush.msra.mxu0 0.0
        %2822 = vmatpush.msra.mxu0 0.0
        %2823 = vmatpush.msra.mxu0 0.0
        %2824 = vmatpush.msra.mxu0 0.0
        %2825 = vmatpush.msra.mxu0 0.0
        %2826 = vmatpush.msra.mxu0 0.0
        %2827 = vmatpush.msra.mxu0 0.0
        %2828 = vmatpush.msra.mxu0 0.0
        %2829 = vmatpush.msra.mxu0 0.0
        %2830 = vmatpush.msra.mxu0 0.0
        %2831 = vmatpush.msra.mxu0 %v2696
        %2832 = vmatpush.msra.mxu0 %v1422
        %2833 = vmatmul.f32.gmra.mxu0 %v2681
        %v2834 = vpop.f32.mrf.mxu0
        %v2835 = vadd.f32 0.0, %v2834
        %2836 = vmatmul.f32.gmra.mxu0 %v2684
        %v2837 = vpop.f32.mrf.mxu0
        %v2838 = vadd.f32 0.0, %v2837
        %2839 = vdwg.mxu0
        %2840 = vmatpush.msra.mxu0 0.0
        %2841 = vmatpush.msra.mxu0 0.0
        %2842 = vmatpush.msra.mxu0 0.0
        %2843 = vmatpush.msra.mxu0 0.0
        %2844 = vmatpush.msra.mxu0 0.0
        %2845 = vmatpush.msra.mxu0 0.0
        %2846 = vmatpush.msra.mxu0 0.0
        %2847 = vmatpush.msra.mxu0 0.0
        %2848 = vmatpush.msra.mxu0 0.0
        %2849 = vmatpush.msra.mxu0 0.0
        %2850 = vmatpush.msra.mxu0 0.0
        %2851 = vmatpush.msra.mxu0 0.0
        %2852 = vmatpush.msra.mxu0 0.0
        %2853 = vmatpush.msra.mxu0 0.0
        %2854 = vmatpush.msra.mxu0 %v2698
        %2855 = vmatpush.msra.mxu0 %v1423
        %2856 = vmatmul.f32.gmra.mxu0 %v2681
        %v2857 = vpop.f32.mrf.mxu0
        %v2858 = vadd.f32 0.0, %v2857
        %2859 = vmatmul.f32.gmra.mxu0 %v2684
        %v2860 = vpop.f32.mrf.mxu0
        %v2861 = vadd.f32 0.0, %v2860
        %2862 = vdwg.mxu0
        %2863 = vmatpush.msra.mxu0 0.0
        %2864 = vmatpush.msra.mxu0 0.0
        %2865 = vmatpush.msra.mxu0 0.0
        %2866 = vmatpush.msra.mxu0 0.0
        %2867 = vmatpush.msra.mxu0 0.0
        %2868 = vmatpush.msra.mxu0 0.0
        %2869 = vmatpush.msra.mxu0 0.0
        %2870 = vmatpush.msra.mxu0 0.0
        %2871 = vmatpush.msra.mxu0 0.0
        %2872 = vmatpush.msra.mxu0 0.0
        %2873 = vmatpush.msra.mxu0 0.0
        %2874 = vmatpush.msra.mxu0 0.0
        %2875 = vmatpush.msra.mxu0 0.0
        %2876 = vmatpush.msra.mxu0 0.0
        %2877 = vmatpush.msra.mxu0 %v2700
        %2878 = vmatpush.msra.mxu0 %v1424
        %2879 = vmatmul.f32.gmra.mxu0 %v2681
        %v2880 = vpop.f32.mrf.mxu0
        %v2881 = vadd.f32 0.0, %v2880
        %2882 = vmatmul.f32.gmra.mxu0 %v2684
        %v2883 = vpop.f32.mrf.mxu0
        %v2884 = vadd.f32 0.0, %v2883
        %2885 = vdwg.mxu0
        %v2886 = vadd.f32 %v2661, %v2720
        %v2887 = vadd.f32 %v2662, %v2743
        %v2888 = vadd.f32 %v2663, %v2766
        %v2889 = vadd.f32 %v2664, %v2789
        %v2890 = vadd.f32 %v2665, %v2812
        %v2891 = vadd.f32 %v2666, %v2835
        %v2892 = vadd.f32 %v2667, %v2858
        %v2893 = vadd.f32 %v2668, %v2881
        %v2894 = vadd.f32 %v2669, %v2723
        %v2895 = vadd.f32 %v2670, %v2746
        %v2896 = vadd.f32 %v2671, %v2769
        %v2897 = vadd.f32 %v2672, %v2792
        %v2898 = vadd.f32 %v2673, %v2815
        %v2899 = vadd.f32 %v2674, %v2838
        %v2900 = vadd.f32 %v2675, %v2861
        %v2901 = vadd.f32 %v2676, %v2884
        %2902 = vrot.lane.b32.xlu0 %v1417, 127
        %v2903 = vpop.permute.xlu0 %2902
        %2904 = vrot.lane.b32.xlu0 %v1418, 127
        %v2905 = vpop.permute.xlu0 %2904
        %2906 = vrot.lane.b32.xlu0 %v1419, 127
        %v2907 = vpop.permute.xlu0 %2906
        %2908 = vrot.lane.b32.xlu0 %v1420, 127
        %v2909 = vpop.permute.xlu0 %2908
        %2910 = vrot.lane.b32.xlu0 %v1421, 127
        %v2911 = vpop.permute.xlu0 %2910
        %2912 = vrot.lane.b32.xlu0 %v1422, 127
        %v2913 = vpop.permute.xlu0 %2912
        %2914 = vrot.lane.b32.xlu0 %v1423, 127
        %v2915 = vpop.permute.xlu0 %2914
        %2916 = vrot.lane.b32.xlu0 %v1424, 127
        %v2917 = vpop.permute.xlu0 %2916
        %2918 = vrot.lane.b32.xlu0 %v1425, 127
        %v2919 = vpop.permute.xlu0 %2918
        %2920 = vrot.lane.b32.xlu0 %v1426, 127
        %v2921 = vpop.permute.xlu0 %2920
        %2922 = vrot.lane.b32.xlu0 %v1427, 127
        %v2923 = vpop.permute.xlu0 %2922
        %2924 = vrot.lane.b32.xlu0 %v1428, 127
        %v2925 = vpop.permute.xlu0 %2924
        %2926 = vrot.lane.b32.xlu0 %v1429, 127
        %v2927 = vpop.permute.xlu0 %2926
        %2928 = vrot.lane.b32.xlu0 %v1430, 127
        %v2929 = vpop.permute.xlu0 %2928
        %2930 = vrot.lane.b32.xlu0 %v1431, 127
        %v2931 = vpop.permute.xlu0 %2930
        %2932 = vrot.lane.b32.xlu0 %v1432, 127
        %v2933 = vpop.permute.xlu0 %2932
        %v2934 = vsel %vm807, %v2903, %v2905
        %v2935 = vsel %vm807, %v2905, %v2907
        %v2936 = vsel %vm807, %v2907, %v2909
        %v2937 = vsel %vm807, %v2909, %v2911
        %v2938 = vsel %vm807, %v2911, %v2913
        %v2939 = vsel %vm807, %v2913, %v2915
        %v2940 = vsel %vm807, %v2915, %v2917
        %v2941 = vsel %vm807, %v2919, %v2921
        %v2942 = vsel %vm807, %v2921, %v2923
        %v2943 = vsel %vm807, %v2923, %v2925
        %v2944 = vsel %vm807, %v2925, %v2927
        %v2945 = vsel %vm807, %v2927, %v2929
        %v2946 = vsel %vm807, %v2929, %v2931
        %v2947 = vsel %vm807, %v2931, %v2933
        %v2966 = vsel %vm807, %v2917, %v2903
        %v2967 = vsel %vm807, %v2933, %v2919
        %v2968 = vmul.f32 %v2934, %v830
        %v2969 = vmul.f32 %v2935, %v831
        %v2970 = vmul.f32 %v2936, %v832
        %v2971 = vmul.f32 %v2937, %v833
        %v2972 = vmul.f32 %v2938, %v834
        %v2973 = vmul.f32 %v2939, %v835
        %v2974 = vmul.f32 %v2940, %v836
        %v2975 = vmul.f32 %v2966, %v837
        %v2976 = vmul.f32 %v2941, %v830
        %v2977 = vmul.f32 %v2942, %v831
        %v2978 = vmul.f32 %v2943, %v832
        %v2979 = vmul.f32 %v2944, %v833
        %v2980 = vmul.f32 %v2945, %v834
        %v2981 = vmul.f32 %v2946, %v835
        %v2982 = vmul.f32 %v2947, %v836
        %v2983 = vmul.f32 %v2967, %v837
        %s2984 = scalar_lea.vmem %s4, 80
        %v2985 = vld [vmem:[%s2984] sm:$0xff]
        %v2986 = vld [vmem:[%s2984 + $0x8] sm:$0xf]
        %v2988 = vsel %vm1618, %v2985, 0
        %v2991 = vsel %vm1618, %v2986, 0
        %v2994 = vsel %vm1292, %v2976, 0
        %v2997 = vsel %vm1292, %v2977, 0
        %v3000 = vsel %vm1292, %v2978, 0
        %v3003 = vsel %vm1292, %v2979, 0
        %v3006 = vsel %vm1292, %v2980, 0
        %v3009 = vsel %vm1292, %v2981, 0
        %v3012 = vsel %vm1292, %v2982, 0
        %v3015 = vsel %vm1292, %v2983, 0
        %3017 = vmatpush.msra.mxu0 0.0
        %3018 = vmatpush.msra.mxu0 0.0
        %3019 = vmatpush.msra.mxu0 0.0
        %3020 = vmatpush.msra.mxu0 0.0
        %3021 = vmatpush.msra.mxu0 0.0
        %3022 = vmatpush.msra.mxu0 0.0
        %3023 = vmatpush.msra.mxu0 0.0
        %3024 = vmatpush.msra.mxu0 0.0
        %3025 = vmatpush.msra.mxu0 0.0
        %3026 = vmatpush.msra.mxu0 0.0
        %3027 = vmatpush.msra.mxu0 0.0
        %3028 = vmatpush.msra.mxu0 0.0
        %3029 = vmatpush.msra.mxu0 0.0
        %3030 = vmatpush.msra.mxu0 0.0
        %3031 = vmatpush.msra.mxu0 %v2994
        %3032 = vmatpush.msra.mxu0 %v2968
        %3033 = vmatmul.f32.gmra.mxu0 %v2988
        %v3034 = vpop.f32.mrf.mxu0
        %v3035 = vadd.f32 0.0, %v3034
        %3036 = vmatmul.f32.gmra.mxu0 %v2991
        %v3037 = vpop.f32.mrf.mxu0
        %v3038 = vadd.f32 0.0, %v3037
        %3039 = vdwg.mxu0
        %3040 = vmatpush.msra.mxu0 0.0
        %3041 = vmatpush.msra.mxu0 0.0
        %3042 = vmatpush.msra.mxu0 0.0
        %3043 = vmatpush.msra.mxu0 0.0
        %3044 = vmatpush.msra.mxu0 0.0
        %3045 = vmatpush.msra.mxu0 0.0
        %3046 = vmatpush.msra.mxu0 0.0
        %3047 = vmatpush.msra.mxu0 0.0
        %3048 = vmatpush.msra.mxu0 0.0
        %3049 = vmatpush.msra.mxu0 0.0
        %3050 = vmatpush.msra.mxu0 0.0
        %3051 = vmatpush.msra.mxu0 0.0
        %3052 = vmatpush.msra.mxu0 0.0
        %3053 = vmatpush.msra.mxu0 0.0
        %3054 = vmatpush.msra.mxu0 %v2997
        %3055 = vmatpush.msra.mxu0 %v2969
        %3056 = vmatmul.f32.gmra.mxu0 %v2988
        %v3057 = vpop.f32.mrf.mxu0
        %v3058 = vadd.f32 0.0, %v3057
        %3059 = vmatmul.f32.gmra.mxu0 %v2991
        %v3060 = vpop.f32.mrf.mxu0
        %v3061 = vadd.f32 0.0, %v3060
        %3062 = vdwg.mxu0
        %3063 = vmatpush.msra.mxu0 0.0
        %3064 = vmatpush.msra.mxu0 0.0
        %3065 = vmatpush.msra.mxu0 0.0
        %3066 = vmatpush.msra.mxu0 0.0
        %3067 = vmatpush.msra.mxu0 0.0
        %3068 = vmatpush.msra.mxu0 0.0
        %3069 = vmatpush.msra.mxu0 0.0
        %3070 = vmatpush.msra.mxu0 0.0
        %3071 = vmatpush.msra.mxu0 0.0
        %3072 = vmatpush.msra.mxu0 0.0
        %3073 = vmatpush.msra.mxu0 0.0
        %3074 = vmatpush.msra.mxu0 0.0
        %3075 = vmatpush.msra.mxu0 0.0
        %3076 = vmatpush.msra.mxu0 0.0
        %3077 = vmatpush.msra.mxu0 %v3000
        %3078 = vmatpush.msra.mxu0 %v2970
        %3079 = vmatmul.f32.gmra.mxu0 %v2988
        %v3080 = vpop.f32.mrf.mxu0
        %v3081 = vadd.f32 0.0, %v3080
        %3082 = vmatmul.f32.gmra.mxu0 %v2991
        %v3083 = vpop.f32.mrf.mxu0
        %v3084 = vadd.f32 0.0, %v3083
        %3085 = vdwg.mxu0
        %3086 = vmatpush.msra.mxu0 0.0
        %3087 = vmatpush.msra.mxu0 0.0
        %3088 = vmatpush.msra.mxu0 0.0
        %3089 = vmatpush.msra.mxu0 0.0
        %3090 = vmatpush.msra.mxu0 0.0
        %3091 = vmatpush.msra.mxu0 0.0
        %3092 = vmatpush.msra.mxu0 0.0
        %3093 = vmatpush.msra.mxu0 0.0
        %3094 = vmatpush.msra.mxu0 0.0
        %3095 = vmatpush.msra.mxu0 0.0
        %3096 = vmatpush.msra.mxu0 0.0
        %3097 = vmatpush.msra.mxu0 0.0
        %3098 = vmatpush.msra.mxu0 0.0
        %3099 = vmatpush.msra.mxu0 0.0
        %3100 = vmatpush.msra.mxu0 %v3003
        %3101 = vmatpush.msra.mxu0 %v2971
        %3102 = vmatmul.f32.gmra.mxu0 %v2988
        %v3103 = vpop.f32.mrf.mxu0
        %v3104 = vadd.f32 0.0, %v3103
        %3105 = vmatmul.f32.gmra.mxu0 %v2991
        %v3106 = vpop.f32.mrf.mxu0
        %v3107 = vadd.f32 0.0, %v3106
        %3108 = vdwg.mxu0
        %3109 = vmatpush.msra.mxu0 0.0
        %3110 = vmatpush.msra.mxu0 0.0
        %3111 = vmatpush.msra.mxu0 0.0
        %3112 = vmatpush.msra.mxu0 0.0
        %3113 = vmatpush.msra.mxu0 0.0
        %3114 = vmatpush.msra.mxu0 0.0
        %3115 = vmatpush.msra.mxu0 0.0
        %3116 = vmatpush.msra.mxu0 0.0
        %3117 = vmatpush.msra.mxu0 0.0
        %3118 = vmatpush.msra.mxu0 0.0
        %3119 = vmatpush.msra.mxu0 0.0
        %3120 = vmatpush.msra.mxu0 0.0
        %3121 = vmatpush.msra.mxu0 0.0
        %3122 = vmatpush.msra.mxu0 0.0
        %3123 = vmatpush.msra.mxu0 %v3006
        %3124 = vmatpush.msra.mxu0 %v2972
        %3125 = vmatmul.f32.gmra.mxu0 %v2988
        %v3126 = vpop.f32.mrf.mxu0
        %v3127 = vadd.f32 0.0, %v3126
        %3128 = vmatmul.f32.gmra.mxu0 %v2991
        %v3129 = vpop.f32.mrf.mxu0
        %v3130 = vadd.f32 0.0, %v3129
        %3131 = vdwg.mxu0
        %3132 = vmatpush.msra.mxu0 0.0
        %3133 = vmatpush.msra.mxu0 0.0
        %3134 = vmatpush.msra.mxu0 0.0
        %3135 = vmatpush.msra.mxu0 0.0
        %3136 = vmatpush.msra.mxu0 0.0
        %3137 = vmatpush.msra.mxu0 0.0
        %3138 = vmatpush.msra.mxu0 0.0
        %3139 = vmatpush.msra.mxu0 0.0
        %3140 = vmatpush.msra.mxu0 0.0
        %3141 = vmatpush.msra.mxu0 0.0
        %3142 = vmatpush.msra.mxu0 0.0
        %3143 = vmatpush.msra.mxu0 0.0
        %3144 = vmatpush.msra.mxu0 0.0
        %3145 = vmatpush.msra.mxu0 0.0
        %3146 = vmatpush.msra.mxu0 %v3009
        %3147 = vmatpush.msra.mxu0 %v2973
        %3148 = vmatmul.f32.gmra.mxu0 %v2988
        %v3149 = vpop.f32.mrf.mxu0
        %v3150 = vadd.f32 0.0, %v3149
        %3151 = vmatmul.f32.gmra.mxu0 %v2991
        %v3152 = vpop.f32.mrf.mxu0
        %v3153 = vadd.f32 0.0, %v3152
        %3154 = vdwg.mxu0
        %3155 = vmatpush.msra.mxu0 0.0
        %3156 = vmatpush.msra.mxu0 0.0
        %3157 = vmatpush.msra.mxu0 0.0
        %3158 = vmatpush.msra.mxu0 0.0
        %3159 = vmatpush.msra.mxu0 0.0
        %3160 = vmatpush.msra.mxu0 0.0
        %3161 = vmatpush.msra.mxu0 0.0
        %3162 = vmatpush.msra.mxu0 0.0
        %3163 = vmatpush.msra.mxu0 0.0
        %3164 = vmatpush.msra.mxu0 0.0
        %3165 = vmatpush.msra.mxu0 0.0
        %3166 = vmatpush.msra.mxu0 0.0
        %3167 = vmatpush.msra.mxu0 0.0
        %3168 = vmatpush.msra.mxu0 0.0
        %3169 = vmatpush.msra.mxu0 %v3012
        %3170 = vmatpush.msra.mxu0 %v2974
        %3171 = vmatmul.f32.gmra.mxu0 %v2988
        %v3172 = vpop.f32.mrf.mxu0
        %v3173 = vadd.f32 0.0, %v3172
        %3174 = vmatmul.f32.gmra.mxu0 %v2991
        %v3175 = vpop.f32.mrf.mxu0
        %v3176 = vadd.f32 0.0, %v3175
        %3177 = vdwg.mxu0
        %3178 = vmatpush.msra.mxu0 0.0
        %3179 = vmatpush.msra.mxu0 0.0
        %3180 = vmatpush.msra.mxu0 0.0
        %3181 = vmatpush.msra.mxu0 0.0
        %3182 = vmatpush.msra.mxu0 0.0
        %3183 = vmatpush.msra.mxu0 0.0
        %3184 = vmatpush.msra.mxu0 0.0
        %3185 = vmatpush.msra.mxu0 0.0
        %3186 = vmatpush.msra.mxu0 0.0
        %3187 = vmatpush.msra.mxu0 0.0
        %3188 = vmatpush.msra.mxu0 0.0
        %3189 = vmatpush.msra.mxu0 0.0
        %3190 = vmatpush.msra.mxu0 0.0
        %3191 = vmatpush.msra.mxu0 0.0
        %3192 = vmatpush.msra.mxu0 %v3015
        %3193 = vmatpush.msra.mxu0 %v2975
        %3194 = vmatmul.f32.gmra.mxu0 %v2988
        %v3195 = vpop.f32.mrf.mxu0
        %v3196 = vadd.f32 0.0, %v3195
        %3197 = vmatmul.f32.gmra.mxu0 %v2991
        %v3198 = vpop.f32.mrf.mxu0
        %v3199 = vadd.f32 0.0, %v3198
        %3200 = vdwg.mxu0
        %v3201 = vadd.f32 %v2886, %v3035
        %v3202 = vadd.f32 %v2887, %v3058
        %v3203 = vadd.f32 %v2888, %v3081
        %v3204 = vadd.f32 %v2889, %v3104
        %v3205 = vadd.f32 %v2890, %v3127
        %v3206 = vadd.f32 %v2891, %v3150
        %v3207 = vadd.f32 %v2892, %v3173
        %v3208 = vadd.f32 %v2893, %v3196
        %v3209 = vadd.f32 %v2894, %v3038
        %v3210 = vadd.f32 %v2895, %v3061
        %v3211 = vadd.f32 %v2896, %v3084
        %v3212 = vadd.f32 %v2897, %v3107
        %v3213 = vadd.f32 %v2898, %v3130
        %v3214 = vadd.f32 %v2899, %v3153
        %v3215 = vadd.f32 %v2900, %v3176
        %v3216 = vadd.f32 %v2901, %v3199
        %3217 = vrot.lane.b32.xlu0 %v1417, 97
        %v3218 = vpop.permute.xlu0 %3217
        %3219 = vrot.lane.b32.xlu0 %v1418, 97
        %v3220 = vpop.permute.xlu0 %3219
        %3221 = vrot.lane.b32.xlu0 %v1419, 97
        %v3222 = vpop.permute.xlu0 %3221
        %3223 = vrot.lane.b32.xlu0 %v1420, 97
        %v3224 = vpop.permute.xlu0 %3223
        %3225 = vrot.lane.b32.xlu0 %v1421, 97
        %v3226 = vpop.permute.xlu0 %3225
        %3227 = vrot.lane.b32.xlu0 %v1422, 97
        %v3228 = vpop.permute.xlu0 %3227
        %3229 = vrot.lane.b32.xlu0 %v1423, 97
        %v3230 = vpop.permute.xlu0 %3229
        %3231 = vrot.lane.b32.xlu0 %v1424, 97
        %v3232 = vpop.permute.xlu0 %3231
        %3233 = vrot.lane.b32.xlu0 %v1425, 97
        %v3234 = vpop.permute.xlu0 %3233
        %3235 = vrot.lane.b32.xlu0 %v1426, 97
        %v3236 = vpop.permute.xlu0 %3235
        %3237 = vrot.lane.b32.xlu0 %v1427, 97
        %v3238 = vpop.permute.xlu0 %3237
        %3239 = vrot.lane.b32.xlu0 %v1428, 97
        %v3240 = vpop.permute.xlu0 %3239
        %3241 = vrot.lane.b32.xlu0 %v1429, 97
        %v3242 = vpop.permute.xlu0 %3241
        %3243 = vrot.lane.b32.xlu0 %v1430, 97
        %v3244 = vpop.permute.xlu0 %3243
        %3245 = vrot.lane.b32.xlu0 %v1431, 97
        %v3246 = vpop.permute.xlu0 %3245
        %3247 = vrot.lane.b32.xlu0 %v1432, 97
        %v3248 = vpop.permute.xlu0 %3247
        %v3249 = vsel %vm923, %v3218, %v3220
        %v3250 = vsel %vm923, %v3220, %v3222
        %v3251 = vsel %vm923, %v3222, %v3224
        %v3252 = vsel %vm923, %v3224, %v3226
        %v3253 = vsel %vm923, %v3226, %v3228
        %v3254 = vsel %vm923, %v3228, %v3230
        %v3255 = vsel %vm923, %v3230, %v3232
        %v3256 = vsel %vm923, %v3234, %v3236
        %v3257 = vsel %vm923, %v3236, %v3238
        %v3258 = vsel %vm923, %v3238, %v3240
        %v3259 = vsel %vm923, %v3240, %v3242
        %v3260 = vsel %vm923, %v3242, %v3244
        %v3261 = vsel %vm923, %v3244, %v3246
        %v3262 = vsel %vm923, %v3246, %v3248
        %v3281 = vsel %vm923, %v3232, %v3218
        %v3282 = vsel %vm923, %v3248, %v3234
        %v3283 = vmul.f32 %v3249, %v946
        %v3284 = vmul.f32 %v3250, %v947
        %v3285 = vmul.f32 %v3251, %v948
        %v3286 = vmul.f32 %v3252, %v949
        %v3287 = vmul.f32 %v3253, %v950
        %v3288 = vmul.f32 %v3254, %v951
        %v3289 = vmul.f32 %v3255, %v952
        %v3290 = vmul.f32 %v3281, %v953
        %v3291 = vmul.f32 %v3256, %v946
        %v3292 = vmul.f32 %v3257, %v947
        %v3293 = vmul.f32 %v3258, %v948
        %v3294 = vmul.f32 %v3259, %v949
        %v3295 = vmul.f32 %v3260, %v950
        %v3296 = vmul.f32 %v3261, %v951
        %v3297 = vmul.f32 %v3262, %v952
        %v3298 = vmul.f32 %v3282, %v953
        %s3299 = scalar_lea.vmem %s4, 96
        %v3300 = vld [vmem:[%s3299] sm:$0xff]
        %v3301 = vld [vmem:[%s3299 + $0x8] sm:$0xf]
        %v3303 = vsel %vm1618, %v3300, 0
        %v3306 = vsel %vm1618, %v3301, 0
        %v3309 = vsel %vm1292, %v3291, 0
        %v3312 = vsel %vm1292, %v3292, 0
        %v3315 = vsel %vm1292, %v3293, 0
        %v3318 = vsel %vm1292, %v3294, 0
        %v3321 = vsel %vm1292, %v3295, 0
        %v3324 = vsel %vm1292, %v3296, 0
        %v3327 = vsel %vm1292, %v3297, 0
        %v3330 = vsel %vm1292, %v3298, 0
        %3332 = vmatpush.msra.mxu0 0.0
        %3333 = vmatpush.msra.mxu0 0.0
        %3334 = vmatpush.msra.mxu0 0.0
        %3335 = vmatpush.msra.mxu0 0.0
        %3336 = vmatpush.msra.mxu0 0.0
        %3337 = vmatpush.msra.mxu0 0.0
        %3338 = vmatpush.msra.mxu0 0.0
        %3339 = vmatpush.msra.mxu0 0.0
        %3340 = vmatpush.msra.mxu0 0.0
        %3341 = vmatpush.msra.mxu0 0.0
        %3342 = vmatpush.msra.mxu0 0.0
        %3343 = vmatpush.msra.mxu0 0.0
        %3344 = vmatpush.msra.mxu0 0.0
        %3345 = vmatpush.msra.mxu0 0.0
        %3346 = vmatpush.msra.mxu0 %v3309
        %3347 = vmatpush.msra.mxu0 %v3283
        %3348 = vmatmul.f32.gmra.mxu0 %v3303
        %v3349 = vpop.f32.mrf.mxu0
        %v3350 = vadd.f32 0.0, %v3349
        %3351 = vmatmul.f32.gmra.mxu0 %v3306
        %v3352 = vpop.f32.mrf.mxu0
        %v3353 = vadd.f32 0.0, %v3352
        %3354 = vdwg.mxu0
        %3355 = vmatpush.msra.mxu0 0.0
        %3356 = vmatpush.msra.mxu0 0.0
        %3357 = vmatpush.msra.mxu0 0.0
        %3358 = vmatpush.msra.mxu0 0.0
        %3359 = vmatpush.msra.mxu0 0.0
        %3360 = vmatpush.msra.mxu0 0.0
        %3361 = vmatpush.msra.mxu0 0.0
        %3362 = vmatpush.msra.mxu0 0.0
        %3363 = vmatpush.msra.mxu0 0.0
        %3364 = vmatpush.msra.mxu0 0.0
        %3365 = vmatpush.msra.mxu0 0.0
        %3366 = vmatpush.msra.mxu0 0.0
        %3367 = vmatpush.msra.mxu0 0.0
        %3368 = vmatpush.msra.mxu0 0.0
        %3369 = vmatpush.msra.mxu0 %v3312
        %3370 = vmatpush.msra.mxu0 %v3284
        %3371 = vmatmul.f32.gmra.mxu0 %v3303
        %v3372 = vpop.f32.mrf.mxu0
        %v3373 = vadd.f32 0.0, %v3372
        %3374 = vmatmul.f32.gmra.mxu0 %v3306
        %v3375 = vpop.f32.mrf.mxu0
        %v3376 = vadd.f32 0.0, %v3375
        %3377 = vdwg.mxu0
        %3378 = vmatpush.msra.mxu0 0.0
        %3379 = vmatpush.msra.mxu0 0.0
        %3380 = vmatpush.msra.mxu0 0.0
        %3381 = vmatpush.msra.mxu0 0.0
        %3382 = vmatpush.msra.mxu0 0.0
        %3383 = vmatpush.msra.mxu0 0.0
        %3384 = vmatpush.msra.mxu0 0.0
        %3385 = vmatpush.msra.mxu0 0.0
        %3386 = vmatpush.msra.mxu0 0.0
        %3387 = vmatpush.msra.mxu0 0.0
        %3388 = vmatpush.msra.mxu0 0.0
        %3389 = vmatpush.msra.mxu0 0.0
        %3390 = vmatpush.msra.mxu0 0.0
        %3391 = vmatpush.msra.mxu0 0.0
        %3392 = vmatpush.msra.mxu0 %v3315
        %3393 = vmatpush.msra.mxu0 %v3285
        %3394 = vmatmul.f32.gmra.mxu0 %v3303
        %v3395 = vpop.f32.mrf.mxu0
        %v3396 = vadd.f32 0.0, %v3395
        %3397 = vmatmul.f32.gmra.mxu0 %v3306
        %v3398 = vpop.f32.mrf.mxu0
        %v3399 = vadd.f32 0.0, %v3398
        %3400 = vdwg.mxu0
        %3401 = vmatpush.msra.mxu0 0.0
        %3402 = vmatpush.msra.mxu0 0.0
        %3403 = vmatpush.msra.mxu0 0.0
        %3404 = vmatpush.msra.mxu0 0.0
        %3405 = vmatpush.msra.mxu0 0.0
        %3406 = vmatpush.msra.mxu0 0.0
        %3407 = vmatpush.msra.mxu0 0.0
        %3408 = vmatpush.msra.mxu0 0.0
        %3409 = vmatpush.msra.mxu0 0.0
        %3410 = vmatpush.msra.mxu0 0.0
        %3411 = vmatpush.msra.mxu0 0.0
        %3412 = vmatpush.msra.mxu0 0.0
        %3413 = vmatpush.msra.mxu0 0.0
        %3414 = vmatpush.msra.mxu0 0.0
        %3415 = vmatpush.msra.mxu0 %v3318
        %3416 = vmatpush.msra.mxu0 %v3286
        %3417 = vmatmul.f32.gmra.mxu0 %v3303
        %v3418 = vpop.f32.mrf.mxu0
        %v3419 = vadd.f32 0.0, %v3418
        %3420 = vmatmul.f32.gmra.mxu0 %v3306
        %v3421 = vpop.f32.mrf.mxu0
        %v3422 = vadd.f32 0.0, %v3421
        %3423 = vdwg.mxu0
        %3424 = vmatpush.msra.mxu0 0.0
        %3425 = vmatpush.msra.mxu0 0.0
        %3426 = vmatpush.msra.mxu0 0.0
        %3427 = vmatpush.msra.mxu0 0.0
        %3428 = vmatpush.msra.mxu0 0.0
        %3429 = vmatpush.msra.mxu0 0.0
        %3430 = vmatpush.msra.mxu0 0.0
        %3431 = vmatpush.msra.mxu0 0.0
        %3432 = vmatpush.msra.mxu0 0.0
        %3433 = vmatpush.msra.mxu0 0.0
        %3434 = vmatpush.msra.mxu0 0.0
        %3435 = vmatpush.msra.mxu0 0.0
        %3436 = vmatpush.msra.mxu0 0.0
        %3437 = vmatpush.msra.mxu0 0.0
        %3438 = vmatpush.msra.mxu0 %v3321
        %3439 = vmatpush.msra.mxu0 %v3287
        %3440 = vmatmul.f32.gmra.mxu0 %v3303
        %v3441 = vpop.f32.mrf.mxu0
        %v3442 = vadd.f32 0.0, %v3441
        %3443 = vmatmul.f32.gmra.mxu0 %v3306
        %v3444 = vpop.f32.mrf.mxu0
        %v3445 = vadd.f32 0.0, %v3444
        %3446 = vdwg.mxu0
        %3447 = vmatpush.msra.mxu0 0.0
        %3448 = vmatpush.msra.mxu0 0.0
        %3449 = vmatpush.msra.mxu0 0.0
        %3450 = vmatpush.msra.mxu0 0.0
        %3451 = vmatpush.msra.mxu0 0.0
        %3452 = vmatpush.msra.mxu0 0.0
        %3453 = vmatpush.msra.mxu0 0.0
        %3454 = vmatpush.msra.mxu0 0.0
        %3455 = vmatpush.msra.mxu0 0.0
        %3456 = vmatpush.msra.mxu0 0.0
        %3457 = vmatpush.msra.mxu0 0.0
        %3458 = vmatpush.msra.mxu0 0.0
        %3459 = vmatpush.msra.mxu0 0.0
        %3460 = vmatpush.msra.mxu0 0.0
        %3461 = vmatpush.msra.mxu0 %v3324
        %3462 = vmatpush.msra.mxu0 %v3288
        %3463 = vmatmul.f32.gmra.mxu0 %v3303
        %v3464 = vpop.f32.mrf.mxu0
        %v3465 = vadd.f32 0.0, %v3464
        %3466 = vmatmul.f32.gmra.mxu0 %v3306
        %v3467 = vpop.f32.mrf.mxu0
        %v3468 = vadd.f32 0.0, %v3467
        %3469 = vdwg.mxu0
        %3470 = vmatpush.msra.mxu0 0.0
        %3471 = vmatpush.msra.mxu0 0.0
        %3472 = vmatpush.msra.mxu0 0.0
        %3473 = vmatpush.msra.mxu0 0.0
        %3474 = vmatpush.msra.mxu0 0.0
        %3475 = vmatpush.msra.mxu0 0.0
        %3476 = vmatpush.msra.mxu0 0.0
        %3477 = vmatpush.msra.mxu0 0.0
        %3478 = vmatpush.msra.mxu0 0.0
        %3479 = vmatpush.msra.mxu0 0.0
        %3480 = vmatpush.msra.mxu0 0.0
        %3481 = vmatpush.msra.mxu0 0.0
        %3482 = vmatpush.msra.mxu0 0.0
        %3483 = vmatpush.msra.mxu0 0.0
        %3484 = vmatpush.msra.mxu0 %v3327
        %3485 = vmatpush.msra.mxu0 %v3289
        %3486 = vmatmul.f32.gmra.mxu0 %v3303
        %v3487 = vpop.f32.mrf.mxu0
        %v3488 = vadd.f32 0.0, %v3487
        %3489 = vmatmul.f32.gmra.mxu0 %v3306
        %v3490 = vpop.f32.mrf.mxu0
        %v3491 = vadd.f32 0.0, %v3490
        %3492 = vdwg.mxu0
        %3493 = vmatpush.msra.mxu0 0.0
        %3494 = vmatpush.msra.mxu0 0.0
        %3495 = vmatpush.msra.mxu0 0.0
        %3496 = vmatpush.msra.mxu0 0.0
        %3497 = vmatpush.msra.mxu0 0.0
        %3498 = vmatpush.msra.mxu0 0.0
        %3499 = vmatpush.msra.mxu0 0.0
        %3500 = vmatpush.msra.mxu0 0.0
        %3501 = vmatpush.msra.mxu0 0.0
        %3502 = vmatpush.msra.mxu0 0.0
        %3503 = vmatpush.msra.mxu0 0.0
        %3504 = vmatpush.msra.mxu0 0.0
        %3505 = vmatpush.msra.mxu0 0.0
        %3506 = vmatpush.msra.mxu0 0.0
        %3507 = vmatpush.msra.mxu0 %v3330
        %3508 = vmatpush.msra.mxu0 %v3290
        %3509 = vmatmul.f32.gmra.mxu0 %v3303
        %v3510 = vpop.f32.mrf.mxu0
        %v3511 = vadd.f32 0.0, %v3510
        %3512 = vmatmul.f32.gmra.mxu0 %v3306
        %v3513 = vpop.f32.mrf.mxu0
        %v3514 = vadd.f32 0.0, %v3513
        %3515 = vdwg.mxu0
        %v3516 = vadd.f32 %v3201, %v3350
        %v3517 = vadd.f32 %v3202, %v3373
        %v3518 = vadd.f32 %v3203, %v3396
        %v3519 = vadd.f32 %v3204, %v3419
        %v3520 = vadd.f32 %v3205, %v3442
        %v3521 = vadd.f32 %v3206, %v3465
        %v3522 = vadd.f32 %v3207, %v3488
        %v3523 = vadd.f32 %v3208, %v3511
        %v3524 = vadd.f32 %v3209, %v3353
        %v3525 = vadd.f32 %v3210, %v3376
        %v3526 = vadd.f32 %v3211, %v3399
        %v3527 = vadd.f32 %v3212, %v3422
        %v3528 = vadd.f32 %v3213, %v3445
        %v3529 = vadd.f32 %v3214, %v3468
        %v3530 = vadd.f32 %v3215, %v3491
        %v3531 = vadd.f32 %v3216, %v3514
        %3532 = vrot.lane.b32.xlu0 %v1417, 96
        %v3533 = vpop.permute.xlu0 %3532
        %3534 = vrot.lane.b32.xlu0 %v1418, 96
        %v3535 = vpop.permute.xlu0 %3534
        %3536 = vrot.lane.b32.xlu0 %v1419, 96
        %v3537 = vpop.permute.xlu0 %3536
        %3538 = vrot.lane.b32.xlu0 %v1420, 96
        %v3539 = vpop.permute.xlu0 %3538
        %3540 = vrot.lane.b32.xlu0 %v1421, 96
        %v3541 = vpop.permute.xlu0 %3540
        %3542 = vrot.lane.b32.xlu0 %v1422, 96
        %v3543 = vpop.permute.xlu0 %3542
        %3544 = vrot.lane.b32.xlu0 %v1423, 96
        %v3545 = vpop.permute.xlu0 %3544
        %3546 = vrot.lane.b32.xlu0 %v1424, 96
        %v3547 = vpop.permute.xlu0 %3546
        %3548 = vrot.lane.b32.xlu0 %v1425, 96
        %v3549 = vpop.permute.xlu0 %3548
        %3550 = vrot.lane.b32.xlu0 %v1426, 96
        %v3551 = vpop.permute.xlu0 %3550
        %3552 = vrot.lane.b32.xlu0 %v1427, 96
        %v3553 = vpop.permute.xlu0 %3552
        %3554 = vrot.lane.b32.xlu0 %v1428, 96
        %v3555 = vpop.permute.xlu0 %3554
        %3556 = vrot.lane.b32.xlu0 %v1429, 96
        %v3557 = vpop.permute.xlu0 %3556
        %3558 = vrot.lane.b32.xlu0 %v1430, 96
        %v3559 = vpop.permute.xlu0 %3558
        %3560 = vrot.lane.b32.xlu0 %v1431, 96
        %v3561 = vpop.permute.xlu0 %3560
        %3562 = vrot.lane.b32.xlu0 %v1432, 96
        %v3563 = vpop.permute.xlu0 %3562
        %v3564 = vsel %vm1039, %v3533, %v3535
        %v3565 = vsel %vm1039, %v3535, %v3537
        %v3566 = vsel %vm1039, %v3537, %v3539
        %v3567 = vsel %vm1039, %v3539, %v3541
        %v3568 = vsel %vm1039, %v3541, %v3543
        %v3569 = vsel %vm1039, %v3543, %v3545
        %v3570 = vsel %vm1039, %v3545, %v3547
        %v3571 = vsel %vm1039, %v3549, %v3551
        %v3572 = vsel %vm1039, %v3551, %v3553
        %v3573 = vsel %vm1039, %v3553, %v3555
        %v3574 = vsel %vm1039, %v3555, %v3557
        %v3575 = vsel %vm1039, %v3557, %v3559
        %v3576 = vsel %vm1039, %v3559, %v3561
        %v3577 = vsel %vm1039, %v3561, %v3563
        %v3596 = vsel %vm1039, %v3547, %v3533
        %v3597 = vsel %vm1039, %v3563, %v3549
        %v3598 = vmul.f32 %v3564, %v1062
        %v3599 = vmul.f32 %v3565, %v1063
        %v3600 = vmul.f32 %v3566, %v1064
        %v3601 = vmul.f32 %v3567, %v1065
        %v3602 = vmul.f32 %v3568, %v1066
        %v3603 = vmul.f32 %v3569, %v1067
        %v3604 = vmul.f32 %v3570, %v1068
        %v3605 = vmul.f32 %v3596, %v1069
        %v3606 = vmul.f32 %v3571, %v1062
        %v3607 = vmul.f32 %v3572, %v1063
        %v3608 = vmul.f32 %v3573, %v1064
        %v3609 = vmul.f32 %v3574, %v1065
        %v3610 = vmul.f32 %v3575, %v1066
        %v3611 = vmul.f32 %v3576, %v1067
        %v3612 = vmul.f32 %v3577, %v1068
        %v3613 = vmul.f32 %v3597, %v1069
        %s3614 = scalar_lea.vmem %s4, 112
        %v3615 = vld [vmem:[%s3614] sm:$0xff]
        %v3616 = vld [vmem:[%s3614 + $0x8] sm:$0xf]
        %v3618 = vsel %vm1618, %v3615, 0
        %v3621 = vsel %vm1618, %v3616, 0
        %v3624 = vsel %vm1292, %v3606, 0
        %v3627 = vsel %vm1292, %v3607, 0
        %v3630 = vsel %vm1292, %v3608, 0
        %v3633 = vsel %vm1292, %v3609, 0
        %v3636 = vsel %vm1292, %v3610, 0
        %v3639 = vsel %vm1292, %v3611, 0
        %v3642 = vsel %vm1292, %v3612, 0
        %v3645 = vsel %vm1292, %v3613, 0
        %3647 = vmatpush.msra.mxu0 0.0
        %3648 = vmatpush.msra.mxu0 0.0
        %3649 = vmatpush.msra.mxu0 0.0
        %3650 = vmatpush.msra.mxu0 0.0
        %3651 = vmatpush.msra.mxu0 0.0
        %3652 = vmatpush.msra.mxu0 0.0
        %3653 = vmatpush.msra.mxu0 0.0
        %3654 = vmatpush.msra.mxu0 0.0
        %3655 = vmatpush.msra.mxu0 0.0
        %3656 = vmatpush.msra.mxu0 0.0
        %3657 = vmatpush.msra.mxu0 0.0
        %3658 = vmatpush.msra.mxu0 0.0
        %3659 = vmatpush.msra.mxu0 0.0
        %3660 = vmatpush.msra.mxu0 0.0
        %3661 = vmatpush.msra.mxu0 %v3624
        %3662 = vmatpush.msra.mxu0 %v3598
        %3663 = vmatmul.f32.gmra.mxu0 %v3618
        %v3664 = vpop.f32.mrf.mxu0
        %v3665 = vadd.f32 0.0, %v3664
        %3666 = vmatmul.f32.gmra.mxu0 %v3621
        %v3667 = vpop.f32.mrf.mxu0
        %v3668 = vadd.f32 0.0, %v3667
        %3669 = vdwg.mxu0
        %3670 = vmatpush.msra.mxu0 0.0
        %3671 = vmatpush.msra.mxu0 0.0
        %3672 = vmatpush.msra.mxu0 0.0
        %3673 = vmatpush.msra.mxu0 0.0
        %3674 = vmatpush.msra.mxu0 0.0
        %3675 = vmatpush.msra.mxu0 0.0
        %3676 = vmatpush.msra.mxu0 0.0
        %3677 = vmatpush.msra.mxu0 0.0
        %3678 = vmatpush.msra.mxu0 0.0
        %3679 = vmatpush.msra.mxu0 0.0
        %3680 = vmatpush.msra.mxu0 0.0
        %3681 = vmatpush.msra.mxu0 0.0
        %3682 = vmatpush.msra.mxu0 0.0
        %3683 = vmatpush.msra.mxu0 0.0
        %3684 = vmatpush.msra.mxu0 %v3627
        %3685 = vmatpush.msra.mxu0 %v3599
        %3686 = vmatmul.f32.gmra.mxu0 %v3618
        %v3687 = vpop.f32.mrf.mxu0
        %v3688 = vadd.f32 0.0, %v3687
        %3689 = vmatmul.f32.gmra.mxu0 %v3621
        %v3690 = vpop.f32.mrf.mxu0
        %v3691 = vadd.f32 0.0, %v3690
        %3692 = vdwg.mxu0
        %3693 = vmatpush.msra.mxu0 0.0
        %3694 = vmatpush.msra.mxu0 0.0
        %3695 = vmatpush.msra.mxu0 0.0
        %3696 = vmatpush.msra.mxu0 0.0
        %3697 = vmatpush.msra.mxu0 0.0
        %3698 = vmatpush.msra.mxu0 0.0
        %3699 = vmatpush.msra.mxu0 0.0
        %3700 = vmatpush.msra.mxu0 0.0
        %3701 = vmatpush.msra.mxu0 0.0
        %3702 = vmatpush.msra.mxu0 0.0
        %3703 = vmatpush.msra.mxu0 0.0
        %3704 = vmatpush.msra.mxu0 0.0
        %3705 = vmatpush.msra.mxu0 0.0
        %3706 = vmatpush.msra.mxu0 0.0
        %3707 = vmatpush.msra.mxu0 %v3630
        %3708 = vmatpush.msra.mxu0 %v3600
        %3709 = vmatmul.f32.gmra.mxu0 %v3618
        %v3710 = vpop.f32.mrf.mxu0
        %v3711 = vadd.f32 0.0, %v3710
        %3712 = vmatmul.f32.gmra.mxu0 %v3621
        %v3713 = vpop.f32.mrf.mxu0
        %v3714 = vadd.f32 0.0, %v3713
        %3715 = vdwg.mxu0
        %3716 = vmatpush.msra.mxu0 0.0
        %3717 = vmatpush.msra.mxu0 0.0
        %3718 = vmatpush.msra.mxu0 0.0
        %3719 = vmatpush.msra.mxu0 0.0
        %3720 = vmatpush.msra.mxu0 0.0
        %3721 = vmatpush.msra.mxu0 0.0
        %3722 = vmatpush.msra.mxu0 0.0
        %3723 = vmatpush.msra.mxu0 0.0
        %3724 = vmatpush.msra.mxu0 0.0
        %3725 = vmatpush.msra.mxu0 0.0
        %3726 = vmatpush.msra.mxu0 0.0
        %3727 = vmatpush.msra.mxu0 0.0
        %3728 = vmatpush.msra.mxu0 0.0
        %3729 = vmatpush.msra.mxu0 0.0
        %3730 = vmatpush.msra.mxu0 %v3633
        %3731 = vmatpush.msra.mxu0 %v3601
        %3732 = vmatmul.f32.gmra.mxu0 %v3618
        %v3733 = vpop.f32.mrf.mxu0
        %v3734 = vadd.f32 0.0, %v3733
        %3735 = vmatmul.f32.gmra.mxu0 %v3621
        %v3736 = vpop.f32.mrf.mxu0
        %v3737 = vadd.f32 0.0, %v3736
        %3738 = vdwg.mxu0
        %3739 = vmatpush.msra.mxu0 0.0
        %3740 = vmatpush.msra.mxu0 0.0
        %3741 = vmatpush.msra.mxu0 0.0
        %3742 = vmatpush.msra.mxu0 0.0
        %3743 = vmatpush.msra.mxu0 0.0
        %3744 = vmatpush.msra.mxu0 0.0
        %3745 = vmatpush.msra.mxu0 0.0
        %3746 = vmatpush.msra.mxu0 0.0
        %3747 = vmatpush.msra.mxu0 0.0
        %3748 = vmatpush.msra.mxu0 0.0
        %3749 = vmatpush.msra.mxu0 0.0
        %3750 = vmatpush.msra.mxu0 0.0
        %3751 = vmatpush.msra.mxu0 0.0
        %3752 = vmatpush.msra.mxu0 0.0
        %3753 = vmatpush.msra.mxu0 %v3636
        %3754 = vmatpush.msra.mxu0 %v3602
        %3755 = vmatmul.f32.gmra.mxu0 %v3618
        %v3756 = vpop.f32.mrf.mxu0
        %v3757 = vadd.f32 0.0, %v3756
        %3758 = vmatmul.f32.gmra.mxu0 %v3621
        %v3759 = vpop.f32.mrf.mxu0
        %v3760 = vadd.f32 0.0, %v3759
        %3761 = vdwg.mxu0
        %3762 = vmatpush.msra.mxu0 0.0
        %3763 = vmatpush.msra.mxu0 0.0
        %3764 = vmatpush.msra.mxu0 0.0
        %3765 = vmatpush.msra.mxu0 0.0
        %3766 = vmatpush.msra.mxu0 0.0
        %3767 = vmatpush.msra.mxu0 0.0
        %3768 = vmatpush.msra.mxu0 0.0
        %3769 = vmatpush.msra.mxu0 0.0
        %3770 = vmatpush.msra.mxu0 0.0
        %3771 = vmatpush.msra.mxu0 0.0
        %3772 = vmatpush.msra.mxu0 0.0
        %3773 = vmatpush.msra.mxu0 0.0
        %3774 = vmatpush.msra.mxu0 0.0
        %3775 = vmatpush.msra.mxu0 0.0
        %3776 = vmatpush.msra.mxu0 %v3639
        %3777 = vmatpush.msra.mxu0 %v3603
        %3778 = vmatmul.f32.gmra.mxu0 %v3618
        %v3779 = vpop.f32.mrf.mxu0
        %v3780 = vadd.f32 0.0, %v3779
        %3781 = vmatmul.f32.gmra.mxu0 %v3621
        %v3782 = vpop.f32.mrf.mxu0
        %v3783 = vadd.f32 0.0, %v3782
        %3784 = vdwg.mxu0
        %3785 = vmatpush.msra.mxu0 0.0
        %3786 = vmatpush.msra.mxu0 0.0
        %3787 = vmatpush.msra.mxu0 0.0
        %3788 = vmatpush.msra.mxu0 0.0
        %3789 = vmatpush.msra.mxu0 0.0
        %3790 = vmatpush.msra.mxu0 0.0
        %3791 = vmatpush.msra.mxu0 0.0
        %3792 = vmatpush.msra.mxu0 0.0
        %3793 = vmatpush.msra.mxu0 0.0
        %3794 = vmatpush.msra.mxu0 0.0
        %3795 = vmatpush.msra.mxu0 0.0
        %3796 = vmatpush.msra.mxu0 0.0
        %3797 = vmatpush.msra.mxu0 0.0
        %3798 = vmatpush.msra.mxu0 0.0
        %3799 = vmatpush.msra.mxu0 %v3642
        %3800 = vmatpush.msra.mxu0 %v3604
        %3801 = vmatmul.f32.gmra.mxu0 %v3618
        %v3802 = vpop.f32.mrf.mxu0
        %v3803 = vadd.f32 0.0, %v3802
        %3804 = vmatmul.f32.gmra.mxu0 %v3621
        %v3805 = vpop.f32.mrf.mxu0
        %v3806 = vadd.f32 0.0, %v3805
        %3807 = vdwg.mxu0
        %3808 = vmatpush.msra.mxu0 0.0
        %3809 = vmatpush.msra.mxu0 0.0
        %3810 = vmatpush.msra.mxu0 0.0
        %3811 = vmatpush.msra.mxu0 0.0
        %3812 = vmatpush.msra.mxu0 0.0
        %3813 = vmatpush.msra.mxu0 0.0
        %3814 = vmatpush.msra.mxu0 0.0
        %3815 = vmatpush.msra.mxu0 0.0
        %3816 = vmatpush.msra.mxu0 0.0
        %3817 = vmatpush.msra.mxu0 0.0
        %3818 = vmatpush.msra.mxu0 0.0
        %3819 = vmatpush.msra.mxu0 0.0
        %3820 = vmatpush.msra.mxu0 0.0
        %3821 = vmatpush.msra.mxu0 0.0
        %3822 = vmatpush.msra.mxu0 %v3645
        %3823 = vmatpush.msra.mxu0 %v3605
        %3824 = vmatmul.f32.gmra.mxu0 %v3618
        %v3825 = vpop.f32.mrf.mxu0
        %v3826 = vadd.f32 0.0, %v3825
        %3827 = vmatmul.f32.gmra.mxu0 %v3621
        %v3828 = vpop.f32.mrf.mxu0
        %v3829 = vadd.f32 0.0, %v3828
        %3830 = vdwg.mxu0
        %v3831 = vadd.f32 %v3516, %v3665
        %v3832 = vadd.f32 %v3517, %v3688
        %v3833 = vadd.f32 %v3518, %v3711
        %v3834 = vadd.f32 %v3519, %v3734
        %v3835 = vadd.f32 %v3520, %v3757
        %v3836 = vadd.f32 %v3521, %v3780
        %v3837 = vadd.f32 %v3522, %v3803
        %v3838 = vadd.f32 %v3523, %v3826
        %v3839 = vadd.f32 %v3524, %v3668
        %v3840 = vadd.f32 %v3525, %v3691
        %v3841 = vadd.f32 %v3526, %v3714
        %v3842 = vadd.f32 %v3527, %v3737
        %v3843 = vadd.f32 %v3528, %v3760
        %v3844 = vadd.f32 %v3529, %v3783
        %v3845 = vadd.f32 %v3530, %v3806
        %v3846 = vadd.f32 %v3531, %v3829
        %3847 = vrot.lane.b32.xlu0 %v1417, 95
        %v3848 = vpop.permute.xlu0 %3847
        %3849 = vrot.lane.b32.xlu0 %v1418, 95
        %v3850 = vpop.permute.xlu0 %3849
        %3851 = vrot.lane.b32.xlu0 %v1419, 95
        %v3852 = vpop.permute.xlu0 %3851
        %3853 = vrot.lane.b32.xlu0 %v1420, 95
        %v3854 = vpop.permute.xlu0 %3853
        %3855 = vrot.lane.b32.xlu0 %v1421, 95
        %v3856 = vpop.permute.xlu0 %3855
        %3857 = vrot.lane.b32.xlu0 %v1422, 95
        %v3858 = vpop.permute.xlu0 %3857
        %3859 = vrot.lane.b32.xlu0 %v1423, 95
        %v3860 = vpop.permute.xlu0 %3859
        %3861 = vrot.lane.b32.xlu0 %v1424, 95
        %v3862 = vpop.permute.xlu0 %3861
        %3863 = vrot.lane.b32.xlu0 %v1425, 95
        %v3864 = vpop.permute.xlu0 %3863
        %3865 = vrot.lane.b32.xlu0 %v1426, 95
        %v3866 = vpop.permute.xlu0 %3865
        %3867 = vrot.lane.b32.xlu0 %v1427, 95
        %v3868 = vpop.permute.xlu0 %3867
        %3869 = vrot.lane.b32.xlu0 %v1428, 95
        %v3870 = vpop.permute.xlu0 %3869
        %3871 = vrot.lane.b32.xlu0 %v1429, 95
        %v3872 = vpop.permute.xlu0 %3871
        %3873 = vrot.lane.b32.xlu0 %v1430, 95
        %v3874 = vpop.permute.xlu0 %3873
        %3875 = vrot.lane.b32.xlu0 %v1431, 95
        %v3876 = vpop.permute.xlu0 %3875
        %3877 = vrot.lane.b32.xlu0 %v1432, 95
        %v3878 = vpop.permute.xlu0 %3877
        %v3879 = vsel %vm1155, %v3848, %v3850
        %v3880 = vsel %vm1155, %v3850, %v3852
        %v3881 = vsel %vm1155, %v3852, %v3854
        %v3882 = vsel %vm1155, %v3854, %v3856
        %v3883 = vsel %vm1155, %v3856, %v3858
        %v3884 = vsel %vm1155, %v3858, %v3860
        %v3885 = vsel %vm1155, %v3860, %v3862
        %v3886 = vsel %vm1155, %v3864, %v3866
        %v3887 = vsel %vm1155, %v3866, %v3868
        %v3888 = vsel %vm1155, %v3868, %v3870
        %v3889 = vsel %vm1155, %v3870, %v3872
        %v3890 = vsel %vm1155, %v3872, %v3874
        %v3891 = vsel %vm1155, %v3874, %v3876
        %v3892 = vsel %vm1155, %v3876, %v3878
        %v3911 = vsel %vm1155, %v3862, %v3848
        %v3912 = vsel %vm1155, %v3878, %v3864
        %v3913 = vmul.f32 %v3879, %v1178
        %v3914 = vmul.f32 %v3880, %v1179
        %v3915 = vmul.f32 %v3881, %v1180
        %v3916 = vmul.f32 %v3882, %v1181
        %v3917 = vmul.f32 %v3883, %v1182
        %v3918 = vmul.f32 %v3884, %v1183
        %v3919 = vmul.f32 %v3885, %v1184
        %v3920 = vmul.f32 %v3911, %v1185
        %v3921 = vmul.f32 %v3886, %v1178
        %v3922 = vmul.f32 %v3887, %v1179
        %v3923 = vmul.f32 %v3888, %v1180
        %v3924 = vmul.f32 %v3889, %v1181
        %v3925 = vmul.f32 %v3890, %v1182
        %v3926 = vmul.f32 %v3891, %v1183
        %v3927 = vmul.f32 %v3892, %v1184
        %v3928 = vmul.f32 %v3912, %v1185
        %s3929 = scalar_lea.vmem %s4, 128
        %v3930 = vld [vmem:[%s3929] sm:$0xff]
        %v3931 = vld [vmem:[%s3929 + $0x8] sm:$0xf]
        %v3933 = vsel %vm1618, %v3930, 0
        %v3936 = vsel %vm1618, %v3931, 0
        %v3939 = vsel %vm1292, %v3921, 0
        %v3942 = vsel %vm1292, %v3922, 0
        %v3945 = vsel %vm1292, %v3923, 0
        %v3948 = vsel %vm1292, %v3924, 0
        %v3951 = vsel %vm1292, %v3925, 0
        %v3954 = vsel %vm1292, %v3926, 0
        %v3957 = vsel %vm1292, %v3927, 0
        %v3960 = vsel %vm1292, %v3928, 0
        %3962 = vmatpush.msra.mxu0 0.0
        %3963 = vmatpush.msra.mxu0 0.0
        %3964 = vmatpush.msra.mxu0 0.0
        %3965 = vmatpush.msra.mxu0 0.0
        %3966 = vmatpush.msra.mxu0 0.0
        %3967 = vmatpush.msra.mxu0 0.0
        %3968 = vmatpush.msra.mxu0 0.0
        %3969 = vmatpush.msra.mxu0 0.0
        %3970 = vmatpush.msra.mxu0 0.0
        %3971 = vmatpush.msra.mxu0 0.0
        %3972 = vmatpush.msra.mxu0 0.0
        %3973 = vmatpush.msra.mxu0 0.0
        %3974 = vmatpush.msra.mxu0 0.0
        %3975 = vmatpush.msra.mxu0 0.0
        %3976 = vmatpush.msra.mxu0 %v3939
        %3977 = vmatpush.msra.mxu0 %v3913
        %3978 = vmatmul.f32.gmra.mxu0 %v3933
        %v3979 = vpop.f32.mrf.mxu0
        %v3980 = vadd.f32 0.0, %v3979
        %3981 = vmatmul.f32.gmra.mxu0 %v3936
        %v3982 = vpop.f32.mrf.mxu0
        %v3983 = vadd.f32 0.0, %v3982
        %3984 = vdwg.mxu0
        %3985 = vmatpush.msra.mxu0 0.0
        %3986 = vmatpush.msra.mxu0 0.0
        %3987 = vmatpush.msra.mxu0 0.0
        %3988 = vmatpush.msra.mxu0 0.0
        %3989 = vmatpush.msra.mxu0 0.0
        %3990 = vmatpush.msra.mxu0 0.0
        %3991 = vmatpush.msra.mxu0 0.0
        %3992 = vmatpush.msra.mxu0 0.0
        %3993 = vmatpush.msra.mxu0 0.0
        %3994 = vmatpush.msra.mxu0 0.0
        %3995 = vmatpush.msra.mxu0 0.0
        %3996 = vmatpush.msra.mxu0 0.0
        %3997 = vmatpush.msra.mxu0 0.0
        %3998 = vmatpush.msra.mxu0 0.0
        %3999 = vmatpush.msra.mxu0 %v3942
        %4000 = vmatpush.msra.mxu0 %v3914
        %4001 = vmatmul.f32.gmra.mxu0 %v3933
        %v4002 = vpop.f32.mrf.mxu0
        %v4003 = vadd.f32 0.0, %v4002
        %4004 = vmatmul.f32.gmra.mxu0 %v3936
        %v4005 = vpop.f32.mrf.mxu0
        %v4006 = vadd.f32 0.0, %v4005
        %4007 = vdwg.mxu0
        %4008 = vmatpush.msra.mxu0 0.0
        %4009 = vmatpush.msra.mxu0 0.0
        %4010 = vmatpush.msra.mxu0 0.0
        %4011 = vmatpush.msra.mxu0 0.0
        %4012 = vmatpush.msra.mxu0 0.0
        %4013 = vmatpush.msra.mxu0 0.0
        %4014 = vmatpush.msra.mxu0 0.0
        %4015 = vmatpush.msra.mxu0 0.0
        %4016 = vmatpush.msra.mxu0 0.0
        %4017 = vmatpush.msra.mxu0 0.0
        %4018 = vmatpush.msra.mxu0 0.0
        %4019 = vmatpush.msra.mxu0 0.0
        %4020 = vmatpush.msra.mxu0 0.0
        %4021 = vmatpush.msra.mxu0 0.0
        %4022 = vmatpush.msra.mxu0 %v3945
        %4023 = vmatpush.msra.mxu0 %v3915
        %4024 = vmatmul.f32.gmra.mxu0 %v3933
        %v4025 = vpop.f32.mrf.mxu0
        %v4026 = vadd.f32 0.0, %v4025
        %4027 = vmatmul.f32.gmra.mxu0 %v3936
        %v4028 = vpop.f32.mrf.mxu0
        %v4029 = vadd.f32 0.0, %v4028
        %4030 = vdwg.mxu0
        %4031 = vmatpush.msra.mxu0 0.0
        %4032 = vmatpush.msra.mxu0 0.0
        %4033 = vmatpush.msra.mxu0 0.0
        %4034 = vmatpush.msra.mxu0 0.0
        %4035 = vmatpush.msra.mxu0 0.0
        %4036 = vmatpush.msra.mxu0 0.0
        %4037 = vmatpush.msra.mxu0 0.0
        %4038 = vmatpush.msra.mxu0 0.0
        %4039 = vmatpush.msra.mxu0 0.0
        %4040 = vmatpush.msra.mxu0 0.0
        %4041 = vmatpush.msra.mxu0 0.0
        %4042 = vmatpush.msra.mxu0 0.0
        %4043 = vmatpush.msra.mxu0 0.0
        %4044 = vmatpush.msra.mxu0 0.0
        %4045 = vmatpush.msra.mxu0 %v3948
        %4046 = vmatpush.msra.mxu0 %v3916
        %4047 = vmatmul.f32.gmra.mxu0 %v3933
        %v4048 = vpop.f32.mrf.mxu0
        %v4049 = vadd.f32 0.0, %v4048
        %4050 = vmatmul.f32.gmra.mxu0 %v3936
        %v4051 = vpop.f32.mrf.mxu0
        %v4052 = vadd.f32 0.0, %v4051
        %4053 = vdwg.mxu0
        %4054 = vmatpush.msra.mxu0 0.0
        %4055 = vmatpush.msra.mxu0 0.0
        %4056 = vmatpush.msra.mxu0 0.0
        %4057 = vmatpush.msra.mxu0 0.0
        %4058 = vmatpush.msra.mxu0 0.0
        %4059 = vmatpush.msra.mxu0 0.0
        %4060 = vmatpush.msra.mxu0 0.0
        %4061 = vmatpush.msra.mxu0 0.0
        %4062 = vmatpush.msra.mxu0 0.0
        %4063 = vmatpush.msra.mxu0 0.0
        %4064 = vmatpush.msra.mxu0 0.0
        %4065 = vmatpush.msra.mxu0 0.0
        %4066 = vmatpush.msra.mxu0 0.0
        %4067 = vmatpush.msra.mxu0 0.0
        %4068 = vmatpush.msra.mxu0 %v3951
        %4069 = vmatpush.msra.mxu0 %v3917
        %4070 = vmatmul.f32.gmra.mxu0 %v3933
        %v4071 = vpop.f32.mrf.mxu0
        %v4072 = vadd.f32 0.0, %v4071
        %4073 = vmatmul.f32.gmra.mxu0 %v3936
        %v4074 = vpop.f32.mrf.mxu0
        %v4075 = vadd.f32 0.0, %v4074
        %4076 = vdwg.mxu0
        %4077 = vmatpush.msra.mxu0 0.0
        %4078 = vmatpush.msra.mxu0 0.0
        %4079 = vmatpush.msra.mxu0 0.0
        %4080 = vmatpush.msra.mxu0 0.0
        %4081 = vmatpush.msra.mxu0 0.0
        %4082 = vmatpush.msra.mxu0 0.0
        %4083 = vmatpush.msra.mxu0 0.0
        %4084 = vmatpush.msra.mxu0 0.0
        %4085 = vmatpush.msra.mxu0 0.0
        %4086 = vmatpush.msra.mxu0 0.0
        %4087 = vmatpush.msra.mxu0 0.0
        %4088 = vmatpush.msra.mxu0 0.0
        %4089 = vmatpush.msra.mxu0 0.0
        %4090 = vmatpush.msra.mxu0 0.0
        %4091 = vmatpush.msra.mxu0 %v3954
        %4092 = vmatpush.msra.mxu0 %v3918
        %4093 = vmatmul.f32.gmra.mxu0 %v3933
        %v4094 = vpop.f32.mrf.mxu0
        %v4095 = vadd.f32 0.0, %v4094
        %4096 = vmatmul.f32.gmra.mxu0 %v3936
        %v4097 = vpop.f32.mrf.mxu0
        %v4098 = vadd.f32 0.0, %v4097
        %4099 = vdwg.mxu0
        %4100 = vmatpush.msra.mxu0 0.0
        %4101 = vmatpush.msra.mxu0 0.0
        %4102 = vmatpush.msra.mxu0 0.0
        %4103 = vmatpush.msra.mxu0 0.0
        %4104 = vmatpush.msra.mxu0 0.0
        %4105 = vmatpush.msra.mxu0 0.0
        %4106 = vmatpush.msra.mxu0 0.0
        %4107 = vmatpush.msra.mxu0 0.0
        %4108 = vmatpush.msra.mxu0 0.0
        %4109 = vmatpush.msra.mxu0 0.0
        %4110 = vmatpush.msra.mxu0 0.0
        %4111 = vmatpush.msra.mxu0 0.0
        %4112 = vmatpush.msra.mxu0 0.0
        %4113 = vmatpush.msra.mxu0 0.0
        %4114 = vmatpush.msra.mxu0 %v3957
        %4115 = vmatpush.msra.mxu0 %v3919
        %4116 = vmatmul.f32.gmra.mxu0 %v3933
        %v4117 = vpop.f32.mrf.mxu0
        %v4118 = vadd.f32 0.0, %v4117
        %4119 = vmatmul.f32.gmra.mxu0 %v3936
        %v4120 = vpop.f32.mrf.mxu0
        %v4121 = vadd.f32 0.0, %v4120
        %4122 = vdwg.mxu0
        %4123 = vmatpush.msra.mxu0 0.0
        %4124 = vmatpush.msra.mxu0 0.0
        %4125 = vmatpush.msra.mxu0 0.0
        %4126 = vmatpush.msra.mxu0 0.0
        %4127 = vmatpush.msra.mxu0 0.0
        %4128 = vmatpush.msra.mxu0 0.0
        %4129 = vmatpush.msra.mxu0 0.0
        %4130 = vmatpush.msra.mxu0 0.0
        %4131 = vmatpush.msra.mxu0 0.0
        %4132 = vmatpush.msra.mxu0 0.0
        %4133 = vmatpush.msra.mxu0 0.0
        %4134 = vmatpush.msra.mxu0 0.0
        %4135 = vmatpush.msra.mxu0 0.0
        %4136 = vmatpush.msra.mxu0 0.0
        %4137 = vmatpush.msra.mxu0 %v3960
        %4138 = vmatpush.msra.mxu0 %v3920
        %4139 = vmatmul.f32.gmra.mxu0 %v3933
        %v4140 = vpop.f32.mrf.mxu0
        %v4141 = vadd.f32 0.0, %v4140
        %4142 = vmatmul.f32.gmra.mxu0 %v3936
        %v4143 = vpop.f32.mrf.mxu0
        %v4144 = vadd.f32 0.0, %v4143
        %4145 = vdwg.mxu0
        %v4146 = vadd.f32 %v3831, %v3980
        %v4147 = vadd.f32 %v3832, %v4003
        %v4148 = vadd.f32 %v3833, %v4026
        %v4149 = vadd.f32 %v3834, %v4049
        %v4150 = vadd.f32 %v3835, %v4072
        %v4151 = vadd.f32 %v3836, %v4095
        %v4152 = vadd.f32 %v3837, %v4118
        %v4153 = vadd.f32 %v3838, %v4141
        %v4154 = vadd.f32 %v3839, %v3983
        %v4155 = vadd.f32 %v3840, %v4006
        %v4156 = vadd.f32 %v3841, %v4029
        %v4157 = vadd.f32 %v3842, %v4052
        %v4158 = vadd.f32 %v3843, %v4075
        %v4159 = vadd.f32 %v3844, %v4098
        %v4160 = vadd.f32 %v3845, %v4121
        %v4161 = vadd.f32 %v3846, %v4144
        %v4162 = vld [vmem:[%s5] sm:$0xff]
        %v4163 = vld [vmem:[%s5 + $0x8] sm:$0xf]
        %4165 = vset.pattern.permute.xlu0 0
        %4166 = vperm.xlu0 %4165, %v4162
        %v4167 = vpop.permute.xlu0 %4166
        %4170 = vset.pattern.permute.xlu0 0
        %4171 = vperm.xlu0 %4170, %v4163
        %v4172 = vpop.permute.xlu0 %4171
        %v4174 = vadd.f32 %v4146, %v4167
        %v4175 = vadd.f32 %v4147, %v4167
        %v4176 = vadd.f32 %v4148, %v4167
        %v4177 = vadd.f32 %v4149, %v4167
        %v4178 = vadd.f32 %v4150, %v4167
        %v4179 = vadd.f32 %v4151, %v4167
        %v4180 = vadd.f32 %v4152, %v4167
        %v4181 = vadd.f32 %v4153, %v4167
        %v4182 = vadd.f32 %v4154, %v4172
        %v4183 = vadd.f32 %v4155, %v4172
        %v4184 = vadd.f32 %v4156, %v4172
        %v4185 = vadd.f32 %v4157, %v4172
        %v4186 = vadd.f32 %v4158, %v4172
        %v4187 = vadd.f32 %v4159, %v4172
        %v4188 = vadd.f32 %v4160, %v4172
        %v4189 = vadd.f32 %v4161, %v4172
        %v4190 = vadd.f32 %v4174, %v4175
        %v4191 = vadd.f32 %v4190, %v4176
        %v4192 = vadd.f32 %v4191, %v4177
        %v4193 = vadd.f32 %v4192, %v4178
        %v4194 = vadd.f32 %v4193, %v4179
        %v4195 = vadd.f32 %v4194, %v4180
        %v4196 = vadd.f32 %v4195, %v4181
        %4197 = vadd.xlane.f32.xlu0 %v4196
        %v4198 = vpop.xlane.xlu0 %4197
        %v4199 = vsel %vm1292, %v4182, 0.0
        %v4200 = vsel %vm1292, %v4183, 0.0
        %v4201 = vadd.f32 %v4199, %v4200
        %v4202 = vsel %vm1292, %v4184, 0.0
        %v4203 = vadd.f32 %v4201, %v4202
        %v4204 = vsel %vm1292, %v4185, 0.0
        %v4205 = vadd.f32 %v4203, %v4204
        %v4206 = vsel %vm1292, %v4186, 0.0
        %v4207 = vadd.f32 %v4205, %v4206
        %v4208 = vsel %vm1292, %v4187, 0.0
        %v4209 = vadd.f32 %v4207, %v4208
        %v4210 = vsel %vm1292, %v4188, 0.0
        %v4211 = vadd.f32 %v4209, %v4210
        %v4212 = vsel %vm1292, %v4189, 0.0
        %v4213 = vadd.f32 %v4211, %v4212
        %4214 = vadd.xlane.f32.xlu0 %v4213
        %v4215 = vpop.xlane.xlu0 %4214
        %v4216 = vmul.f32 %v4198, %v1316
        %v4217 = vmul.f32 %v4215, %v1316
        %v4218 = vsub.f32 %v4174, %v4216
        %v4219 = vsub.f32 %v4175, %v4216
        %v4220 = vsub.f32 %v4176, %v4216
        %v4221 = vsub.f32 %v4177, %v4216
        %v4222 = vsub.f32 %v4178, %v4216
        %v4223 = vsub.f32 %v4179, %v4216
        %v4224 = vsub.f32 %v4180, %v4216
        %v4225 = vsub.f32 %v4181, %v4216
        %v4226 = vsub.f32 %v4182, %v4217
        %v4227 = vsub.f32 %v4183, %v4217
        %v4228 = vsub.f32 %v4184, %v4217
        %v4229 = vsub.f32 %v4185, %v4217
        %v4230 = vsub.f32 %v4186, %v4217
        %v4231 = vsub.f32 %v4187, %v4217
        %v4232 = vsub.f32 %v4188, %v4217
        %v4233 = vsub.f32 %v4189, %v4217
        %v4234 = vmul.f32 %v4218, %v4218
        %v4235 = vmul.f32 %v4219, %v4219
        %v4236 = vmul.f32 %v4220, %v4220
        %v4237 = vmul.f32 %v4221, %v4221
        %v4238 = vmul.f32 %v4222, %v4222
        %v4239 = vmul.f32 %v4223, %v4223
        %v4240 = vmul.f32 %v4224, %v4224
        %v4241 = vmul.f32 %v4225, %v4225
        %v4242 = vmul.f32 %v4226, %v4226
        %v4243 = vmul.f32 %v4227, %v4227
        %v4244 = vmul.f32 %v4228, %v4228
        %v4245 = vmul.f32 %v4229, %v4229
        %v4246 = vmul.f32 %v4230, %v4230
        %v4247 = vmul.f32 %v4231, %v4231
        %v4248 = vmul.f32 %v4232, %v4232
        %v4249 = vmul.f32 %v4233, %v4233
        %v4250 = vadd.f32 %v4234, %v4235
        %v4251 = vadd.f32 %v4250, %v4236
        %v4252 = vadd.f32 %v4251, %v4237
        %v4253 = vadd.f32 %v4252, %v4238
        %v4254 = vadd.f32 %v4253, %v4239
        %v4255 = vadd.f32 %v4254, %v4240
        %v4256 = vadd.f32 %v4255, %v4241
        %4257 = vadd.xlane.f32.xlu0 %v4256
        %v4258 = vpop.xlane.xlu0 %4257
        %v4259 = vsel %vm1292, %v4242, 0.0
        %v4260 = vsel %vm1292, %v4243, 0.0
        %v4261 = vadd.f32 %v4259, %v4260
        %v4262 = vsel %vm1292, %v4244, 0.0
        %v4263 = vadd.f32 %v4261, %v4262
        %v4264 = vsel %vm1292, %v4245, 0.0
        %v4265 = vadd.f32 %v4263, %v4264
        %v4266 = vsel %vm1292, %v4246, 0.0
        %v4267 = vadd.f32 %v4265, %v4266
        %v4268 = vsel %vm1292, %v4247, 0.0
        %v4269 = vadd.f32 %v4267, %v4268
        %v4270 = vsel %vm1292, %v4248, 0.0
        %v4271 = vadd.f32 %v4269, %v4270
        %v4272 = vsel %vm1292, %v4249, 0.0
        %v4273 = vadd.f32 %v4271, %v4272
        %4274 = vadd.xlane.f32.xlu0 %v4273
        %v4275 = vpop.xlane.xlu0 %4274
        %v4276 = vmul.f32 %v4258, %v1316
        %v4277 = vmul.f32 %v4275, %v1316
        %v4278 = vadd.f32 %v4276, 1e-05
        %v4279 = vadd.f32 %v4277, 1e-05
        %v4280 = vrsqrt.pop %v4278
        %v4281 = vmul.f32 %v4280, %v4278
        %v4282 = vmul.f32 %v4281, %v4280
        %v4283 = vmul.f32 0.5, %v4282
        %v4284 = vsub.f32 1.5, %v4283
        %v4285 = vmul.f32 %v4280, %v4284
        %vm4286 = vweird.f32 %v4278
        %vm4287 = vweird.f32 %v4280
        %vm4288 = vmor %vm4286, %vm4287
        %v4289 = vsel %vm4288, %v4280, %v4285
        %v4290 = vrsqrt.pop %v4279
        %v4291 = vmul.f32 %v4290, %v4279
        %v4292 = vmul.f32 %v4291, %v4290
        %v4293 = vmul.f32 0.5, %v4292
        %v4294 = vsub.f32 1.5, %v4293
        %v4295 = vmul.f32 %v4290, %v4294
        %vm4296 = vweird.f32 %v4279
        %vm4297 = vweird.f32 %v4290
        %vm4298 = vmor %vm4296, %vm4297
        %v4299 = vsel %vm4298, %v4290, %v4295
        %v4300 = vmul.f32 %v4218, %v4289
        %v4301 = vmul.f32 %v4219, %v4289
        %v4302 = vmul.f32 %v4220, %v4289
        %v4303 = vmul.f32 %v4221, %v4289
        %v4304 = vmul.f32 %v4222, %v4289
        %v4305 = vmul.f32 %v4223, %v4289
        %v4306 = vmul.f32 %v4224, %v4289
        %v4307 = vmul.f32 %v4225, %v4289
        %v4308 = vmul.f32 %v4226, %v4299
        %v4309 = vmul.f32 %v4227, %v4299
        %v4310 = vmul.f32 %v4228, %v4299
        %v4311 = vmul.f32 %v4229, %v4299
        %v4312 = vmul.f32 %v4230, %v4299
        %v4313 = vmul.f32 %v4231, %v4299
        %v4314 = vmul.f32 %v4232, %v4299
        %v4315 = vmul.f32 %v4233, %v4299
        %v4316 = vmax.f32 %v4300, 0.0
        %v4317 = vmax.f32 %v4301, 0.0
        %v4318 = vmax.f32 %v4302, 0.0
        %v4319 = vmax.f32 %v4303, 0.0
        %v4320 = vmax.f32 %v4304, 0.0
        %v4321 = vmax.f32 %v4305, 0.0
        %v4322 = vmax.f32 %v4306, 0.0
        %v4323 = vmax.f32 %v4307, 0.0
        %v4324 = vmax.f32 %v4308, 0.0
        %v4325 = vmax.f32 %v4309, 0.0
        %v4326 = vmax.f32 %v4310, 0.0
        %v4327 = vmax.f32 %v4311, 0.0
        %v4328 = vmax.f32 %v4312, 0.0
        %v4329 = vmax.f32 %v4313, 0.0
        %v4330 = vmax.f32 %v4314, 0.0
        %v4331 = vmax.f32 %v4315, 0.0
        %4332 = vst [vmem:[%s265] sm:$0xff] %v4316
        %4333 = vst [vmem:[%s265 + $0x8] sm:$0xff] %v4317
        %4334 = vst [vmem:[%s265 + $0x10] sm:$0xff] %v4318
        %4335 = vst [vmem:[%s265 + $0x18] sm:$0xff] %v4319
        %4336 = vst [vmem:[%s265 + $0x20] sm:$0xff] %v4320
        %4337 = vst [vmem:[%s265 + $0x28] sm:$0xff] %v4321
        %4338 = vst [vmem:[%s265 + $0x30] sm:$0xff] %v4322
        %4339 = vst [vmem:[%s265 + $0x38] sm:$0xff] %v4323
        %4340 = vst [vmem:[%s265 + $0x40] sm:$0xf] %v4324
        %4341 = vst [vmem:[%s265 + $0x48] sm:$0xf] %v4325
        %4342 = vst [vmem:[%s265 + $0x50] sm:$0xf] %v4326
        %4343 = vst [vmem:[%s265 + $0x58] sm:$0xf] %v4327
        %4344 = vst [vmem:[%s265 + $0x60] sm:$0xf] %v4328
        %4345 = vst [vmem:[%s265 + $0x68] sm:$0xf] %v4329
        %4346 = vst [vmem:[%s265 + $0x70] sm:$0xf] %v4330
        %4347 = vst [vmem:[%s265 + $0x78] sm:$0xf] %v4331
        %p4348 = scmp.lt.s32.totalorder %s18, 1
        %s4349 = scalar_select %p4348, %s18, 1
        %s4350 = smul.addr %s4349, 16
        %s4351 = smul.addr %s4350, 8
        %s4352 = scalar_lea.vmem %s6, %s4351
        // Predicated region
        $region49: #{tpu_custom_call.1} parent=43 // pred_check
          %p4353 = pneg %p167
        $region50: #{tpu_custom_call.1} parent=43 // pred_check_branch
          %4355 = sbr.rel (%p4353) target = $region52
        $region51: #{tpu_custom_call.1} parent=43 // pred_region
          _
        $region52: #{tpu_custom_call.1} parent=43 // pred_fallthru
          _
      $region44: #{tpu_custom_call.1} parent=5 // pred_fallthru
        _
      %p4356 = scmp.le.s32.totalorder 2, %s13
      // Predicated region
      $region53: #{tpu_custom_call.1} parent=5 // pred_check
        %p4357 = pneg %p4356
      $region54: #{tpu_custom_call.1} parent=5 // pred_check_branch
        %4359 = sbr.rel (%p4357) target = $region56
      $region55: #{tpu_custom_call.1} parent=5 // pred_region
        %s4360 = ssub.s32 %s13, 2
        // Predicated region
        $region57: #{tpu_custom_call.1} parent=55 // pred_check
          %p4361 = pneg %p173
        $region58: #{tpu_custom_call.1} parent=55 // pred_check_branch
          %4363 = sbr.rel (%p4361) target = $region60
        $region59: #{tpu_custom_call.1} parent=55 // pred_region
          %p4364 = scmp.lt.s32.totalorder %s19, 1
          %s4365 = scalar_select %p4364, %s19, 1
          %s4366 = smul.addr %s4365, 16
          %s4367 = smul.addr %s4366, 8
          %s4368 = scalar_lea.vmem %s6, %s4367
        $region60: #{tpu_custom_call.1} parent=55 // pred_fallthru
          _
      $region56: #{tpu_custom_call.1} parent=5 // pred_fallthru
        _
    $region6: #{tpu_custom_call.1} parent=1 // loop_footer
      %s17 = sadd.s32 1, %s13
    $region7: #{tpu_custom_call.1} parent=1 // loop_footer_branch
      %12 = sbr.rel target = $region3
    $region8: #{tpu_custom_call.1} parent=1 // loop_exit
      _
    %4369 = vsyncpa [#allocation3], 1
    %s4370 = scalar_lea.sflag [#allocation3], 1
    %4371 = vsyncpa %s4370, 1

</llo_original>
